<compile_context>
chip_gen: v7x
topology: tpu7x:2x2x1
jax: 0.10.0
libtpu: 0.0.40
codegen_flags: <defaults>
</compile_context>

<pallas_src>
import numpy as np

import jax
import jax.numpy as jnp
from jax.experimental import pallas as pl
from jax.experimental.pallas import tpu as pltpu


# ----------------------------------------------------------------------------
# Static configuration (small shapes consistent with the module).
# ----------------------------------------------------------------------------
N, CIN, IMG = 2, 3, 16
LAYERS = (8, 16)
C1, C2 = LAYERS
H = W = IMG
H2 = W2 = IMG // 2
H3 = W3 = IMG // 4
NCLS = 2
FC1_OUT, FC2_OUT = 256, 128

LIN = W * CIN          # 48 packed input lanes  (w, ci)
L1 = W * C1            # 128 lanes after conv1  (w, c1)
L2 = W2 * C2           # 128 lanes after conv2  (w2, c2)
FDIL = H3 * L2         # 512-lane flatten fed to FC1

# MXU op list (m, k, n) for the CostEstimate.
_MXN = (
    [(N * H, N * H, LIN)] * 2 + [(N * H, LIN, L1)] * 3 +          # conv1
    [(N * H2, N * H, L1)] * 2 + [(N * H2, L1, L1)] * 2 +          # pool1
    [(N * H2, N * H2, L1)] * 2 + [(N * H2, L1, L2)] * 3 +         # conv2
    [(N * H3, N * H2, L2)] * 2 + [(N * H3, L2, L2)] * 2 +         # pool2
    [(N, N * H3, L2)] * H3 +                                      # flatten selects
    [(N, FDIL, FC1_OUT), (N, FC1_OUT, FC2_OUT), (N, FC2_OUT, NCLS)]
)
_FLOPS = int(sum(2 * m * k * n for m, k, n in _MXN))


# ----------------------------------------------------------------------------
# Single fused kernel: Conv+BN+ReLU+Pool x2  +  Flatten + Linear/ReLU x3.
# Activation layout everywhere: rows = (n, h), lanes = (w, channel).
# ----------------------------------------------------------------------------
def _cnn_kernel(x_ref, wd1_ref, s1u_ref, s1d_ref, sh1_ref,
                g1e_ref, g1o_ref, pe1_ref, po1_ref,
                wd2_ref, s2u_ref, s2d_ref, sh2_ref,
                g2e_ref, g2o_ref, pe2_ref, po2_ref,
                gf_ref, w1_ref, b1_ref, w2_ref, b2_ref, w3_ref, b3_ref,
                o_ref):
    dot = lambda a, b: jnp.dot(a, b, preferred_element_type=jnp.float32)

    # ---- Conv1(3x3, pad=1) + BN(inference) + ReLU ---------------------------
    # kw taps + left/right edges live inside wd1's block structure; kh taps are
    # row shifts done with constant 0/1 matrices (s1u: h-1, s1d: h+1) on the
    # idle MXU, so there is no padded buffer and no relayout copy.
    x = x_ref[...]                                             # (N*H, W*CIN)
    z = dot(x, wd1_ref[1])
    z = z + dot(dot(s1u_ref[...], x), wd1_ref[0])
    z = z + dot(dot(s1d_ref[...], x), wd1_ref[2])
    y = jnp.maximum(z + sh1_ref[...], 0.0)                     # (N*H, W*C1)

    # ---- MaxPool2d(2) #1 ----------------------------------------------------
    # H direction: even/odd row selection matmuls + max (compact rows).
    # W direction: lane-pairing matmuls + max; pooled values land on even-w
    # lanes, odd-w lanes are exactly zero and never read by conv2's weights.
    ph = jnp.maximum(dot(g1e_ref[...], y), dot(g1o_ref[...], y))   # (N*H2, W*C1)
    p1 = jnp.maximum(dot(ph, pe1_ref[...]), dot(ph, po1_ref[...]))

    # ---- Conv2(3x3, pad=1) + BN(inference) + ReLU ---------------------------
    z = dot(p1, wd2_ref[1])
    z = z + dot(dot(s2u_ref[...], p1), wd2_ref[0])
    z = z + dot(dot(s2d_ref[...], p1), wd2_ref[2])
    y = jnp.maximum(z + sh2_ref[...], 0.0)                     # (N*H2, W2*C2)

    # ---- MaxPool2d(2) #2 ----------------------------------------------------
    ph = jnp.maximum(dot(g2e_ref[...], y), dot(g2o_ref[...], y))   # (N*H3, W2*C2)
    p2 = jnp.maximum(dot(ph, pe2_ref[...]), dot(ph, po2_ref[...]))

    # ---- Flatten + classifier ----------------------------------------------
    # Per-h3 batch-row selects + lane concat build the (N, 512) flatten without
    # a lane-merging reshape; torch's NCHW flatten order (and the zero odd-w
    # lanes) are folded into w1, so FC1 is a single matmul.
    f = jnp.concatenate([dot(gf_ref[k], p2) for k in range(H3)], axis=1)  # (N, 512)
    h = jnp.maximum(dot(f, w1_ref[...]) + b1_ref[...], 0.0)
    # TODO(synk): nn.Dropout(0.5) is identity (eval mode).
    h = jnp.maximum(dot(h, w2_ref[...]) + b2_ref[...], 0.0)
    o_ref[...] = dot(h, w3_ref[...]) + b3_ref[...]


# ----------------------------------------------------------------------------
# Wrapper: one gridless pallas_call; only the tiny NCHW -> packed-(n,h)x(w,ci)
# boundary transpose of the input stays in XLA.
# ----------------------------------------------------------------------------
def custom_cnn_forward(x_nchw, kparams):
    x1 = jnp.transpose(x_nchw, (0, 2, 3, 1)).reshape(N * H, W * CIN)
    args = (x1,) + tuple(kparams)
    bytes_accessed = sum(int(np.prod(a.shape)) * 4 for a in args) + N * NCLS * 4
    vmem_spec = pl.BlockSpec(memory_space=pltpu.MemorySpace.VMEM)
    return pl.pallas_call(
        _cnn_kernel,
        out_shape=jax.ShapeDtypeStruct((N, NCLS), jnp.float32),
        in_specs=[vmem_spec] * len(args),
        out_specs=vmem_spec,
        cost_estimate=pl.CostEstimate(flops=_FLOPS, transcendentals=0,
                                      bytes_accessed=bytes_accessed),
    )(*args)


# ----------------------------------------------------------------------------
# Init-time parameter folding into the kernel's constant arrays.
# ----------------------------------------------------------------------------
def _fold_bn(p):
    """Inference-mode BN fold: scale into the conv weight; bias+shift combined."""
    scale = np.asarray(p['gamma']) / np.sqrt(np.asarray(p['var']) + p['eps'])
    w = np.asarray(p['w']) * scale[:, None, None, None]
    shift = np.asarray(p['beta']) + (np.asarray(p['b']) - np.asarray(p['mean'])) * scale
    return w.astype(np.float32), shift.astype(np.float32)


def _conv_tap_weights(wf, wpos, cin, cout, in_dil):
    """Per-kh block weights with kw taps and left/right edges folded in.

    Input lane  = (in_dil * w_in) * cin + ci   (in_dil=2 reads the W-dilated
                                                even-w lanes of the pooled map)
    Output lane = w_out * cout + co
    """
    wd = np.zeros((3, in_dil * wpos * cin, wpos * cout), np.float32)
    for kh in range(3):
        for kw in range(3):
            blk = wf[:, :, kh, kw].T                           # (cin, cout)
            for wo in range(wpos):
                wi = wo + kw - 1
                if 0 <= wi < wpos:
                    r0, c0 = in_dil * wi * cin, wo * cout
                    wd[kh, r0:r0 + cin, c0:c0 + cout] += blk
    return wd


def _h_shift(nb, nh, dh):
    """0/1 matrix M with (M @ X)[(n,h)] = X[(n, h+dh)] (zero at image edges)."""
    m = np.zeros((nb * nh, nb * nh), np.float32)
    for n in range(nb):
        for h in range(nh):
            if 0 <= h + dh < nh:
                m[n * nh + h, n * nh + h + dh] = 1.0
    return m


def _pool_row_select(nb, nh):
    """Even/odd row selectors for the H direction of MaxPool2d(2)."""
    nh2 = nh // 2
    ge = np.zeros((nb * nh2, nb * nh), np.float32)
    go = np.zeros_like(ge)
    for n in range(nb):
        for h2 in range(nh2):
            ge[n * nh2 + h2, n * nh + 2 * h2] = 1.0
            go[n * nh2 + h2, n * nh + 2 * h2 + 1] = 1.0
    return ge, go


def _pool_lane_pair(wpairs, c):
    """Even/odd lane pairing for the W direction of MaxPool2d(2).

    Both matrices write onto the even-w lane group (lane 2*wp*c + cc); odd-w
    lanes of the result are exactly zero and are never read downstream."""
    lanes = 2 * wpairs * c
    pe = np.zeros((lanes, lanes), np.float32)
    po = np.zeros_like(pe)
    for wp in range(wpairs):
        for cc in range(c):
            pe[2 * wp * c + cc, 2 * wp * c + cc] = 1.0
            po[(2 * wp + 1) * c + cc, 2 * wp * c + cc] = 1.0
    return pe, po


def build_kernel_params(convs, fcs):
    wf1, shift1 = _fold_bn(convs[0])
    wf2, shift2 = _fold_bn(convs[1])

    wd1 = _conv_tap_weights(wf1, W, CIN, C1, 1)            # (3, 48, 128)
    wd2 = _conv_tap_weights(wf2, W2, C1, C2, 2)            # (3, 128, 128)
    sh1 = np.tile(shift1, W).reshape(1, L1)                # lane = w*C1 + c1
    sh2 = np.tile(shift2, W2).reshape(1, L2)               # lane = w2*C2 + c2

    s1u, s1d = _h_shift(N, H, -1), _h_shift(N, H, +1)      # conv1 kh = 0 / 2
    s2u, s2d = _h_shift(N, H2, -1), _h_shift(N, H2, +1)    # conv2 kh = 0 / 2
    g1e, g1o = _pool_row_select(N, H)
    g2e, g2o = _pool_row_select(N, H2)
    pe1, po1 = _pool_lane_pair(W2, C1)
    pe2, po2 = _pool_lane_pair(W3, C2)

    # Flatten: gf[h3] selects the (n, h3) rows of the pooled (N*H3, 128) map.
    gf = np.zeros((H3, N, N * H3), np.float32)
    for h3 in range(H3):
        for n in range(N):
            gf[h3, n, n * H3 + h3] = 1.0

    (w1, b1), (w2, b2), (w3, b3) = [(np.asarray(wq, np.float32),
                                     np.asarray(bq, np.float32)) for wq, bq in fcs]
    # FC1 weight in the kernel's flatten order: lane h3*128 + (2*w3)*C2 + c2
    # <- torch NCHW-flatten feature c2*(H3*W3) + h3*W3 + w3; unused lanes -> 0.
    w1t = w1.T                                             # (in, out)
    w1dil = np.zeros((FDIL, w1.shape[0]), np.float32)
    for h3 in range(H3):
        for w3p in range(W3):
            for c2 in range(C2):
                lane = h3 * L2 + 2 * w3p * C2 + c2
                feat = c2 * (H3 * W3) + h3 * W3 + w3p
                w1dil[lane, :] = w1t[feat, :]

    arrs = (wd1, s1u, s1d, sh1, g1e, g1o, pe1, po1,
            wd2, s2u, s2d, sh2, g2e, g2o, pe2, po2,
            gf, w1dil, b1.reshape(1, -1), w2.T, b2.reshape(1, -1),
            w3.T, b3.reshape(1, -1))
    return tuple(jnp.asarray(a, jnp.float32) for a in arrs)


# ----------------------------------------------------------------------------
# Deterministic synthetic parameters in canonical (torch-like) layout.
# ----------------------------------------------------------------------------
def init_params(key):
    eps = 1e-5
    convs = []
    cin = CIN
    for cout in LAYERS:
        key, k1, k2, k3, k4, k5, k6 = jax.random.split(key, 7)
        convs.append(dict(
            w=0.1 * jax.random.normal(k1, (cout, cin, 3, 3), jnp.float32),
            b=0.1 * jax.random.normal(k2, (cout,), jnp.float32),
            gamma=1.0 + 0.1 * jax.random.normal(k3, (cout,), jnp.float32),
            beta=0.1 * jax.random.normal(k4, (cout,), jnp.float32),
            mean=0.1 * jax.random.normal(k5, (cout,), jnp.float32),
            var=0.5 + jax.random.uniform(k6, (cout,), jnp.float32),
            eps=eps))
        cin = cout
    fcs = []
    feat = C2 * H3 * W3
    for din, dout in ((feat, FC1_OUT), (FC1_OUT, FC2_OUT), (FC2_OUT, NCLS)):
        key, k1, k2 = jax.random.split(key, 3)
        fcs.append((jax.random.normal(k1, (dout, din), jnp.float32) / float(np.sqrt(din)),
                    0.05 * jax.random.normal(k2, (dout,), jnp.float32)))
    return convs, fcs


# ----------------------------------------------------------------------------
# Pure-JAX (XLA) reference with the exact module semantics, for validation.
# ----------------------------------------------------------------------------
def reference_forward(x, convs, fcs):
    hi = jax.lax.Precision.HIGHEST
    for p in convs:
        scale = p['gamma'] / jnp.sqrt(p['var'] + p['eps'])
        z = jax.lax.conv_general_dilated(
            x, p['w'], window_strides=(1, 1), padding='SAME',
            dimension_numbers=('NCHW', 'OIHW', 'NCHW'), precision=hi)
        z = z + p['b'][None, :, None, None]
        y = (z - p['mean'][None, :, None, None]) * scale[None, :, None, None] \
            + p['beta'][None, :, None, None]
        y = jnp.maximum(y, 0.0)
        n, c, hh, ww = y.shape
        x = y.reshape(n, c, hh // 2, 2, ww // 2, 2).max(axis=(3, 5))
    h = x.reshape(x.shape[0], -1)                      # torch NCHW flatten
    (w1, b1), (w2, b2), (w3, b3) = fcs
    h = jnp.maximum(jnp.dot(h, w1.T, precision=hi) + b1, 0.0)
    h = jnp.maximum(jnp.dot(h, w2.T, precision=hi) + b2, 0.0)
    return jnp.dot(h, w3.T, precision=hi) + b3


if __name__ == "__main__":
    key = jax.random.PRNGKey(0)
    key, xkey = jax.random.split(key)

    # batch=2, 3 input channels, 16x16 image, layers=[8, 16] -> flatten dim 256.
    x = jax.random.normal(xkey, (N, CIN, IMG, IMG), jnp.float32)

    convs, fcs = init_params(key)
    kparams = build_kernel_params(convs, fcs)

    fwd = jax.jit(custom_cnn_forward)
    out = jax.block_until_ready(fwd(x, kparams))
    assert out.shape == (N, NCLS) and out.dtype == jnp.float32

    ref = reference_forward(x, convs, fcs)
    max_err = float(jnp.max(jnp.abs(out - ref)))
    assert max_err < 5e-2, f"kernel/reference mismatch: max_err={max_err}"

    print("KERNEL_OK")
</pallas_src>

<mosaic_0001>
module attributes {stable_mosaic.version = 11 : i64} {
  func.func @_cnn_kernel(%arg0: memref<32x48xf32, #tpu.memory_space<vmem>>, %arg1: memref<3x48x128xf32, #tpu.memory_space<vmem>>, %arg2: memref<32x32xf32, #tpu.memory_space<vmem>>, %arg3: memref<32x32xf32, #tpu.memory_space<vmem>>, %arg4: memref<1x128xf32, #tpu.memory_space<vmem>>, %arg5: memref<16x32xf32, #tpu.memory_space<vmem>>, %arg6: memref<16x32xf32, #tpu.memory_space<vmem>>, %arg7: memref<128x128xf32, #tpu.memory_space<vmem>>, %arg8: memref<128x128xf32, #tpu.memory_space<vmem>>, %arg9: memref<3x128x128xf32, #tpu.memory_space<vmem>>, %arg10: memref<16x16xf32, #tpu.memory_space<vmem>>, %arg11: memref<16x16xf32, #tpu.memory_space<vmem>>, %arg12: memref<1x128xf32, #tpu.memory_space<vmem>>, %arg13: memref<8x16xf32, #tpu.memory_space<vmem>>, %arg14: memref<8x16xf32, #tpu.memory_space<vmem>>, %arg15: memref<128x128xf32, #tpu.memory_space<vmem>>, %arg16: memref<128x128xf32, #tpu.memory_space<vmem>>, %arg17: memref<4x2x8xf32, #tpu.memory_space<vmem>>, %arg18: memref<512x256xf32, #tpu.memory_space<vmem>>, %arg19: memref<1x256xf32, #tpu.memory_space<vmem>>, %arg20: memref<256x128xf32, #tpu.memory_space<vmem>>, %arg21: memref<1x128xf32, #tpu.memory_space<vmem>>, %arg22: memref<128x2xf32, #tpu.memory_space<vmem>>, %arg23: memref<1x2xf32, #tpu.memory_space<vmem>>, %arg24: memref<2x2xf32, #tpu.memory_space<vmem>>) attributes {dimension_semantics = [], scalar_prefetch = 0 : i64, scratch_operands = 0 : i64, tpu.core_type = #tpu.core_type<tc>} {
    %c0 = arith.constant 0 : index
    %c0_0 = arith.constant 0 : index
    %0 = vector.load %arg0[%c0, %c0_0] : memref<32x48xf32, #tpu.memory_space<vmem>>, vector<32x48xf32>
    %c1 = arith.constant 1 : index
    %c0_1 = arith.constant 0 : index
    %c0_2 = arith.constant 0 : index
    %1 = vector.load %arg1[%c1, %c0_1, %c0_2] : memref<3x48x128xf32, #tpu.memory_space<vmem>>, vector<1x48x128xf32>
    %2 = vector.shape_cast %1 : vector<1x48x128xf32> to vector<48x128xf32>
    %cst = arith.constant dense<0.000000e+00> : vector<32x128xf32>
    %3 = tpu.matmul %0, %2, %cst {dimension_numbers = #tpu.dot_dimension_numbers<[1], [0], [0], [1], [0, 0, 1, 1], [], []>} : vector<32x48xf32>, vector<48x128xf32>, vector<32x128xf32> -> vector<32x128xf32>
    %c0_3 = arith.constant 0 : index
    %c0_4 = arith.constant 0 : index
    %4 = vector.load %arg2[%c0_3, %c0_4] : memref<32x32xf32, #tpu.memory_space<vmem>>, vector<32x32xf32>
    %cst_5 = arith.constant dense<0.000000e+00> : vector<32x48xf32>
    %5 = tpu.matmul %4, %0, %cst_5 {dimension_numbers = #tpu.dot_dimension_numbers<[1], [0], [0], [1], [0, 0, 1, 1], [], []>} : vector<32x32xf32>, vector<32x48xf32>, vector<32x48xf32> -> vector<32x48xf32>
    %c0_6 = arith.constant 0 : index
    %c0_7 = arith.constant 0 : index
    %c0_8 = arith.constant 0 : index
    %6 = vector.load %arg1[%c0_6, %c0_7, %c0_8] : memref<3x48x128xf32, #tpu.memory_space<vmem>>, vector<1x48x128xf32>
    %7 = vector.shape_cast %6 : vector<1x48x128xf32> to vector<48x128xf32>
    %cst_9 = arith.constant dense<0.000000e+00> : vector<32x128xf32>
    %8 = tpu.matmul %5, %7, %cst_9 {dimension_numbers = #tpu.dot_dimension_numbers<[1], [0], [0], [1], [0, 0, 1, 1], [], []>} : vector<32x48xf32>, vector<48x128xf32>, vector<32x128xf32> -> vector<32x128xf32>
    %9 = arith.addf %3, %8 : vector<32x128xf32>
    %c0_10 = arith.constant 0 : index
    %c0_11 = arith.constant 0 : index
    %10 = vector.load %arg3[%c0_10, %c0_11] : memref<32x32xf32, #tpu.memory_space<vmem>>, vector<32x32xf32>
    %cst_12 = arith.constant dense<0.000000e+00> : vector<32x48xf32>
    %11 = tpu.matmul %10, %0, %cst_12 {dimension_numbers = #tpu.dot_dimension_numbers<[1], [0], [0], [1], [0, 0, 1, 1], [], []>} : vector<32x32xf32>, vector<32x48xf32>, vector<32x48xf32> -> vector<32x48xf32>
    %c2 = arith.constant 2 : index
    %c0_13 = arith.constant 0 : index
    %c0_14 = arith.constant 0 : index
    %12 = vector.load %arg1[%c2, %c0_13, %c0_14] : memref<3x48x128xf32, #tpu.memory_space<vmem>>, vector<1x48x128xf32>
    %13 = vector.shape_cast %12 : vector<1x48x128xf32> to vector<48x128xf32>
    %cst_15 = arith.constant dense<0.000000e+00> : vector<32x128xf32>
    %14 = tpu.matmul %11, %13, %cst_15 {dimension_numbers = #tpu.dot_dimension_numbers<[1], [0], [0], [1], [0, 0, 1, 1], [], []>} : vector<32x48xf32>, vector<48x128xf32>, vector<32x128xf32> -> vector<32x128xf32>
    %15 = arith.addf %9, %14 : vector<32x128xf32>
    %c0_16 = arith.constant 0 : index
    %c0_17 = arith.constant 0 : index
    %16 = vector.load %arg4[%c0_16, %c0_17] : memref<1x128xf32, #tpu.memory_space<vmem>>, vector<1x128xf32>
    %17 = vector.broadcast %16 : vector<1x128xf32> to vector<32x128xf32>
    %18 = arith.addf %15, %17 : vector<32x128xf32>
    %cst_18 = arith.constant 0.000000e+00 : f32
    %19 = vector.broadcast %cst_18 : f32 to vector<32x128xf32>
    %20 = arith.maximumf %18, %19 : vector<32x128xf32>
    %c0_19 = arith.constant 0 : index
    %c0_20 = arith.constant 0 : index
    %21 = vector.load %arg5[%c0_19, %c0_20] : memref<16x32xf32, #tpu.memory_space<vmem>>, vector<16x32xf32>
    %cst_21 = arith.constant dense<0.000000e+00> : vector<16x128xf32>
    %22 = tpu.matmul %21, %20, %cst_21 {dimension_numbers = #tpu.dot_dimension_numbers<[1], [0], [0], [1], [0, 0, 1, 1], [], []>} : vector<16x32xf32>, vector<32x128xf32>, vector<16x128xf32> -> vector<16x128xf32>
    %c0_22 = arith.constant 0 : index
    %c0_23 = arith.constant 0 : index
    %23 = vector.load %arg6[%c0_22, %c0_23] : memref<16x32xf32, #tpu.memory_space<vmem>>, vector<16x32xf32>
    %cst_24 = arith.constant dense<0.000000e+00> : vector<16x128xf32>
    %24 = tpu.matmul %23, %20, %cst_24 {dimension_numbers = #tpu.dot_dimension_numbers<[1], [0], [0], [1], [0, 0, 1, 1], [], []>} : vector<16x32xf32>, vector<32x128xf32>, vector<16x128xf32> -> vector<16x128xf32>
    %25 = arith.maximumf %22, %24 : vector<16x128xf32>
    %c0_25 = arith.constant 0 : index
    %c0_26 = arith.constant 0 : index
    %26 = vector.load %arg7[%c0_25, %c0_26] : memref<128x128xf32, #tpu.memory_space<vmem>>, vector<128x128xf32>
    %cst_27 = arith.constant dense<0.000000e+00> : vector<16x128xf32>
    %27 = tpu.matmul %25, %26, %cst_27 {dimension_numbers = #tpu.dot_dimension_numbers<[1], [0], [0], [1], [0, 0, 1, 1], [], []>} : vector<16x128xf32>, vector<128x128xf32>, vector<16x128xf32> -> vector<16x128xf32>
    %c0_28 = arith.constant 0 : index
    %c0_29 = arith.constant 0 : index
    %28 = vector.load %arg8[%c0_28, %c0_29] : memref<128x128xf32, #tpu.memory_space<vmem>>, vector<128x128xf32>
    %cst_30 = arith.constant dense<0.000000e+00> : vector<16x128xf32>
    %29 = tpu.matmul %25, %28, %cst_30 {dimension_numbers = #tpu.dot_dimension_numbers<[1], [0], [0], [1], [0, 0, 1, 1], [], []>} : vector<16x128xf32>, vector<128x128xf32>, vector<16x128xf32> -> vector<16x128xf32>
    %30 = arith.maximumf %27, %29 : vector<16x128xf32>
    %c1_31 = arith.constant 1 : index
    %c0_32 = arith.constant 0 : index
    %c0_33 = arith.constant 0 : index
    %31 = vector.load %arg9[%c1_31, %c0_32, %c0_33] : memref<3x128x128xf32, #tpu.memory_space<vmem>>, vector<1x128x128xf32>
    %32 = vector.shape_cast %31 : vector<1x128x128xf32> to vector<128x128xf32>
    %cst_34 = arith.constant dense<0.000000e+00> : vector<16x128xf32>
    %33 = tpu.matmul %30, %32, %cst_34 {dimension_numbers = #tpu.dot_dimension_numbers<[1], [0], [0], [1], [0, 0, 1, 1], [], []>} : vector<16x128xf32>, vector<128x128xf32>, vector<16x128xf32> -> vector<16x128xf32>
    %c0_35 = arith.constant 0 : index
    %c0_36 = arith.constant 0 : index
    %34 = vector.load %arg10[%c0_35, %c0_36] : memref<16x16xf32, #tpu.memory_space<vmem>>, vector<16x16xf32>
    %cst_37 = arith.constant dense<0.000000e+00> : vector<16x128xf32>
    %35 = tpu.matmul %34, %30, %cst_37 {dimension_numbers = #tpu.dot_dimension_numbers<[1], [0], [0], [1], [0, 0, 1, 1], [], []>} : vector<16x16xf32>, vector<16x128xf32>, vector<16x128xf32> -> vector<16x128xf32>
    %c0_38 = arith.constant 0 : index
    %c0_39 = arith.constant 0 : index
    %c0_40 = arith.constant 0 : index
    %36 = vector.load %arg9[%c0_38, %c0_39, %c0_40] : memref<3x128x128xf32, #tpu.memory_space<vmem>>, vector<1x128x128xf32>
    %37 = vector.shape_cast %36 : vector<1x128x128xf32> to vector<128x128xf32>
    %cst_41 = arith.constant dense<0.000000e+00> : vector<16x128xf32>
    %38 = tpu.matmul %35, %37, %cst_41 {dimension_numbers = #tpu.dot_dimension_numbers<[1], [0], [0], [1], [0, 0, 1, 1], [], []>} : vector<16x128xf32>, vector<128x128xf32>, vector<16x128xf32> -> vector<16x128xf32>
    %39 = arith.addf %33, %38 : vector<16x128xf32>
    %c0_42 = arith.constant 0 : index
    %c0_43 = arith.constant 0 : index
    %40 = vector.load %arg11[%c0_42, %c0_43] : memref<16x16xf32, #tpu.memory_space<vmem>>, vector<16x16xf32>
    %cst_44 = arith.constant dense<0.000000e+00> : vector<16x128xf32>
    %41 = tpu.matmul %40, %30, %cst_44 {dimension_numbers = #tpu.dot_dimension_numbers<[1], [0], [0], [1], [0, 0, 1, 1], [], []>} : vector<16x16xf32>, vector<16x128xf32>, vector<16x128xf32> -> vector<16x128xf32>
    %c2_45 = arith.constant 2 : index
    %c0_46 = arith.constant 0 : index
    %c0_47 = arith.constant 0 : index
    %42 = vector.load %arg9[%c2_45, %c0_46, %c0_47] : memref<3x128x128xf32, #tpu.memory_space<vmem>>, vector<1x128x128xf32>
    %43 = vector.shape_cast %42 : vector<1x128x128xf32> to vector<128x128xf32>
    %cst_48 = arith.constant dense<0.000000e+00> : vector<16x128xf32>
    %44 = tpu.matmul %41, %43, %cst_48 {dimension_numbers = #tpu.dot_dimension_numbers<[1], [0], [0], [1], [0, 0, 1, 1], [], []>} : vector<16x128xf32>, vector<128x128xf32>, vector<16x128xf32> -> vector<16x128xf32>
    %45 = arith.addf %39, %44 : vector<16x128xf32>
    %c0_49 = arith.constant 0 : index
    %c0_50 = arith.constant 0 : index
    %46 = vector.load %arg12[%c0_49, %c0_50] : memref<1x128xf32, #tpu.memory_space<vmem>>, vector<1x128xf32>
    %47 = vector.broadcast %46 : vector<1x128xf32> to vector<16x128xf32>
    %48 = arith.addf %45, %47 : vector<16x128xf32>
    %cst_51 = arith.constant 0.000000e+00 : f32
    %49 = vector.broadcast %cst_51 : f32 to vector<16x128xf32>
    %50 = arith.maximumf %48, %49 : vector<16x128xf32>
    %c0_52 = arith.constant 0 : index
    %c0_53 = arith.constant 0 : index
    %51 = vector.load %arg13[%c0_52, %c0_53] : memref<8x16xf32, #tpu.memory_space<vmem>>, vector<8x16xf32>
    %cst_54 = arith.constant dense<0.000000e+00> : vector<8x128xf32>
    %52 = tpu.matmul %51, %50, %cst_54 {dimension_numbers = #tpu.dot_dimension_numbers<[1], [0], [0], [1], [0, 0, 1, 1], [], []>} : vector<8x16xf32>, vector<16x128xf32>, vector<8x128xf32> -> vector<8x128xf32>
    %c0_55 = arith.constant 0 : index
    %c0_56 = arith.constant 0 : index
    %53 = vector.load %arg14[%c0_55, %c0_56] : memref<8x16xf32, #tpu.memory_space<vmem>>, vector<8x16xf32>
    %cst_57 = arith.constant dense<0.000000e+00> : vector<8x128xf32>
    %54 = tpu.matmul %53, %50, %cst_57 {dimension_numbers = #tpu.dot_dimension_numbers<[1], [0], [0], [1], [0, 0, 1, 1], [], []>} : vector<8x16xf32>, vector<16x128xf32>, vector<8x128xf32> -> vector<8x128xf32>
    %55 = arith.maximumf %52, %54 : vector<8x128xf32>
    %c0_58 = arith.constant 0 : index
    %c0_59 = arith.constant 0 : index
    %56 = vector.load %arg15[%c0_58, %c0_59] : memref<128x128xf32, #tpu.memory_space<vmem>>, vector<128x128xf32>
    %cst_60 = arith.constant dense<0.000000e+00> : vector<8x128xf32>
    %57 = tpu.matmul %55, %56, %cst_60 {dimension_numbers = #tpu.dot_dimension_numbers<[1], [0], [0], [1], [0, 0, 1, 1], [], []>} : vector<8x128xf32>, vector<128x128xf32>, vector<8x128xf32> -> vector<8x128xf32>
    %c0_61 = arith.constant 0 : index
    %c0_62 = arith.constant 0 : index
    %58 = vector.load %arg16[%c0_61, %c0_62] : memref<128x128xf32, #tpu.memory_space<vmem>>, vector<128x128xf32>
    %cst_63 = arith.constant dense<0.000000e+00> : vector<8x128xf32>
    %59 = tpu.matmul %55, %58, %cst_63 {dimension_numbers = #tpu.dot_dimension_numbers<[1], [0], [0], [1], [0, 0, 1, 1], [], []>} : vector<8x128xf32>, vector<128x128xf32>, vector<8x128xf32> -> vector<8x128xf32>
    %60 = arith.maximumf %57, %59 : vector<8x128xf32>
    %c0_64 = arith.constant 0 : index
    %c0_65 = arith.constant 0 : index
    %c0_66 = arith.constant 0 : index
    %61 = vector.load %arg17[%c0_64, %c0_65, %c0_66] : memref<4x2x8xf32, #tpu.memory_space<vmem>>, vector<1x2x8xf32>
    %62 = vector.shape_cast %61 : vector<1x2x8xf32> to vector<2x8xf32>
    %cst_67 = arith.constant dense<0.000000e+00> : vector<2x128xf32>
    %63 = tpu.matmul %62, %60, %cst_67 {dimension_numbers = #tpu.dot_dimension_numbers<[1], [0], [0], [1], [0, 0, 1, 1], [], []>} : vector<2x8xf32>, vector<8x128xf32>, vector<2x128xf32> -> vector<2x128xf32>
    %c1_68 = arith.constant 1 : index
    %c0_69 = arith.constant 0 : index
    %c0_70 = arith.constant 0 : index
    %64 = vector.load %arg17[%c1_68, %c0_69, %c0_70] : memref<4x2x8xf32, #tpu.memory_space<vmem>>, vector<1x2x8xf32>
    %65 = vector.shape_cast %64 : vector<1x2x8xf32> to vector<2x8xf32>
    %cst_71 = arith.constant dense<0.000000e+00> : vector<2x128xf32>
    %66 = tpu.matmul %65, %60, %cst_71 {dimension_numbers = #tpu.dot_dimension_numbers<[1], [0], [0], [1], [0, 0, 1, 1], [], []>} : vector<2x8xf32>, vector<8x128xf32>, vector<2x128xf32> -> vector<2x128xf32>
    %c2_72 = arith.constant 2 : index
    %c0_73 = arith.constant 0 : index
    %c0_74 = arith.constant 0 : index
    %67 = vector.load %arg17[%c2_72, %c0_73, %c0_74] : memref<4x2x8xf32, #tpu.memory_space<vmem>>, vector<1x2x8xf32>
    %68 = vector.shape_cast %67 : vector<1x2x8xf32> to vector<2x8xf32>
    %cst_75 = arith.constant dense<0.000000e+00> : vector<2x128xf32>
    %69 = tpu.matmul %68, %60, %cst_75 {dimension_numbers = #tpu.dot_dimension_numbers<[1], [0], [0], [1], [0, 0, 1, 1], [], []>} : vector<2x8xf32>, vector<8x128xf32>, vector<2x128xf32> -> vector<2x128xf32>
    %c3 = arith.constant 3 : index
    %c0_76 = arith.constant 0 : index
    %c0_77 = arith.constant 0 : index
    %70 = vector.load %arg17[%c3, %c0_76, %c0_77] : memref<4x2x8xf32, #tpu.memory_space<vmem>>, vector<1x2x8xf32>
    %71 = vector.shape_cast %70 : vector<1x2x8xf32> to vector<2x8xf32>
    %cst_78 = arith.constant dense<0.000000e+00> : vector<2x128xf32>
    %72 = tpu.matmul %71, %60, %cst_78 {dimension_numbers = #tpu.dot_dimension_numbers<[1], [0], [0], [1], [0, 0, 1, 1], [], []>} : vector<2x8xf32>, vector<8x128xf32>, vector<2x128xf32> -> vector<2x128xf32>
    %73 = tpu.concatenate %63, %66, %69, %72 in 1 : vector<2x128xf32>, vector<2x128xf32>, vector<2x128xf32>, vector<2x128xf32> -> vector<2x512xf32>
    %c0_79 = arith.constant 0 : index
    %c0_80 = arith.constant 0 : index
    %74 = vector.load %arg18[%c0_79, %c0_80] : memref<512x256xf32, #tpu.memory_space<vmem>>, vector<512x256xf32>
    %cst_81 = arith.constant dense<0.000000e+00> : vector<2x256xf32>
    %75 = tpu.matmul %73, %74, %cst_81 {dimension_numbers = #tpu.dot_dimension_numbers<[1], [0], [0], [1], [0, 0, 1, 1], [], []>} : vector<2x512xf32>, vector<512x256xf32>, vector<2x256xf32> -> vector<2x256xf32>
    %c0_82 = arith.constant 0 : index
    %c0_83 = arith.constant 0 : index
    %76 = vector.load %arg19[%c0_82, %c0_83] : memref<1x256xf32, #tpu.memory_space<vmem>>, vector<1x256xf32>
    %77 = vector.broadcast %76 : vector<1x256xf32> to vector<2x256xf32>
    %78 = arith.addf %75, %77 : vector<2x256xf32>
    %cst_84 = arith.constant 0.000000e+00 : f32
    %79 = vector.broadcast %cst_84 : f32 to vector<2x256xf32>
    %80 = arith.maximumf %78, %79 : vector<2x256xf32>
    %c0_85 = arith.constant 0 : index
    %c0_86 = arith.constant 0 : index
    %81 = vector.load %arg20[%c0_85, %c0_86] : memref<256x128xf32, #tpu.memory_space<vmem>>, vector<256x128xf32>
    %cst_87 = arith.constant dense<0.000000e+00> : vector<2x128xf32>
    %82 = tpu.matmul %80, %81, %cst_87 {dimension_numbers = #tpu.dot_dimension_numbers<[1], [0], [0], [1], [0, 0, 1, 1], [], []>} : vector<2x256xf32>, vector<256x128xf32>, vector<2x128xf32> -> vector<2x128xf32>
    %c0_88 = arith.constant 0 : index
    %c0_89 = arith.constant 0 : index
    %83 = vector.load %arg21[%c0_88, %c0_89] : memref<1x128xf32, #tpu.memory_space<vmem>>, vector<1x128xf32>
    %84 = vector.broadcast %83 : vector<1x128xf32> to vector<2x128xf32>
    %85 = arith.addf %82, %84 : vector<2x128xf32>
    %cst_90 = arith.constant 0.000000e+00 : f32
    %86 = vector.broadcast %cst_90 : f32 to vector<2x128xf32>
    %87 = arith.maximumf %85, %86 : vector<2x128xf32>
    %c0_91 = arith.constant 0 : index
    %c0_92 = arith.constant 0 : index
    %88 = vector.load %arg22[%c0_91, %c0_92] : memref<128x2xf32, #tpu.memory_space<vmem>>, vector<128x2xf32>
    %cst_93 = arith.constant dense<0.000000e+00> : vector<2x2xf32>
    %89 = tpu.matmul %87, %88, %cst_93 {dimension_numbers = #tpu.dot_dimension_numbers<[1], [0], [0], [1], [0, 0, 1, 1], [], []>} : vector<2x128xf32>, vector<128x2xf32>, vector<2x2xf32> -> vector<2x2xf32>
    %c0_94 = arith.constant 0 : index
    %c0_95 = arith.constant 0 : index
    %90 = vector.load %arg23[%c0_94, %c0_95] : memref<1x2xf32, #tpu.memory_space<vmem>>, vector<1x2xf32>
    %91 = vector.broadcast %90 : vector<1x2xf32> to vector<2x2xf32>
    %92 = arith.addf %89, %91 : vector<2x2xf32>
    %c0_96 = arith.constant 0 : index
    %c0_97 = arith.constant 0 : index
    %93 = vector.load %arg24[%c0_96, %c0_97] : memref<2x2xf32, #tpu.memory_space<vmem>>, vector<2x2xf32>
    tpu.vector_store %arg24[%c0_96, %c0_97], %92 {strides = array<i32>} : memref<2x2xf32, #tpu.memory_space<vmem>>, vector<2x2xf32>,
    return
  }
}

</mosaic_0001>

<llo_original>
// kernel: custom_cnn_forward.1
$region0: #{custom_cnn_forward.1}
  #allocation0 [shape = 'u32[]', space=smem, size = 0x4, offset = 0x4, fixed_abs, tag = 'smem constant byte address 0x4 - core index']
  #allocation1 [shape = 'u32[144,128]{1,0:T(1,128)}', space=vmem, size = 0x12000, scoped, tag = 'internal scratch']
  %s0 = inlined_call_operand.vmem [shape: f32[32,48], index: 0, kind: input, shape index: {}]
  %s1 = inlined_call_operand.vmem [shape: f32[3,48,128], index: 1, kind: input, shape index: {}]
  %s2 = inlined_call_operand.vmem [shape: f32[32,32], index: 2, kind: input, shape index: {}]
  %s3 = inlined_call_operand.hbm [shape: f32[32,32], index: 3, kind: input, shape index: {}]
  %s4 = inlined_call_operand.vmem [shape: f32[1,128], index: 4, kind: input, shape index: {}]
  %s5 = inlined_call_operand.vmem [shape: f32[16,32], index: 5, kind: input, shape index: {}]
  %s6 = inlined_call_operand.hbm [shape: f32[16,32], index: 6, kind: input, shape index: {}]
  %s7 = inlined_call_operand.hbm [shape: f32[128,128], index: 7, kind: input, shape index: {}]
  %s8 = inlined_call_operand.hbm [shape: f32[128,128], index: 8, kind: input, shape index: {}]
  %s9 = inlined_call_operand.vmem [shape: f32[3,128,128], index: 9, kind: input, shape index: {}]
  %s10 = inlined_call_operand.hbm [shape: f32[16,16], index: 10, kind: input, shape index: {}]
  %s11 = inlined_call_operand.hbm [shape: f32[16,16], index: 11, kind: input, shape index: {}]
  %s12 = inlined_call_operand.vmem [shape: f32[1,128], index: 12, kind: input, shape index: {}]
  %s13 = inlined_call_operand.vmem [shape: f32[8,16], index: 13, kind: input, shape index: {}]
  %s14 = inlined_call_operand.vmem [shape: f32[8,16], index: 14, kind: input, shape index: {}]
  %s15 = inlined_call_operand.hbm [shape: f32[128,128], index: 15, kind: input, shape index: {}]
  %s16 = inlined_call_operand.hbm [shape: f32[128,128], index: 16, kind: input, shape index: {}]
  %s17 = inlined_call_operand.vmem [shape: f32[4,2,8], index: 17, kind: input, shape index: {}]
  %s18 = inlined_call_operand.hbm [shape: f32[512,256], index: 18, kind: input, shape index: {}]
  %s19 = inlined_call_operand.vmem [shape: f32[1,256], index: 19, kind: input, shape index: {}]
  %s20 = inlined_call_operand.hbm [shape: f32[256,128], index: 20, kind: input, shape index: {}]
  %s21 = inlined_call_operand.vmem [shape: f32[1,128], index: 21, kind: input, shape index: {}]
  %s22 = inlined_call_operand.vmem [shape: f32[128,2], index: 22, kind: input, shape index: {}]
  %s23 = inlined_call_operand.vmem [shape: f32[1,2], index: 23, kind: input, shape index: {}]
  %s24 = inlined_call_operand.hbm [shape: f32[2,2], index: 24, kind: output, shape index: {}]
  %s25 = sld [smem:[#allocation0]]
  $region146: #{custom_cnn_forward.1} parent=0
    _
  %s27 = ssub.s32 1, %s25
  %s28 = scalar_select 0, %s27, %s25
  $region1: #{custom_cnn_forward.1} parent=0
    #allocation2 [shape = 'u8[16384]{0}', space=vmem, size = 0x4000, scoped, tag = 'input window, operand 3, single buffered']
    #allocation3 [shape = 's32[1]{0}', space=sflag, size = 0x4, scoped, tag = 'scoped memory for custom_cnn_forward.1']
    #allocation4 [shape = 's32[1]{0}', space=sflag, size = 0x4, scoped, tag = 'scoped memory for custom_cnn_forward.1']
    #allocation5 [shape = 'u8[8192]{0}', space=vmem, size = 0x2000, scoped, tag = 'input window, operand 6, single buffered']
    #allocation6 [shape = 's32[1]{0}', space=sflag, size = 0x4, scoped, tag = 'scoped memory for custom_cnn_forward.1']
    #allocation7 [shape = 'u8[65536]{0}', space=vmem, size = 0x10000, scoped, tag = 'input window, operand 7, single buffered']
    #allocation8 [shape = 'u8[65536]{0}', space=vmem, size = 0x10000, scoped, tag = 'input window, operand 8, single buffered']
    #allocation9 [shape = 's32[1]{0}', space=sflag, size = 0x4, scoped, tag = 'scoped memory for custom_cnn_forward.1']
    #allocation10 [shape = 'u8[8192]{0}', space=vmem, size = 0x2000, scoped, tag = 'input window, operand 10, single buffered']
    #allocation11 [shape = 'u8[8192]{0}', space=vmem, size = 0x2000, scoped, tag = 'input window, operand 11, single buffered']
    #allocation12 [shape = 's32[1]{0}', space=sflag, size = 0x4, scoped, tag = 'scoped memory for custom_cnn_forward.1']
    #allocation13 [shape = 'u8[65536]{0}', space=vmem, size = 0x10000, scoped, tag = 'input window, operand 15, single buffered']
    #allocation14 [shape = 'u8[65536]{0}', space=vmem, size = 0x10000, scoped, tag = 'input window, operand 16, single buffered']
    #allocation15 [shape = 's32[1]{0}', space=sflag, size = 0x4, scoped, tag = 'scoped memory for custom_cnn_forward.1']
    #allocation16 [shape = 'u8[524288]{0}', space=vmem, size = 0x80000, scoped, tag = 'input window, operand 18, single buffered']
    #allocation17 [shape = 'u8[131072]{0}', space=vmem, size = 0x20000, scoped, tag = 'input window, operand 20, single buffered']
    #allocation18 [shape = 's32[1]{0}', space=sflag, size = 0x4, scoped, tag = 'scoped memory for custom_cnn_forward.1']
    #allocation19 [shape = 'u8[1024]{0}', space=vmem, size = 0x400, scoped, tag = 'output window, operand 0, single buffered']
    %29 = vsyncpa [#allocation3], 0
    %30 = vsyncpa [#allocation6], 0
    %31 = vsyncpa [#allocation9], 0
    %32 = vsyncpa [#allocation12], 0
    %33 = vsyncpa [#allocation15], 0
    %34 = vsyncpa [#allocation18], 0
    %35 = vsyncpa [#allocation4], 0
    // Predicated region
    $region2: #{custom_cnn_forward.1} parent=1 // pred_check
      _
    $region3: #{custom_cnn_forward.1} parent=1 // pred_check_branch
      %37 = sbr.rel (0) target = $region5
    $region4: #{custom_cnn_forward.1} parent=1 // pred_region
      _
    $region5: #{custom_cnn_forward.1} parent=1 // pred_fallthru
      _
    // Predicated region
    $region6: #{custom_cnn_forward.1} parent=1 // pred_check
      _
    $region7: #{custom_cnn_forward.1} parent=1 // pred_check_branch
      %39 = sbr.rel (0) target = $region9
    $region8: #{custom_cnn_forward.1} parent=1 // pred_region
      _
    $region9: #{custom_cnn_forward.1} parent=1 // pred_fallthru
      _
    // Predicated region
    $region10: #{custom_cnn_forward.1} parent=1 // pred_check
      _
    $region11: #{custom_cnn_forward.1} parent=1 // pred_check_branch
      %41 = sbr.rel (0) target = $region13
    $region12: #{custom_cnn_forward.1} parent=1 // pred_region
      _
    $region13: #{custom_cnn_forward.1} parent=1 // pred_fallthru
      _
    // Predicated region
    $region14: #{custom_cnn_forward.1} parent=1 // pred_check
      _
    $region15: #{custom_cnn_forward.1} parent=1 // pred_check_branch
      %43 = sbr.rel (0) target = $region17
    $region16: #{custom_cnn_forward.1} parent=1 // pred_region
      %s45 = ssub.s32 512, 512
      %46 = vsyncadd [#allocation3], %s45
      %s47 = sshll.u32 [#allocation2], 4
      %s48 = int_to_ptr.vmem [resolvable:$true] %s47
      %53 = dma.hbm_to_vmem [thread:$0]  %s3, 512, %s48, [#allocation3], 128, 128, 8
    $region17: #{custom_cnn_forward.1} parent=1 // pred_fallthru
      _
    // Predicated region
    $region18: #{custom_cnn_forward.1} parent=1 // pred_check
      _
    $region19: #{custom_cnn_forward.1} parent=1 // pred_check_branch
      %55 = sbr.rel (0) target = $region21
    $region20: #{custom_cnn_forward.1} parent=1 // pred_region
      _
    $region21: #{custom_cnn_forward.1} parent=1 // pred_fallthru
      _
    // Predicated region
    $region22: #{custom_cnn_forward.1} parent=1 // pred_check
      _
    $region23: #{custom_cnn_forward.1} parent=1 // pred_check_branch
      %57 = sbr.rel (0) target = $region25
    $region24: #{custom_cnn_forward.1} parent=1 // pred_region
      _
    $region25: #{custom_cnn_forward.1} parent=1 // pred_fallthru
      _
    // Predicated region
    $region26: #{custom_cnn_forward.1} parent=1 // pred_check
      _
    $region27: #{custom_cnn_forward.1} parent=1 // pred_check_branch
      %59 = sbr.rel (0) target = $region29
    $region28: #{custom_cnn_forward.1} parent=1 // pred_region
      %s61 = ssub.s32 256, 256
      %62 = vsyncadd [#allocation6], %s61
      %s63 = sshll.u32 [#allocation5], 4
      %s64 = int_to_ptr.vmem [resolvable:$true] %s63
      %69 = dma.hbm_to_vmem [thread:$0]  %s6, 256, %s64, [#allocation6], 128, 128, 8
    $region29: #{custom_cnn_forward.1} parent=1 // pred_fallthru
      _
    // Predicated region
    $region30: #{custom_cnn_forward.1} parent=1 // pred_check
      _
    $region31: #{custom_cnn_forward.1} parent=1 // pred_check_branch
      %71 = sbr.rel (0) target = $region33
    $region32: #{custom_cnn_forward.1} parent=1 // pred_region
      %s73 = ssub.s32 2048, 2048
      %74 = vsyncadd [#allocation6], %s73
      %s75 = sshll.u32 [#allocation7], 4
      %s76 = int_to_ptr.vmem [resolvable:$true] %s75
      %81 = dma.hbm_to_vmem [thread:$0]  %s7, 2048, %s76, [#allocation6], 128, 128, 8
    $region33: #{custom_cnn_forward.1} parent=1 // pred_fallthru
      _
    // Predicated region
    $region34: #{custom_cnn_forward.1} parent=1 // pred_check
      _
    $region35: #{custom_cnn_forward.1} parent=1 // pred_check_branch
      %83 = sbr.rel (0) target = $region37
    $region36: #{custom_cnn_forward.1} parent=1 // pred_region
      %s85 = ssub.s32 2048, 2048
      %86 = vsyncadd [#allocation9], %s85
      %s87 = sshll.u32 [#allocation8], 4
      %s88 = int_to_ptr.vmem [resolvable:$true] %s87
      %93 = dma.hbm_to_vmem [thread:$0]  %s8, 2048, %s88, [#allocation9], 128, 128, 8
    $region37: #{custom_cnn_forward.1} parent=1 // pred_fallthru
      _
    // Predicated region
    $region38: #{custom_cnn_forward.1} parent=1 // pred_check
      _
    $region39: #{custom_cnn_forward.1} parent=1 // pred_check_branch
      %95 = sbr.rel (0) target = $region41
    $region40: #{custom_cnn_forward.1} parent=1 // pred_region
      _
    $region41: #{custom_cnn_forward.1} parent=1 // pred_fallthru
      _
    // Predicated region
    $region42: #{custom_cnn_forward.1} parent=1 // pred_check
      _
    $region43: #{custom_cnn_forward.1} parent=1 // pred_check_branch
      %97 = sbr.rel (0) target = $region45
    $region44: #{custom_cnn_forward.1} parent=1 // pred_region
      %s99 = ssub.s32 256, 256
      %100 = vsyncadd [#allocation9], %s99
      %s101 = sshll.u32 [#allocation10], 4
      %s102 = int_to_ptr.vmem [resolvable:$true] %s101
      %107 = dma.hbm_to_vmem [thread:$0]  %s10, 256, %s102, [#allocation9], 128, 128, 8
    $region45: #{custom_cnn_forward.1} parent=1 // pred_fallthru
      _
    // Predicated region
    $region46: #{custom_cnn_forward.1} parent=1 // pred_check
      _
    $region47: #{custom_cnn_forward.1} parent=1 // pred_check_branch
      %109 = sbr.rel (0) target = $region49
    $region48: #{custom_cnn_forward.1} parent=1 // pred_region
      %s111 = ssub.s32 256, 256
      %112 = vsyncadd [#allocation12], %s111
      %s113 = sshll.u32 [#allocation11], 4
      %s114 = int_to_ptr.vmem [resolvable:$true] %s113
      %119 = dma.hbm_to_vmem [thread:$0]  %s11, 256, %s114, [#allocation12], 128, 128, 8
    $region49: #{custom_cnn_forward.1} parent=1 // pred_fallthru
      _
    // Predicated region
    $region50: #{custom_cnn_forward.1} parent=1 // pred_check
      _
    $region51: #{custom_cnn_forward.1} parent=1 // pred_check_branch
      %121 = sbr.rel (0) target = $region53
    $region52: #{custom_cnn_forward.1} parent=1 // pred_region
      _
    $region53: #{custom_cnn_forward.1} parent=1 // pred_fallthru
      _
    // Predicated region
    $region54: #{custom_cnn_forward.1} parent=1 // pred_check
      _
    $region55: #{custom_cnn_forward.1} parent=1 // pred_check_branch
      %123 = sbr.rel (0) target = $region57
    $region56: #{custom_cnn_forward.1} parent=1 // pred_region
      _
    $region57: #{custom_cnn_forward.1} parent=1 // pred_fallthru
      _
    // Predicated region
    $region58: #{custom_cnn_forward.1} parent=1 // pred_check
      _
    $region59: #{custom_cnn_forward.1} parent=1 // pred_check_branch
      %125 = sbr.rel (0) target = $region61
    $region60: #{custom_cnn_forward.1} parent=1 // pred_region
      _
    $region61: #{custom_cnn_forward.1} parent=1 // pred_fallthru
      _
    // Predicated region
    $region62: #{custom_cnn_forward.1} parent=1 // pred_check
      _
    $region63: #{custom_cnn_forward.1} parent=1 // pred_check_branch
      %127 = sbr.rel (0) target = $region65
    $region64: #{custom_cnn_forward.1} parent=1 // pred_region
      %s129 = ssub.s32 2048, 2048
      %130 = vsyncadd [#allocation12], %s129
      %s131 = sshll.u32 [#allocation13], 4
      %s132 = int_to_ptr.vmem [resolvable:$true] %s131
      %137 = dma.hbm_to_vmem [thread:$0]  %s15, 2048, %s132, [#allocation12], 128, 128, 8
    $region65: #{custom_cnn_forward.1} parent=1 // pred_fallthru
      _
    // Predicated region
    $region66: #{custom_cnn_forward.1} parent=1 // pred_check
      _
    $region67: #{custom_cnn_forward.1} parent=1 // pred_check_branch
      %139 = sbr.rel (0) target = $region69
    $region68: #{custom_cnn_forward.1} parent=1 // pred_region
      %s141 = ssub.s32 2048, 2048
      %142 = vsyncadd [#allocation15], %s141
      %s143 = sshll.u32 [#allocation14], 4
      %s144 = int_to_ptr.vmem [resolvable:$true] %s143
      %149 = dma.hbm_to_vmem [thread:$0]  %s16, 2048, %s144, [#allocation15], 128, 128, 8
    $region69: #{custom_cnn_forward.1} parent=1 // pred_fallthru
      _
    // Predicated region
    $region70: #{custom_cnn_forward.1} parent=1 // pred_check
      _
    $region71: #{custom_cnn_forward.1} parent=1 // pred_check_branch
      %151 = sbr.rel (0) target = $region73
    $region72: #{custom_cnn_forward.1} parent=1 // pred_region
      _
    $region73: #{custom_cnn_forward.1} parent=1 // pred_fallthru
      _
    // Predicated region
    $region74: #{custom_cnn_forward.1} parent=1 // pred_check
      _
    $region75: #{custom_cnn_forward.1} parent=1 // pred_check_branch
      %153 = sbr.rel (0) target = $region77
    $region76: #{custom_cnn_forward.1} parent=1 // pred_region
      %s155 = ssub.s32 16384, 16384
      %156 = vsyncadd [#allocation15], %s155
      %s157 = sshll.u32 [#allocation16], 4
      %s158 = int_to_ptr.vmem [resolvable:$true] %s157
      %163 = dma.hbm_to_vmem [thread:$0]  %s18, 16384, %s158, [#allocation15], 256, 256, 16
    $region77: #{custom_cnn_forward.1} parent=1 // pred_fallthru
      _
    // Predicated region
    $region78: #{custom_cnn_forward.1} parent=1 // pred_check
      _
    $region79: #{custom_cnn_forward.1} parent=1 // pred_check_branch
      %165 = sbr.rel (0) target = $region81
    $region80: #{custom_cnn_forward.1} parent=1 // pred_region
      _
    $region81: #{custom_cnn_forward.1} parent=1 // pred_fallthru
      _
    // Predicated region
    $region82: #{custom_cnn_forward.1} parent=1 // pred_check
      _
    $region83: #{custom_cnn_forward.1} parent=1 // pred_check_branch
      %167 = sbr.rel (0) target = $region85
    $region84: #{custom_cnn_forward.1} parent=1 // pred_region
      %s169 = ssub.s32 4096, 4096
      %170 = vsyncadd [#allocation18], %s169
      %s171 = sshll.u32 [#allocation17], 4
      %s172 = int_to_ptr.vmem [resolvable:$true] %s171
      %177 = dma.hbm_to_vmem [thread:$0]  %s20, 4096, %s172, [#allocation18], 128, 128, 8
    $region85: #{custom_cnn_forward.1} parent=1 // pred_fallthru
      _
    // Predicated region
    $region86: #{custom_cnn_forward.1} parent=1 // pred_check
      _
    $region87: #{custom_cnn_forward.1} parent=1 // pred_check_branch
      %179 = sbr.rel (0) target = $region89
    $region88: #{custom_cnn_forward.1} parent=1 // pred_region
      _
    $region89: #{custom_cnn_forward.1} parent=1 // pred_fallthru
      _
    // Predicated region
    $region90: #{custom_cnn_forward.1} parent=1 // pred_check
      _
    $region91: #{custom_cnn_forward.1} parent=1 // pred_check_branch
      %181 = sbr.rel (0) target = $region93
    $region92: #{custom_cnn_forward.1} parent=1 // pred_region
      _
    $region93: #{custom_cnn_forward.1} parent=1 // pred_fallthru
      _
    // Predicated region
    $region94: #{custom_cnn_forward.1} parent=1 // pred_check
      _
    $region95: #{custom_cnn_forward.1} parent=1 // pred_check_branch
      %183 = sbr.rel (0) target = $region97
    $region96: #{custom_cnn_forward.1} parent=1 // pred_region
      _
    $region97: #{custom_cnn_forward.1} parent=1 // pred_fallthru
      _
    // Predicated region
    $region98: #{custom_cnn_forward.1} parent=1 // pred_check
      _
    $region99: #{custom_cnn_forward.1} parent=1 // pred_check_branch
      %185 = sbr.rel (0) target = $region101
    $region100: #{custom_cnn_forward.1} parent=1 // pred_region
      %186 = dma.done [#allocation3], 512
    $region101: #{custom_cnn_forward.1} parent=1 // pred_fallthru
      _
    // Predicated region
    $region102: #{custom_cnn_forward.1} parent=1 // pred_check
      _
    $region103: #{custom_cnn_forward.1} parent=1 // pred_check_branch
      %188 = sbr.rel (0) target = $region105
    $region104: #{custom_cnn_forward.1} parent=1 // pred_region
      %189 = dma.done [#allocation6], 256
    $region105: #{custom_cnn_forward.1} parent=1 // pred_fallthru
      _
    // Predicated region
    $region106: #{custom_cnn_forward.1} parent=1 // pred_check
      _
    $region107: #{custom_cnn_forward.1} parent=1 // pred_check_branch
      %191 = sbr.rel (0) target = $region109
    $region108: #{custom_cnn_forward.1} parent=1 // pred_region
      %192 = dma.done [#allocation6], 2048
    $region109: #{custom_cnn_forward.1} parent=1 // pred_fallthru
      _
    // Predicated region
    $region110: #{custom_cnn_forward.1} parent=1 // pred_check
      _
    $region111: #{custom_cnn_forward.1} parent=1 // pred_check_branch
      %194 = sbr.rel (0) target = $region113
    $region112: #{custom_cnn_forward.1} parent=1 // pred_region
      %195 = dma.done [#allocation9], 2048
    $region113: #{custom_cnn_forward.1} parent=1 // pred_fallthru
      _
    // Predicated region
    $region114: #{custom_cnn_forward.1} parent=1 // pred_check
      _
    $region115: #{custom_cnn_forward.1} parent=1 // pred_check_branch
      %197 = sbr.rel (0) target = $region117
    $region116: #{custom_cnn_forward.1} parent=1 // pred_region
      %198 = dma.done [#allocation9], 256
    $region117: #{custom_cnn_forward.1} parent=1 // pred_fallthru
      _
    // Predicated region
    $region118: #{custom_cnn_forward.1} parent=1 // pred_check
      _
    $region119: #{custom_cnn_forward.1} parent=1 // pred_check_branch
      %200 = sbr.rel (0) target = $region121
    $region120: #{custom_cnn_forward.1} parent=1 // pred_region
      %201 = dma.done [#allocation12], 256
    $region121: #{custom_cnn_forward.1} parent=1 // pred_fallthru
      _
    // Predicated region
    $region122: #{custom_cnn_forward.1} parent=1 // pred_check
      _
    $region123: #{custom_cnn_forward.1} parent=1 // pred_check_branch
      %203 = sbr.rel (0) target = $region125
    $region124: #{custom_cnn_forward.1} parent=1 // pred_region
      %204 = dma.done [#allocation12], 2048
    $region125: #{custom_cnn_forward.1} parent=1 // pred_fallthru
      _
    // Predicated region
    $region126: #{custom_cnn_forward.1} parent=1 // pred_check
      _
    $region127: #{custom_cnn_forward.1} parent=1 // pred_check_branch
      %206 = sbr.rel (0) target = $region129
    $region128: #{custom_cnn_forward.1} parent=1 // pred_region
      %207 = dma.done [#allocation15], 2048
    $region129: #{custom_cnn_forward.1} parent=1 // pred_fallthru
      _
    // Predicated region
    $region130: #{custom_cnn_forward.1} parent=1 // pred_check
      _
    $region131: #{custom_cnn_forward.1} parent=1 // pred_check_branch
      %209 = sbr.rel (0) target = $region133
    $region132: #{custom_cnn_forward.1} parent=1 // pred_region
      %210 = dma.done [#allocation15], 16384
    $region133: #{custom_cnn_forward.1} parent=1 // pred_fallthru
      _
    // Predicated region
    $region134: #{custom_cnn_forward.1} parent=1 // pred_check
      _
    $region135: #{custom_cnn_forward.1} parent=1 // pred_check_branch
      %212 = sbr.rel (0) target = $region137
    $region136: #{custom_cnn_forward.1} parent=1 // pred_region
      %213 = dma.done [#allocation18], 4096
    $region137: #{custom_cnn_forward.1} parent=1 // pred_fallthru
      _
    %v214 = vld [vmem:[%s0] sm:$0xff]
    %v215 = vld [vmem:[%s0 + $0x8] sm:$0xff]
    %v216 = vld [vmem:[%s0 + $0x10] sm:$0xff]
    %v217 = vld [vmem:[%s0 + $0x18] sm:$0xff]
    %s218 = scalar_lea.vmem %s1, 48
    %v219 = vld [vmem:[%s218] sm:$0xff]
    %v220 = vld [vmem:[%s218 + $0x8] sm:$0xff]
    %v221 = vld [vmem:[%s218 + $0x10] sm:$0xff]
    %v222 = vld [vmem:[%s218 + $0x18] sm:$0xff]
    %v223 = vld [vmem:[%s218 + $0x20] sm:$0xff]
    %v224 = vld [vmem:[%s218 + $0x28] sm:$0xff]
    %v225 = vld [vmem:[%s2] sm:$0xff]
    %v226 = vld [vmem:[%s2 + $0x8] sm:$0xff]
    %v227 = vld [vmem:[%s2 + $0x10] sm:$0xff]
    %v228 = vld [vmem:[%s2 + $0x18] sm:$0xff]
    %vm229 = vcmask 261120
    %v231 = vsel %vm229, %v225, 0
    %v234 = vsel %vm229, %v226, 0
    %v237 = vsel %vm229, %v227, 0
    %v240 = vsel %vm229, %v228, 0
    %242 = vmatprep.subr.mxu0 0.0
    %243 = vmatpush1.msra.mxu0 %v214
    %244 = vmatprep.subr.mxu0 0.0
    %245 = vmatpush1.msra.mxu0 %v215
    %246 = vmatprep.subr.mxu0 0.0
    %247 = vmatpush1.msra.mxu0 %v216
    %248 = vmatprep.subr.mxu0 0.0
    %249 = vmatpush1.msra.mxu0 %v217
    %250 = vmatprep.subr.mxu0 0.0
    %251 = vmatpush1.msra.mxu0 0.0
    %252 = vmatprep.subr.mxu0 0.0
    %253 = vmatpush1.msra.mxu0 0.0
    %254 = vmatprep.subr.mxu0 0.0
    %255 = vmatpush1.msra.mxu0 0.0
    %256 = vmatprep.subr.mxu0 0.0
    %257 = vmatpush1.msra.mxu0 0.0
    %258 = vmatprep.subr.mxu0 0.0
    %259 = vmatpush1.msra.mxu0 0.0
    %260 = vmatprep.subr.mxu0 0.0
    %261 = vmatpush1.msra.mxu0 0.0
    %262 = vmatprep.subr.mxu0 0.0
    %263 = vmatpush1.msra.mxu0 0.0
    %264 = vmatprep.subr.mxu0 0.0
    %265 = vmatpush1.msra.mxu0 0.0
    %266 = vmatprep.subr.mxu0 0.0
    %267 = vmatpush1.msra.mxu0 0.0
    %268 = vmatprep.subr.mxu0 0.0
    %269 = vmatpush1.msra.mxu0 0.0
    %270 = vmatprep.subr.mxu0 0.0
    %271 = vmatpush1.msra.mxu0 0.0
    %272 = vmatprep.subr.mxu0 0.0
    %273 = vmatpush1.msra.mxu0 0.0
    %274 = vmatprep.subr.mxu0 0.0
    %275 = vmatpush1.msra.mxu0 0.0
    %276 = vmatprep.subr.mxu0 0.0
    %277 = vmatpush1.msra.mxu0 0.0
    %278 = vmatprep.subr.mxu0 0.0
    %279 = vmatpush1.msra.mxu0 0.0
    %280 = vmatprep.subr.mxu0 0.0
    %281 = vmatpush1.msra.mxu0 0.0
    %282 = vmatprep.subr.mxu0 0.0
    %283 = vmatpush1.msra.mxu0 0.0
    %284 = vmatprep.subr.mxu0 0.0
    %285 = vmatpush1.msra.mxu0 0.0
    %286 = vmatprep.subr.mxu0 0.0
    %287 = vmatpush1.msra.mxu0 0.0
    %288 = vmatprep.subr.mxu0 0.0
    %289 = vmatpush1.msra.mxu0 0.0
    %290 = vmatprep.subr.mxu0 0.0
    %291 = vmatpush1.msra.mxu0 0.0
    %292 = vmatprep.subr.mxu0 0.0
    %293 = vmatpush1.msra.mxu0 0.0
    %294 = vmatprep.subr.mxu0 0.0
    %295 = vmatpush1.msra.mxu0 0.0
    %296 = vmatprep.subr.mxu0 0.0
    %297 = vmatpush1.msra.mxu0 0.0
    %298 = vmatprep.subr.mxu0 0.0
    %299 = vmatpush1.msra.mxu0 0.0
    %300 = vmatprep.subr.mxu0 0.0
    %301 = vmatpush1.msra.mxu0 0.0
    %302 = vmatprep.subr.mxu0 0.0
    %303 = vmatpush1.msra.mxu0 0.0
    %304 = vmatprep.subr.mxu0 0.0
    %305 = vmatpush1.msra.mxu0 0.0
    %306 = vmatprep.mubr.f32.mxu0 0.0
    %307 = vmatmul.mubr.f32.gmra.mrb[0].mxu0 %v231
    %v308 = vpop.f32.mrb[0].mxu0
    %v309 = vadd.f32 0.0, %v308
    %v310 = vpop.f32.mrb[0].mxu0
    %311 = vmatprep.mubr.f32.mxu0 0.0
    %312 = vmatmul.mubr.f32.gmra.mrb[0].mxu0 %v234
    %v313 = vpop.f32.mrb[0].mxu0
    %v314 = vadd.f32 0.0, %v313
    %v315 = vpop.f32.mrb[0].mxu0
    %316 = vmatprep.mubr.f32.mxu0 0.0
    %317 = vmatmul.mubr.f32.gmra.mrb[0].mxu0 %v237
    %v318 = vpop.f32.mrb[0].mxu0
    %v319 = vadd.f32 0.0, %v318
    %v320 = vpop.f32.mrb[0].mxu0
    %321 = vmatprep.mubr.f32.mxu0 0.0
    %322 = vmatmul.mubr.f32.gmra.mrb[0].mxu0 %v240
    %v323 = vpop.f32.mrb[0].mxu0
    %v324 = vadd.f32 0.0, %v323
    %v325 = vpop.f32.mrb[0].mxu0
    %326 = vdwg.mxu0
    %v327 = vld [vmem:[%s1] sm:$0xff]
    %v328 = vld [vmem:[%s1 + $0x8] sm:$0xff]
    %v329 = vld [vmem:[%s1 + $0x10] sm:$0xff]
    %v330 = vld [vmem:[%s1 + $0x18] sm:$0xff]
    %v331 = vld [vmem:[%s1 + $0x20] sm:$0xff]
    %v332 = vld [vmem:[%s1 + $0x28] sm:$0xff]
    %vm333 = vcmask 392192
    %v335 = vsel %vm333, %v309, 0
    %v338 = vsel %vm333, %v314, 0
    %v341 = vsel %vm333, %v319, 0
    %v344 = vsel %vm333, %v324, 0
    %346 = vmatprep.subr.mxu0 0.0
    %347 = vmatpush1.msra.mxu0 %v327
    %348 = vmatprep.subr.mxu0 0.0
    %349 = vmatpush1.msra.mxu0 %v328
    %350 = vmatprep.subr.mxu0 0.0
    %351 = vmatpush1.msra.mxu0 %v329
    %352 = vmatprep.subr.mxu0 0.0
    %353 = vmatpush1.msra.mxu0 %v330
    %354 = vmatprep.subr.mxu0 0.0
    %355 = vmatpush1.msra.mxu0 %v331
    %356 = vmatprep.subr.mxu0 0.0
    %357 = vmatpush1.msra.mxu0 %v332
    %358 = vmatprep.subr.mxu0 0.0
    %359 = vmatpush1.msra.mxu0 0.0
    %360 = vmatprep.subr.mxu0 0.0
    %361 = vmatpush1.msra.mxu0 0.0
    %362 = vmatprep.subr.mxu0 0.0
    %363 = vmatpush1.msra.mxu0 0.0
    %364 = vmatprep.subr.mxu0 0.0
    %365 = vmatpush1.msra.mxu0 0.0
    %366 = vmatprep.subr.mxu0 0.0
    %367 = vmatpush1.msra.mxu0 0.0
    %368 = vmatprep.subr.mxu0 0.0
    %369 = vmatpush1.msra.mxu0 0.0
    %370 = vmatprep.subr.mxu0 0.0
    %371 = vmatpush1.msra.mxu0 0.0
    %372 = vmatprep.subr.mxu0 0.0
    %373 = vmatpush1.msra.mxu0 0.0
    %374 = vmatprep.subr.mxu0 0.0
    %375 = vmatpush1.msra.mxu0 0.0
    %376 = vmatprep.subr.mxu0 0.0
    %377 = vmatpush1.msra.mxu0 0.0
    %378 = vmatprep.subr.mxu0 0.0
    %379 = vmatpush1.msra.mxu0 0.0
    %380 = vmatprep.subr.mxu0 0.0
    %381 = vmatpush1.msra.mxu0 0.0
    %382 = vmatprep.subr.mxu0 0.0
    %383 = vmatpush1.msra.mxu0 0.0
    %384 = vmatprep.subr.mxu0 0.0
    %385 = vmatpush1.msra.mxu0 0.0
    %386 = vmatprep.subr.mxu0 0.0
    %387 = vmatpush1.msra.mxu0 0.0
    %388 = vmatprep.subr.mxu0 0.0
    %389 = vmatpush1.msra.mxu0 0.0
    %390 = vmatprep.subr.mxu0 0.0
    %391 = vmatpush1.msra.mxu0 0.0
    %392 = vmatprep.subr.mxu0 0.0
    %393 = vmatpush1.msra.mxu0 0.0
    %394 = vmatprep.subr.mxu0 0.0
    %395 = vmatpush1.msra.mxu0 0.0
    %396 = vmatprep.subr.mxu0 0.0
    %397 = vmatpush1.msra.mxu0 0.0
    %398 = vmatprep.subr.mxu0 0.0
    %399 = vmatpush1.msra.mxu0 0.0
    %400 = vmatprep.subr.mxu0 0.0
    %401 = vmatpush1.msra.mxu0 0.0
    %402 = vmatprep.subr.mxu0 0.0
    %403 = vmatpush1.msra.mxu0 0.0
    %404 = vmatprep.subr.mxu0 0.0
    %405 = vmatpush1.msra.mxu0 0.0
    %406 = vmatprep.subr.mxu0 0.0
    %407 = vmatpush1.msra.mxu0 0.0
    %408 = vmatprep.subr.mxu0 0.0
    %409 = vmatpush1.msra.mxu0 0.0
    %410 = vmatprep.mubr.f32.mxu0 0.0
    %411 = vmatmul.mubr.f32.gmra.mrb[0].mxu0 %v335
    %v412 = vpop.f32.mrb[0].mxu0
    %v413 = vadd.f32 0.0, %v412
    %v414 = vpop.f32.mrb[0].mxu0
    %415 = vmatprep.mubr.f32.mxu0 0.0
    %416 = vmatmul.mubr.f32.gmra.mrb[0].mxu0 %v338
    %v417 = vpop.f32.mrb[0].mxu0
    %v418 = vadd.f32 0.0, %v417
    %v419 = vpop.f32.mrb[0].mxu0
    %420 = vmatprep.mubr.f32.mxu0 0.0
    %421 = vmatmul.mubr.f32.gmra.mrb[0].mxu0 %v341
    %v422 = vpop.f32.mrb[0].mxu0
    %v423 = vadd.f32 0.0, %v422
    %v424 = vpop.f32.mrb[0].mxu0
    %425 = vmatprep.mubr.f32.mxu0 0.0
    %426 = vmatmul.mubr.f32.gmra.mrb[0].mxu0 %v344
    %v427 = vpop.f32.mrb[0].mxu0
    %v428 = vadd.f32 0.0, %v427
    %v429 = vpop.f32.mrb[0].mxu0
    %430 = vdwg.mxu0
    %v432 = vsel %vm333, %v214, 0
    %v435 = vsel %vm333, %v215, 0
    %v438 = vsel %vm333, %v216, 0
    %v441 = vsel %vm333, %v217, 0
    %443 = vmatprep.subr.mxu0 0.0
    %444 = vmatpush1.msra.mxu0 %v219
    %445 = vmatprep.subr.mxu0 0.0
    %446 = vmatpush1.msra.mxu0 %v220
    %447 = vmatprep.subr.mxu0 0.0
    %448 = vmatpush1.msra.mxu0 %v221
    %449 = vmatprep.subr.mxu0 0.0
    %450 = vmatpush1.msra.mxu0 %v222
    %451 = vmatprep.subr.mxu0 0.0
    %452 = vmatpush1.msra.mxu0 %v223
    %453 = vmatprep.subr.mxu0 0.0
    %454 = vmatpush1.msra.mxu0 %v224
    %455 = vmatprep.subr.mxu0 0.0
    %456 = vmatpush1.msra.mxu0 0.0
    %457 = vmatprep.subr.mxu0 0.0
    %458 = vmatpush1.msra.mxu0 0.0
    %459 = vmatprep.subr.mxu0 0.0
    %460 = vmatpush1.msra.mxu0 0.0
    %461 = vmatprep.subr.mxu0 0.0
    %462 = vmatpush1.msra.mxu0 0.0
    %463 = vmatprep.subr.mxu0 0.0
    %464 = vmatpush1.msra.mxu0 0.0
    %465 = vmatprep.subr.mxu0 0.0
    %466 = vmatpush1.msra.mxu0 0.0
    %467 = vmatprep.subr.mxu0 0.0
    %468 = vmatpush1.msra.mxu0 0.0
    %469 = vmatprep.subr.mxu0 0.0
    %470 = vmatpush1.msra.mxu0 0.0
    %471 = vmatprep.subr.mxu0 0.0
    %472 = vmatpush1.msra.mxu0 0.0
    %473 = vmatprep.subr.mxu0 0.0
    %474 = vmatpush1.msra.mxu0 0.0
    %475 = vmatprep.subr.mxu0 0.0
    %476 = vmatpush1.msra.mxu0 0.0
    %477 = vmatprep.subr.mxu0 0.0
    %478 = vmatpush1.msra.mxu0 0.0
    %479 = vmatprep.subr.mxu0 0.0
    %480 = vmatpush1.msra.mxu0 0.0
    %481 = vmatprep.subr.mxu0 0.0
    %482 = vmatpush1.msra.mxu0 0.0
    %483 = vmatprep.subr.mxu0 0.0
    %484 = vmatpush1.msra.mxu0 0.0
    %485 = vmatprep.subr.mxu0 0.0
    %486 = vmatpush1.msra.mxu0 0.0
    %487 = vmatprep.subr.mxu0 0.0
    %488 = vmatpush1.msra.mxu0 0.0
    %489 = vmatprep.subr.mxu0 0.0
    %490 = vmatpush1.msra.mxu0 0.0
    %491 = vmatprep.subr.mxu0 0.0
    %492 = vmatpush1.msra.mxu0 0.0
    %493 = vmatprep.subr.mxu0 0.0
    %494 = vmatpush1.msra.mxu0 0.0
    %495 = vmatprep.subr.mxu0 0.0
    %496 = vmatpush1.msra.mxu0 0.0
    %497 = vmatprep.subr.mxu0 0.0
    %498 = vmatpush1.msra.mxu0 0.0
    %499 = vmatprep.subr.mxu0 0.0
    %500 = vmatpush1.msra.mxu0 0.0
    %501 = vmatprep.subr.mxu0 0.0
    %502 = vmatpush1.msra.mxu0 0.0
    %503 = vmatprep.subr.mxu0 0.0
    %504 = vmatpush1.msra.mxu0 0.0
    %505 = vmatprep.subr.mxu0 0.0
    %506 = vmatpush1.msra.mxu0 0.0
    %507 = vmatprep.mubr.f32.mxu0 0.0
    %508 = vmatmul.mubr.f32.gmra.mrb[0].mxu0 %v432
    %v509 = vpop.f32.mrb[0].mxu0
    %v510 = vadd.f32 %v413, %v509
    %v511 = vpop.f32.mrb[0].mxu0
    %512 = vmatprep.mubr.f32.mxu0 0.0
    %513 = vmatmul.mubr.f32.gmra.mrb[0].mxu0 %v435
    %v514 = vpop.f32.mrb[0].mxu0
    %v515 = vadd.f32 %v418, %v514
    %v516 = vpop.f32.mrb[0].mxu0
    %517 = vmatprep.mubr.f32.mxu0 0.0
    %518 = vmatmul.mubr.f32.gmra.mrb[0].mxu0 %v438
    %v519 = vpop.f32.mrb[0].mxu0
    %v520 = vadd.f32 %v423, %v519
    %v521 = vpop.f32.mrb[0].mxu0
    %522 = vmatprep.mubr.f32.mxu0 0.0
    %523 = vmatmul.mubr.f32.gmra.mrb[0].mxu0 %v441
    %v524 = vpop.f32.mrb[0].mxu0
    %v525 = vadd.f32 %v428, %v524
    %v526 = vpop.f32.mrb[0].mxu0
    %527 = vdwg.mxu0
    %v528 = vld [vmem:[#allocation2] sm:$0xff]
    %v529 = vld [vmem:[#allocation2 + $0x8] sm:$0xff]
    %v530 = vld [vmem:[#allocation2 + $0x10] sm:$0xff]
    %v531 = vld [vmem:[#allocation2 + $0x18] sm:$0xff]
    %v533 = vsel %vm229, %v528, 0
    %v536 = vsel %vm229, %v529, 0
    %v539 = vsel %vm229, %v530, 0
    %v542 = vsel %vm229, %v531, 0
    %544 = vmatprep.subr.mxu0 0.0
    %545 = vmatpush1.msra.mxu0 %v214
    %546 = vmatprep.subr.mxu0 0.0
    %547 = vmatpush1.msra.mxu0 %v215
    %548 = vmatprep.subr.mxu0 0.0
    %549 = vmatpush1.msra.mxu0 %v216
    %550 = vmatprep.subr.mxu0 0.0
    %551 = vmatpush1.msra.mxu0 %v217
    %552 = vmatprep.subr.mxu0 0.0
    %553 = vmatpush1.msra.mxu0 0.0
    %554 = vmatprep.subr.mxu0 0.0
    %555 = vmatpush1.msra.mxu0 0.0
    %556 = vmatprep.subr.mxu0 0.0
    %557 = vmatpush1.msra.mxu0 0.0
    %558 = vmatprep.subr.mxu0 0.0
    %559 = vmatpush1.msra.mxu0 0.0
    %560 = vmatprep.subr.mxu0 0.0
    %561 = vmatpush1.msra.mxu0 0.0
    %562 = vmatprep.subr.mxu0 0.0
    %563 = vmatpush1.msra.mxu0 0.0
    %564 = vmatprep.subr.mxu0 0.0
    %565 = vmatpush1.msra.mxu0 0.0
    %566 = vmatprep.subr.mxu0 0.0
    %567 = vmatpush1.msra.mxu0 0.0
    %568 = vmatprep.subr.mxu0 0.0
    %569 = vmatpush1.msra.mxu0 0.0
    %570 = vmatprep.subr.mxu0 0.0
    %571 = vmatpush1.msra.mxu0 0.0
    %572 = vmatprep.subr.mxu0 0.0
    %573 = vmatpush1.msra.mxu0 0.0
    %574 = vmatprep.subr.mxu0 0.0
    %575 = vmatpush1.msra.mxu0 0.0
    %576 = vmatprep.subr.mxu0 0.0
    %577 = vmatpush1.msra.mxu0 0.0
    %578 = vmatprep.subr.mxu0 0.0
    %579 = vmatpush1.msra.mxu0 0.0
    %580 = vmatprep.subr.mxu0 0.0
    %581 = vmatpush1.msra.mxu0 0.0
    %582 = vmatprep.subr.mxu0 0.0
    %583 = vmatpush1.msra.mxu0 0.0
    %584 = vmatprep.subr.mxu0 0.0
    %585 = vmatpush1.msra.mxu0 0.0
    %586 = vmatprep.subr.mxu0 0.0
    %587 = vmatpush1.msra.mxu0 0.0
    %588 = vmatprep.subr.mxu0 0.0
    %589 = vmatpush1.msra.mxu0 0.0
    %590 = vmatprep.subr.mxu0 0.0
    %591 = vmatpush1.msra.mxu0 0.0
    %592 = vmatprep.subr.mxu0 0.0
    %593 = vmatpush1.msra.mxu0 0.0
    %594 = vmatprep.subr.mxu0 0.0
    %595 = vmatpush1.msra.mxu0 0.0
    %596 = vmatprep.subr.mxu0 0.0
    %597 = vmatpush1.msra.mxu0 0.0
    %598 = vmatprep.subr.mxu0 0.0
    %599 = vmatpush1.msra.mxu0 0.0
    %600 = vmatprep.subr.mxu0 0.0
    %601 = vmatpush1.msra.mxu0 0.0
    %602 = vmatprep.subr.mxu0 0.0
    %603 = vmatpush1.msra.mxu0 0.0
    %604 = vmatprep.subr.mxu0 0.0
    %605 = vmatpush1.msra.mxu0 0.0
    %606 = vmatprep.subr.mxu0 0.0
    %607 = vmatpush1.msra.mxu0 0.0
    %608 = vmatprep.mubr.f32.mxu0 0.0
    %609 = vmatmul.mubr.f32.gmra.mrb[0].mxu0 %v533
    %v610 = vpop.f32.mrb[0].mxu0
    %v611 = vadd.f32 0.0, %v610
    %v612 = vpop.f32.mrb[0].mxu0
    %613 = vmatprep.mubr.f32.mxu0 0.0
    %614 = vmatmul.mubr.f32.gmra.mrb[0].mxu0 %v536
    %v615 = vpop.f32.mrb[0].mxu0
    %v616 = vadd.f32 0.0, %v615
    %v617 = vpop.f32.mrb[0].mxu0
    %618 = vmatprep.mubr.f32.mxu0 0.0
    %619 = vmatmul.mubr.f32.gmra.mrb[0].mxu0 %v539
    %v620 = vpop.f32.mrb[0].mxu0
    %v621 = vadd.f32 0.0, %v620
    %v622 = vpop.f32.mrb[0].mxu0
    %623 = vmatprep.mubr.f32.mxu0 0.0
    %624 = vmatmul.mubr.f32.gmra.mrb[0].mxu0 %v542
    %v625 = vpop.f32.mrb[0].mxu0
    %v626 = vadd.f32 0.0, %v625
    %v627 = vpop.f32.mrb[0].mxu0
    %628 = vdwg.mxu0
    %s629 = scalar_lea.vmem %s1, 96
    %v630 = vld [vmem:[%s629] sm:$0xff]
    %v631 = vld [vmem:[%s629 + $0x8] sm:$0xff]
    %v632 = vld [vmem:[%s629 + $0x10] sm:$0xff]
    %v633 = vld [vmem:[%s629 + $0x18] sm:$0xff]
    %v634 = vld [vmem:[%s629 + $0x20] sm:$0xff]
    %v635 = vld [vmem:[%s629 + $0x28] sm:$0xff]
    %v637 = vsel %vm333, %v611, 0
    %v640 = vsel %vm333, %v616, 0
    %v643 = vsel %vm333, %v621, 0
    %v646 = vsel %vm333, %v626, 0
    %648 = vmatprep.subr.mxu0 0.0
    %649 = vmatpush1.msra.mxu0 %v630
    %650 = vmatprep.subr.mxu0 0.0
    %651 = vmatpush1.msra.mxu0 %v631
    %652 = vmatprep.subr.mxu0 0.0
    %653 = vmatpush1.msra.mxu0 %v632
    %654 = vmatprep.subr.mxu0 0.0
    %655 = vmatpush1.msra.mxu0 %v633
    %656 = vmatprep.subr.mxu0 0.0
    %657 = vmatpush1.msra.mxu0 %v634
    %658 = vmatprep.subr.mxu0 0.0
    %659 = vmatpush1.msra.mxu0 %v635
    %660 = vmatprep.subr.mxu0 0.0
    %661 = vmatpush1.msra.mxu0 0.0
    %662 = vmatprep.subr.mxu0 0.0
    %663 = vmatpush1.msra.mxu0 0.0
    %664 = vmatprep.subr.mxu0 0.0
    %665 = vmatpush1.msra.mxu0 0.0
    %666 = vmatprep.subr.mxu0 0.0
    %667 = vmatpush1.msra.mxu0 0.0
    %668 = vmatprep.subr.mxu0 0.0
    %669 = vmatpush1.msra.mxu0 0.0
    %670 = vmatprep.subr.mxu0 0.0
    %671 = vmatpush1.msra.mxu0 0.0
    %672 = vmatprep.subr.mxu0 0.0
    %673 = vmatpush1.msra.mxu0 0.0
    %674 = vmatprep.subr.mxu0 0.0
    %675 = vmatpush1.msra.mxu0 0.0
    %676 = vmatprep.subr.mxu0 0.0
    %677 = vmatpush1.msra.mxu0 0.0
    %678 = vmatprep.subr.mxu0 0.0
    %679 = vmatpush1.msra.mxu0 0.0
    %680 = vmatprep.subr.mxu0 0.0
    %681 = vmatpush1.msra.mxu0 0.0
    %682 = vmatprep.subr.mxu0 0.0
    %683 = vmatpush1.msra.mxu0 0.0
    %684 = vmatprep.subr.mxu0 0.0
    %685 = vmatpush1.msra.mxu0 0.0
    %686 = vmatprep.subr.mxu0 0.0
    %687 = vmatpush1.msra.mxu0 0.0
    %688 = vmatprep.subr.mxu0 0.0
    %689 = vmatpush1.msra.mxu0 0.0
    %690 = vmatprep.subr.mxu0 0.0
    %691 = vmatpush1.msra.mxu0 0.0
    %692 = vmatprep.subr.mxu0 0.0
    %693 = vmatpush1.msra.mxu0 0.0
    %694 = vmatprep.subr.mxu0 0.0
    %695 = vmatpush1.msra.mxu0 0.0
    %696 = vmatprep.subr.mxu0 0.0
    %697 = vmatpush1.msra.mxu0 0.0
    %698 = vmatprep.subr.mxu0 0.0
    %699 = vmatpush1.msra.mxu0 0.0
    %700 = vmatprep.subr.mxu0 0.0
    %701 = vmatpush1.msra.mxu0 0.0
    %702 = vmatprep.subr.mxu0 0.0
    %703 = vmatpush1.msra.mxu0 0.0
    %704 = vmatprep.subr.mxu0 0.0
    %705 = vmatpush1.msra.mxu0 0.0
    %706 = vmatprep.subr.mxu0 0.0
    %707 = vmatpush1.msra.mxu0 0.0
    %708 = vmatprep.subr.mxu0 0.0
    %709 = vmatpush1.msra.mxu0 0.0
    %710 = vmatprep.subr.mxu0 0.0
    %711 = vmatpush1.msra.mxu0 0.0
    %712 = vmatprep.mubr.f32.mxu0 0.0
    %713 = vmatmul.mubr.f32.gmra.mrb[0].mxu0 %v637
    %v714 = vpop.f32.mrb[0].mxu0
    %v715 = vadd.f32 0.0, %v714
    %v716 = vpop.f32.mrb[0].mxu0
    %717 = vmatprep.mubr.f32.mxu0 0.0
    %718 = vmatmul.mubr.f32.gmra.mrb[0].mxu0 %v640
    %v719 = vpop.f32.mrb[0].mxu0
    %v720 = vadd.f32 0.0, %v719
    %v721 = vpop.f32.mrb[0].mxu0
    %722 = vmatprep.mubr.f32.mxu0 0.0
    %723 = vmatmul.mubr.f32.gmra.mrb[0].mxu0 %v643
    %v724 = vpop.f32.mrb[0].mxu0
    %v725 = vadd.f32 0.0, %v724
    %v726 = vpop.f32.mrb[0].mxu0
    %727 = vmatprep.mubr.f32.mxu0 0.0
    %728 = vmatmul.mubr.f32.gmra.mrb[0].mxu0 %v646
    %v729 = vpop.f32.mrb[0].mxu0
    %v730 = vadd.f32 0.0, %v729
    %v731 = vpop.f32.mrb[0].mxu0
    %732 = vdwg.mxu0
    %v733 = vadd.f32 %v510, %v715
    %v734 = vadd.f32 %v515, %v720
    %v735 = vadd.f32 %v520, %v725
    %v736 = vadd.f32 %v525, %v730
    %v737 = vld [vmem:[%s4] sm:$0x1]
    %v739 = vlaneseq
    %v740 = vshrl.u32 %v739, 7
    %v741 = vsub.s32 0, %v740
    %v742 = vrot.slane %v737, %v741
    %v744 = vadd.f32 %v733, %v742
    %v745 = vadd.f32 %v734, %v742
    %v746 = vadd.f32 %v735, %v742
    %v747 = vadd.f32 %v736, %v742
    %v748 = vmax.f32 %v744, 0.0
    %v749 = vmax.f32 %v745, 0.0
    %v750 = vmax.f32 %v746, 0.0
    %v751 = vmax.f32 %v747, 0.0
    %v752 = vld [vmem:[%s5] sm:$0xff]
    %v753 = vld [vmem:[%s5 + $0x8] sm:$0xff]
    %v755 = vsel %vm229, %v752, 0
    %v758 = vsel %vm229, %v753, 0
    %760 = vmatprep.subr.mxu0 0.0
    %761 = vmatpush1.msra.mxu0 %v748
    %762 = vmatprep.subr.mxu0 0.0
    %763 = vmatpush1.msra.mxu0 %v749
    %764 = vmatprep.subr.mxu0 0.0
    %765 = vmatpush1.msra.mxu0 %v750
    %766 = vmatprep.subr.mxu0 0.0
    %767 = vmatpush1.msra.mxu0 %v751
    %768 = vmatprep.subr.mxu0 0.0
    %769 = vmatpush1.msra.mxu0 0.0
    %770 = vmatprep.subr.mxu0 0.0
    %771 = vmatpush1.msra.mxu0 0.0
    %772 = vmatprep.subr.mxu0 0.0
    %773 = vmatpush1.msra.mxu0 0.0
    %774 = vmatprep.subr.mxu0 0.0
    %775 = vmatpush1.msra.mxu0 0.0
    %776 = vmatprep.subr.mxu0 0.0
    %777 = vmatpush1.msra.mxu0 0.0
    %778 = vmatprep.subr.mxu0 0.0
    %779 = vmatpush1.msra.mxu0 0.0
    %780 = vmatprep.subr.mxu0 0.0
    %781 = vmatpush1.msra.mxu0 0.0
    %782 = vmatprep.subr.mxu0 0.0
    %783 = vmatpush1.msra.mxu0 0.0
    %784 = vmatprep.subr.mxu0 0.0
    %785 = vmatpush1.msra.mxu0 0.0
    %786 = vmatprep.subr.mxu0 0.0
    %787 = vmatpush1.msra.mxu0 0.0
    %788 = vmatprep.subr.mxu0 0.0
    %789 = vmatpush1.msra.mxu0 0.0
    %790 = vmatprep.subr.mxu0 0.0
    %791 = vmatpush1.msra.mxu0 0.0
    %792 = vmatprep.subr.mxu0 0.0
    %793 = vmatpush1.msra.mxu0 0.0
    %794 = vmatprep.subr.mxu0 0.0
    %795 = vmatpush1.msra.mxu0 0.0
    %796 = vmatprep.subr.mxu0 0.0
    %797 = vmatpush1.msra.mxu0 0.0
    %798 = vmatprep.subr.mxu0 0.0
    %799 = vmatpush1.msra.mxu0 0.0
    %800 = vmatprep.subr.mxu0 0.0
    %801 = vmatpush1.msra.mxu0 0.0
    %802 = vmatprep.subr.mxu0 0.0
    %803 = vmatpush1.msra.mxu0 0.0
    %804 = vmatprep.subr.mxu0 0.0
    %805 = vmatpush1.msra.mxu0 0.0
    %806 = vmatprep.subr.mxu0 0.0
    %807 = vmatpush1.msra.mxu0 0.0
    %808 = vmatprep.subr.mxu0 0.0
    %809 = vmatpush1.msra.mxu0 0.0
    %810 = vmatprep.subr.mxu0 0.0
    %811 = vmatpush1.msra.mxu0 0.0
    %812 = vmatprep.subr.mxu0 0.0
    %813 = vmatpush1.msra.mxu0 0.0
    %814 = vmatprep.subr.mxu0 0.0
    %815 = vmatpush1.msra.mxu0 0.0
    %816 = vmatprep.subr.mxu0 0.0
    %817 = vmatpush1.msra.mxu0 0.0
    %818 = vmatprep.subr.mxu0 0.0
    %819 = vmatpush1.msra.mxu0 0.0
    %820 = vmatprep.subr.mxu0 0.0
    %821 = vmatpush1.msra.mxu0 0.0
    %822 = vmatprep.subr.mxu0 0.0
    %823 = vmatpush1.msra.mxu0 0.0
    %824 = vmatprep.mubr.f32.mxu0 0.0
    %825 = vmatmul.mubr.f32.gmra.mrb[0].mxu0 %v755
    %v826 = vpop.f32.mrb[0].mxu0
    %v827 = vadd.f32 0.0, %v826
    %v828 = vpop.f32.mrb[0].mxu0
    %829 = vmatprep.mubr.f32.mxu0 0.0
    %830 = vmatmul.mubr.f32.gmra.mrb[0].mxu0 %v758
    %v831 = vpop.f32.mrb[0].mxu0
    %v832 = vadd.f32 0.0, %v831
    %v833 = vpop.f32.mrb[0].mxu0
    %834 = vdwg.mxu0
    %v835 = vld [vmem:[#allocation5] sm:$0xff]
    %v836 = vld [vmem:[#allocation5 + $0x8] sm:$0xff]
    %v838 = vsel %vm229, %v835, 0
    %v841 = vsel %vm229, %v836, 0
    %843 = vmatprep.subr.mxu0 0.0
    %844 = vmatpush1.msra.mxu0 %v748
    %845 = vmatprep.subr.mxu0 0.0
    %846 = vmatpush1.msra.mxu0 %v749
    %847 = vmatprep.subr.mxu0 0.0
    %848 = vmatpush1.msra.mxu0 %v750
    %849 = vmatprep.subr.mxu0 0.0
    %850 = vmatpush1.msra.mxu0 %v751
    %851 = vmatprep.subr.mxu0 0.0
    %852 = vmatpush1.msra.mxu0 0.0
    %853 = vmatprep.subr.mxu0 0.0
    %854 = vmatpush1.msra.mxu0 0.0
    %855 = vmatprep.subr.mxu0 0.0
    %856 = vmatpush1.msra.mxu0 0.0
    %857 = vmatprep.subr.mxu0 0.0
    %858 = vmatpush1.msra.mxu0 0.0
    %859 = vmatprep.subr.mxu0 0.0
    %860 = vmatpush1.msra.mxu0 0.0
    %861 = vmatprep.subr.mxu0 0.0
    %862 = vmatpush1.msra.mxu0 0.0
    %863 = vmatprep.subr.mxu0 0.0
    %864 = vmatpush1.msra.mxu0 0.0
    %865 = vmatprep.subr.mxu0 0.0
    %866 = vmatpush1.msra.mxu0 0.0
    %867 = vmatprep.subr.mxu0 0.0
    %868 = vmatpush1.msra.mxu0 0.0
    %869 = vmatprep.subr.mxu0 0.0
    %870 = vmatpush1.msra.mxu0 0.0
    %871 = vmatprep.subr.mxu0 0.0
    %872 = vmatpush1.msra.mxu0 0.0
    %873 = vmatprep.subr.mxu0 0.0
    %874 = vmatpush1.msra.mxu0 0.0
    %875 = vmatprep.subr.mxu0 0.0
    %876 = vmatpush1.msra.mxu0 0.0
    %877 = vmatprep.subr.mxu0 0.0
    %878 = vmatpush1.msra.mxu0 0.0
    %879 = vmatprep.subr.mxu0 0.0
    %880 = vmatpush1.msra.mxu0 0.0
    %881 = vmatprep.subr.mxu0 0.0
    %882 = vmatpush1.msra.mxu0 0.0
    %883 = vmatprep.subr.mxu0 0.0
    %884 = vmatpush1.msra.mxu0 0.0
    %885 = vmatprep.subr.mxu0 0.0
    %886 = vmatpush1.msra.mxu0 0.0
    %887 = vmatprep.subr.mxu0 0.0
    %888 = vmatpush1.msra.mxu0 0.0
    %889 = vmatprep.subr.mxu0 0.0
    %890 = vmatpush1.msra.mxu0 0.0
    %891 = vmatprep.subr.mxu0 0.0
    %892 = vmatpush1.msra.mxu0 0.0
    %893 = vmatprep.subr.mxu0 0.0
    %894 = vmatpush1.msra.mxu0 0.0
    %895 = vmatprep.subr.mxu0 0.0
    %896 = vmatpush1.msra.mxu0 0.0
    %897 = vmatprep.subr.mxu0 0.0
    %898 = vmatpush1.msra.mxu0 0.0
    %899 = vmatprep.subr.mxu0 0.0
    %900 = vmatpush1.msra.mxu0 0.0
    %901 = vmatprep.subr.mxu0 0.0
    %902 = vmatpush1.msra.mxu0 0.0
    %903 = vmatprep.subr.mxu0 0.0
    %904 = vmatpush1.msra.mxu0 0.0
    %905 = vmatprep.subr.mxu0 0.0
    %906 = vmatpush1.msra.mxu0 0.0
    %907 = vmatprep.mubr.f32.mxu0 0.0
    %908 = vmatmul.mubr.f32.gmra.mrb[0].mxu0 %v838
    %v909 = vpop.f32.mrb[0].mxu0
    %v910 = vadd.f32 0.0, %v909
    %v911 = vpop.f32.mrb[0].mxu0
    %912 = vmatprep.mubr.f32.mxu0 0.0
    %913 = vmatmul.mubr.f32.gmra.mrb[0].mxu0 %v841
    %v914 = vpop.f32.mrb[0].mxu0
    %v915 = vadd.f32 0.0, %v914
    %v916 = vpop.f32.mrb[0].mxu0
    %917 = vdwg.mxu0
    %v918 = vmax.f32 %v827, %v910
    %v919 = vmax.f32 %v832, %v915
    %v920 = vld [vmem:[#allocation7] sm:$0xff]
    %v921 = vld [vmem:[#allocation7 + $0x8] sm:$0xff]
    %v922 = vld [vmem:[#allocation7 + $0x10] sm:$0xff]
    %v923 = vld [vmem:[#allocation7 + $0x18] sm:$0xff]
    %v924 = vld [vmem:[#allocation7 + $0x20] sm:$0xff]
    %v925 = vld [vmem:[#allocation7 + $0x28] sm:$0xff]
    %v926 = vld [vmem:[#allocation7 + $0x30] sm:$0xff]
    %v927 = vld [vmem:[#allocation7 + $0x38] sm:$0xff]
    %v928 = vld [vmem:[#allocation7 + $0x40] sm:$0xff]
    %v929 = vld [vmem:[#allocation7 + $0x48] sm:$0xff]
    %v930 = vld [vmem:[#allocation7 + $0x50] sm:$0xff]
    %v931 = vld [vmem:[#allocation7 + $0x58] sm:$0xff]
    %v932 = vld [vmem:[#allocation7 + $0x60] sm:$0xff]
    %v933 = vld [vmem:[#allocation7 + $0x68] sm:$0xff]
    %v934 = vld [vmem:[#allocation7 + $0x70] sm:$0xff]
    %v935 = vld [vmem:[#allocation7 + $0x78] sm:$0xff]
    %936 = vmatprep.subr.mxu0 0.0
    %937 = vmatpush1.msra.mxu0 %v920
    %938 = vmatprep.subr.mxu0 0.0
    %939 = vmatpush1.msra.mxu0 %v921
    %940 = vmatprep.subr.mxu0 0.0
    %941 = vmatpush1.msra.mxu0 %v922
    %942 = vmatprep.subr.mxu0 0.0
    %943 = vmatpush1.msra.mxu0 %v923
    %944 = vmatprep.subr.mxu0 0.0
    %945 = vmatpush1.msra.mxu0 %v924
    %946 = vmatprep.subr.mxu0 0.0
    %947 = vmatpush1.msra.mxu0 %v925
    %948 = vmatprep.subr.mxu0 0.0
    %949 = vmatpush1.msra.mxu0 %v926
    %950 = vmatprep.subr.mxu0 0.0
    %951 = vmatpush1.msra.mxu0 %v927
    %952 = vmatprep.subr.mxu0 0.0
    %953 = vmatpush1.msra.mxu0 %v928
    %954 = vmatprep.subr.mxu0 0.0
    %955 = vmatpush1.msra.mxu0 %v929
    %956 = vmatprep.subr.mxu0 0.0
    %957 = vmatpush1.msra.mxu0 %v930
    %958 = vmatprep.subr.mxu0 0.0
    %959 = vmatpush1.msra.mxu0 %v931
    %960 = vmatprep.subr.mxu0 0.0
    %961 = vmatpush1.msra.mxu0 %v932
    %962 = vmatprep.subr.mxu0 0.0
    %963 = vmatpush1.msra.mxu0 %v933
    %964 = vmatprep.subr.mxu0 0.0
    %965 = vmatpush1.msra.mxu0 %v934
    %966 = vmatprep.subr.mxu0 0.0
    %967 = vmatpush1.msra.mxu0 %v935
    %968 = vmatprep.subr.mxu0 0.0
    %969 = vmatpush1.msra.mxu0 0.0
    %970 = vmatprep.subr.mxu0 0.0
    %971 = vmatpush1.msra.mxu0 0.0
    %972 = vmatprep.subr.mxu0 0.0
    %973 = vmatpush1.msra.mxu0 0.0
    %974 = vmatprep.subr.mxu0 0.0
    %975 = vmatpush1.msra.mxu0 0.0
    %976 = vmatprep.subr.mxu0 0.0
    %977 = vmatpush1.msra.mxu0 0.0
    %978 = vmatprep.subr.mxu0 0.0
    %979 = vmatpush1.msra.mxu0 0.0
    %980 = vmatprep.subr.mxu0 0.0
    %981 = vmatpush1.msra.mxu0 0.0
    %982 = vmatprep.subr.mxu0 0.0
    %983 = vmatpush1.msra.mxu0 0.0
    %984 = vmatprep.subr.mxu0 0.0
    %985 = vmatpush1.msra.mxu0 0.0
    %986 = vmatprep.subr.mxu0 0.0
    %987 = vmatpush1.msra.mxu0 0.0
    %988 = vmatprep.subr.mxu0 0.0
    %989 = vmatpush1.msra.mxu0 0.0
    %990 = vmatprep.subr.mxu0 0.0
    %991 = vmatpush1.msra.mxu0 0.0
    %992 = vmatprep.subr.mxu0 0.0
    %993 = vmatpush1.msra.mxu0 0.0
    %994 = vmatprep.subr.mxu0 0.0
    %995 = vmatpush1.msra.mxu0 0.0
    %996 = vmatprep.subr.mxu0 0.0
    %997 = vmatpush1.msra.mxu0 0.0
    %998 = vmatprep.subr.mxu0 0.0
    %999 = vmatpush1.msra.mxu0 0.0
    %1000 = vmatprep.mubr.f32.mxu0 0.0
    %1001 = vmatmul.mubr.f32.gmra.mrb[0].mxu0 %v918
    %v1002 = vpop.f32.mrb[0].mxu0
    %v1003 = vadd.f32 0.0, %v1002
    %v1004 = vpop.f32.mrb[0].mxu0
    %1005 = vmatprep.mubr.f32.mxu0 0.0
    %1006 = vmatmul.mubr.f32.gmra.mrb[0].mxu0 %v919
    %v1007 = vpop.f32.mrb[0].mxu0
    %v1008 = vadd.f32 0.0, %v1007
    %v1009 = vpop.f32.mrb[0].mxu0
    %1010 = vdwg.mxu0
    %v1011 = vld [vmem:[#allocation8] sm:$0xff]
    %v1012 = vld [vmem:[#allocation8 + $0x8] sm:$0xff]
    %v1013 = vld [vmem:[#allocation8 + $0x10] sm:$0xff]
    %v1014 = vld [vmem:[#allocation8 + $0x18] sm:$0xff]
    %v1015 = vld [vmem:[#allocation8 + $0x20] sm:$0xff]
    %v1016 = vld [vmem:[#allocation8 + $0x28] sm:$0xff]
    %v1017 = vld [vmem:[#allocation8 + $0x30] sm:$0xff]
    %v1018 = vld [vmem:[#allocation8 + $0x38] sm:$0xff]
    %v1019 = vld [vmem:[#allocation8 + $0x40] sm:$0xff]
    %v1020 = vld [vmem:[#allocation8 + $0x48] sm:$0xff]
    %v1021 = vld [vmem:[#allocation8 + $0x50] sm:$0xff]
    %v1022 = vld [vmem:[#allocation8 + $0x58] sm:$0xff]
    %v1023 = vld [vmem:[#allocation8 + $0x60] sm:$0xff]
    %v1024 = vld [vmem:[#allocation8 + $0x68] sm:$0xff]
    %v1025 = vld [vmem:[#allocation8 + $0x70] sm:$0xff]
    %v1026 = vld [vmem:[#allocation8 + $0x78] sm:$0xff]
    %1027 = vmatprep.subr.mxu0 0.0
    %1028 = vmatpush1.msra.mxu0 %v1011
    %1029 = vmatprep.subr.mxu0 0.0
    %1030 = vmatpush1.msra.mxu0 %v1012
    %1031 = vmatprep.subr.mxu0 0.0
    %1032 = vmatpush1.msra.mxu0 %v1013
    %1033 = vmatprep.subr.mxu0 0.0
    %1034 = vmatpush1.msra.mxu0 %v1014
    %1035 = vmatprep.subr.mxu0 0.0
    %1036 = vmatpush1.msra.mxu0 %v1015
    %1037 = vmatprep.subr.mxu0 0.0
    %1038 = vmatpush1.msra.mxu0 %v1016
    %1039 = vmatprep.subr.mxu0 0.0
    %1040 = vmatpush1.msra.mxu0 %v1017
    %1041 = vmatprep.subr.mxu0 0.0
    %1042 = vmatpush1.msra.mxu0 %v1018
    %1043 = vmatprep.subr.mxu0 0.0
    %1044 = vmatpush1.msra.mxu0 %v1019
    %1045 = vmatprep.subr.mxu0 0.0
    %1046 = vmatpush1.msra.mxu0 %v1020
    %1047 = vmatprep.subr.mxu0 0.0
    %1048 = vmatpush1.msra.mxu0 %v1021
    %1049 = vmatprep.subr.mxu0 0.0
    %1050 = vmatpush1.msra.mxu0 %v1022
    %1051 = vmatprep.subr.mxu0 0.0
    %1052 = vmatpush1.msra.mxu0 %v1023
    %1053 = vmatprep.subr.mxu0 0.0
    %1054 = vmatpush1.msra.mxu0 %v1024
    %1055 = vmatprep.subr.mxu0 0.0
    %1056 = vmatpush1.msra.mxu0 %v1025
    %1057 = vmatprep.subr.mxu0 0.0
    %1058 = vmatpush1.msra.mxu0 %v1026
    %1059 = vmatprep.subr.mxu0 0.0
    %1060 = vmatpush1.msra.mxu0 0.0
    %1061 = vmatprep.subr.mxu0 0.0
    %1062 = vmatpush1.msra.mxu0 0.0
    %1063 = vmatprep.subr.mxu0 0.0
    %1064 = vmatpush1.msra.mxu0 0.0
    %1065 = vmatprep.subr.mxu0 0.0
    %1066 = vmatpush1.msra.mxu0 0.0
    %1067 = vmatprep.subr.mxu0 0.0
    %1068 = vmatpush1.msra.mxu0 0.0
    %1069 = vmatprep.subr.mxu0 0.0
    %1070 = vmatpush1.msra.mxu0 0.0
    %1071 = vmatprep.subr.mxu0 0.0
    %1072 = vmatpush1.msra.mxu0 0.0
    %1073 = vmatprep.subr.mxu0 0.0
    %1074 = vmatpush1.msra.mxu0 0.0
    %1075 = vmatprep.subr.mxu0 0.0
    %1076 = vmatpush1.msra.mxu0 0.0
    %1077 = vmatprep.subr.mxu0 0.0
    %1078 = vmatpush1.msra.mxu0 0.0
    %1079 = vmatprep.subr.mxu0 0.0
    %1080 = vmatpush1.msra.mxu0 0.0
    %1081 = vmatprep.subr.mxu0 0.0
    %1082 = vmatpush1.msra.mxu0 0.0
    %1083 = vmatprep.subr.mxu0 0.0
    %1084 = vmatpush1.msra.mxu0 0.0
    %1085 = vmatprep.subr.mxu0 0.0
    %1086 = vmatpush1.msra.mxu0 0.0
    %1087 = vmatprep.subr.mxu0 0.0
    %1088 = vmatpush1.msra.mxu0 0.0
    %1089 = vmatprep.subr.mxu0 0.0
    %1090 = vmatpush1.msra.mxu0 0.0
    %1091 = vmatprep.mubr.f32.mxu0 0.0
    %1092 = vmatmul.mubr.f32.gmra.mrb[0].mxu0 %v918
    %v1093 = vpop.f32.mrb[0].mxu0
    %v1094 = vadd.f32 0.0, %v1093
    %v1095 = vpop.f32.mrb[0].mxu0
    %1096 = vmatprep.mubr.f32.mxu0 0.0
    %1097 = vmatmul.mubr.f32.gmra.mrb[0].mxu0 %v919
    %v1098 = vpop.f32.mrb[0].mxu0
    %v1099 = vadd.f32 0.0, %v1098
    %v1100 = vpop.f32.mrb[0].mxu0
    %1101 = vdwg.mxu0
    %v1102 = vmax.f32 %v1003, %v1094
    %v1103 = vmax.f32 %v1008, %v1099
    %s1104 = scalar_lea.vmem %s9, 128
    %v1105 = vld [vmem:[%s1104] sm:$0xff]
    %v1106 = vld [vmem:[%s1104 + $0x8] sm:$0xff]
    %v1107 = vld [vmem:[%s1104 + $0x10] sm:$0xff]
    %v1108 = vld [vmem:[%s1104 + $0x18] sm:$0xff]
    %v1109 = vld [vmem:[%s1104 + $0x20] sm:$0xff]
    %v1110 = vld [vmem:[%s1104 + $0x28] sm:$0xff]
    %v1111 = vld [vmem:[%s1104 + $0x30] sm:$0xff]
    %v1112 = vld [vmem:[%s1104 + $0x38] sm:$0xff]
    %v1113 = vld [vmem:[%s1104 + $0x40] sm:$0xff]
    %v1114 = vld [vmem:[%s1104 + $0x48] sm:$0xff]
    %v1115 = vld [vmem:[%s1104 + $0x50] sm:$0xff]
    %v1116 = vld [vmem:[%s1104 + $0x58] sm:$0xff]
    %v1117 = vld [vmem:[%s1104 + $0x60] sm:$0xff]
    %v1118 = vld [vmem:[%s1104 + $0x68] sm:$0xff]
    %v1119 = vld [vmem:[%s1104 + $0x70] sm:$0xff]
    %v1120 = vld [vmem:[%s1104 + $0x78] sm:$0xff]
    %v1121 = vld [vmem:[#allocation10] sm:$0xff]
    %v1122 = vld [vmem:[#allocation10 + $0x8] sm:$0xff]
    %vm1123 = vcmask 130048
    %v1125 = vsel %vm1123, %v1121, 0
    %v1128 = vsel %vm1123, %v1122, 0
    %1130 = vmatprep.subr.mxu0 0.0
    %1131 = vmatpush1.msra.mxu0 %v1102
    %1132 = vmatprep.subr.mxu0 0.0
    %1133 = vmatpush1.msra.mxu0 %v1103
    %1134 = vmatprep.subr.mxu0 0.0
    %1135 = vmatpush1.msra.mxu0 0.0
    %1136 = vmatprep.subr.mxu0 0.0
    %1137 = vmatpush1.msra.mxu0 0.0
    %1138 = vmatprep.subr.mxu0 0.0
    %1139 = vmatpush1.msra.mxu0 0.0
    %1140 = vmatprep.subr.mxu0 0.0
    %1141 = vmatpush1.msra.mxu0 0.0
    %1142 = vmatprep.subr.mxu0 0.0
    %1143 = vmatpush1.msra.mxu0 0.0
    %1144 = vmatprep.subr.mxu0 0.0
    %1145 = vmatpush1.msra.mxu0 0.0
    %1146 = vmatprep.subr.mxu0 0.0
    %1147 = vmatpush1.msra.mxu0 0.0
    %1148 = vmatprep.subr.mxu0 0.0
    %1149 = vmatpush1.msra.mxu0 0.0
    %1150 = vmatprep.subr.mxu0 0.0
    %1151 = vmatpush1.msra.mxu0 0.0
    %1152 = vmatprep.subr.mxu0 0.0
    %1153 = vmatpush1.msra.mxu0 0.0
    %1154 = vmatprep.subr.mxu0 0.0
    %1155 = vmatpush1.msra.mxu0 0.0
    %1156 = vmatprep.subr.mxu0 0.0
    %1157 = vmatpush1.msra.mxu0 0.0
    %1158 = vmatprep.subr.mxu0 0.0
    %1159 = vmatpush1.msra.mxu0 0.0
    %1160 = vmatprep.subr.mxu0 0.0
    %1161 = vmatpush1.msra.mxu0 0.0
    %1162 = vmatprep.subr.mxu0 0.0
    %1163 = vmatpush1.msra.mxu0 0.0
    %1164 = vmatprep.subr.mxu0 0.0
    %1165 = vmatpush1.msra.mxu0 0.0
    %1166 = vmatprep.subr.mxu0 0.0
    %1167 = vmatpush1.msra.mxu0 0.0
    %1168 = vmatprep.subr.mxu0 0.0
    %1169 = vmatpush1.msra.mxu0 0.0
    %1170 = vmatprep.subr.mxu0 0.0
    %1171 = vmatpush1.msra.mxu0 0.0
    %1172 = vmatprep.subr.mxu0 0.0
    %1173 = vmatpush1.msra.mxu0 0.0
    %1174 = vmatprep.subr.mxu0 0.0
    %1175 = vmatpush1.msra.mxu0 0.0
    %1176 = vmatprep.subr.mxu0 0.0
    %1177 = vmatpush1.msra.mxu0 0.0
    %1178 = vmatprep.subr.mxu0 0.0
    %1179 = vmatpush1.msra.mxu0 0.0
    %1180 = vmatprep.subr.mxu0 0.0
    %1181 = vmatpush1.msra.mxu0 0.0
    %1182 = vmatprep.subr.mxu0 0.0
    %1183 = vmatpush1.msra.mxu0 0.0
    %1184 = vmatprep.subr.mxu0 0.0
    %1185 = vmatpush1.msra.mxu0 0.0
    %1186 = vmatprep.subr.mxu0 0.0
    %1187 = vmatpush1.msra.mxu0 0.0
    %1188 = vmatprep.subr.mxu0 0.0
    %1189 = vmatpush1.msra.mxu0 0.0
    %1190 = vmatprep.subr.mxu0 0.0
    %1191 = vmatpush1.msra.mxu0 0.0
    %1192 = vmatprep.subr.mxu0 0.0
    %1193 = vmatpush1.msra.mxu0 0.0
    %1194 = vmatprep.mubr.f32.mxu0 0.0
    %1195 = vmatmul.mubr.f32.gmra.mrb[0].mxu0 %v1125
    %v1196 = vpop.f32.mrb[0].mxu0
    %v1197 = vadd.f32 0.0, %v1196
    %v1198 = vpop.f32.mrb[0].mxu0
    %1199 = vmatprep.mubr.f32.mxu0 0.0
    %1200 = vmatmul.mubr.f32.gmra.mrb[0].mxu0 %v1128
    %v1201 = vpop.f32.mrb[0].mxu0
    %v1202 = vadd.f32 0.0, %v1201
    %v1203 = vpop.f32.mrb[0].mxu0
    %1204 = vdwg.mxu0
    %v1205 = vld [vmem:[%s9] sm:$0xff]
    %v1206 = vld [vmem:[%s9 + $0x8] sm:$0xff]
    %v1207 = vld [vmem:[%s9 + $0x10] sm:$0xff]
    %v1208 = vld [vmem:[%s9 + $0x18] sm:$0xff]
    %v1209 = vld [vmem:[%s9 + $0x20] sm:$0xff]
    %v1210 = vld [vmem:[%s9 + $0x28] sm:$0xff]
    %v1211 = vld [vmem:[%s9 + $0x30] sm:$0xff]
    %v1212 = vld [vmem:[%s9 + $0x38] sm:$0xff]
    %v1213 = vld [vmem:[%s9 + $0x40] sm:$0xff]
    %v1214 = vld [vmem:[%s9 + $0x48] sm:$0xff]
    %v1215 = vld [vmem:[%s9 + $0x50] sm:$0xff]
    %v1216 = vld [vmem:[%s9 + $0x58] sm:$0xff]
    %v1217 = vld [vmem:[%s9 + $0x60] sm:$0xff]
    %v1218 = vld [vmem:[%s9 + $0x68] sm:$0xff]
    %v1219 = vld [vmem:[%s9 + $0x70] sm:$0xff]
    %v1220 = vld [vmem:[%s9 + $0x78] sm:$0xff]
    %1221 = vmatprep.subr.mxu0 0.0
    %1222 = vmatpush1.msra.mxu0 %v1205
    %1223 = vmatprep.subr.mxu0 0.0
    %1224 = vmatpush1.msra.mxu0 %v1206
    %1225 = vmatprep.subr.mxu0 0.0
    %1226 = vmatpush1.msra.mxu0 %v1207
    %1227 = vmatprep.subr.mxu0 0.0
    %1228 = vmatpush1.msra.mxu0 %v1208
    %1229 = vmatprep.subr.mxu0 0.0
    %1230 = vmatpush1.msra.mxu0 %v1209
    %1231 = vmatprep.subr.mxu0 0.0
    %1232 = vmatpush1.msra.mxu0 %v1210
    %1233 = vmatprep.subr.mxu0 0.0
    %1234 = vmatpush1.msra.mxu0 %v1211
    %1235 = vmatprep.subr.mxu0 0.0
    %1236 = vmatpush1.msra.mxu0 %v1212
    %1237 = vmatprep.subr.mxu0 0.0
    %1238 = vmatpush1.msra.mxu0 %v1213
    %1239 = vmatprep.subr.mxu0 0.0
    %1240 = vmatpush1.msra.mxu0 %v1214
    %1241 = vmatprep.subr.mxu0 0.0
    %1242 = vmatpush1.msra.mxu0 %v1215
    %1243 = vmatprep.subr.mxu0 0.0
    %1244 = vmatpush1.msra.mxu0 %v1216
    %1245 = vmatprep.subr.mxu0 0.0
    %1246 = vmatpush1.msra.mxu0 %v1217
    %1247 = vmatprep.subr.mxu0 0.0
    %1248 = vmatpush1.msra.mxu0 %v1218
    %1249 = vmatprep.subr.mxu0 0.0
    %1250 = vmatpush1.msra.mxu0 %v1219
    %1251 = vmatprep.subr.mxu0 0.0
    %1252 = vmatpush1.msra.mxu0 %v1220
    %1253 = vmatprep.subr.mxu0 0.0
    %1254 = vmatpush1.msra.mxu0 0.0
    %1255 = vmatprep.subr.mxu0 0.0
    %1256 = vmatpush1.msra.mxu0 0.0
    %1257 = vmatprep.subr.mxu0 0.0
    %1258 = vmatpush1.msra.mxu0 0.0
    %1259 = vmatprep.subr.mxu0 0.0
    %1260 = vmatpush1.msra.mxu0 0.0
    %1261 = vmatprep.subr.mxu0 0.0
    %1262 = vmatpush1.msra.mxu0 0.0
    %1263 = vmatprep.subr.mxu0 0.0
    %1264 = vmatpush1.msra.mxu0 0.0
    %1265 = vmatprep.subr.mxu0 0.0
    %1266 = vmatpush1.msra.mxu0 0.0
    %1267 = vmatprep.subr.mxu0 0.0
    %1268 = vmatpush1.msra.mxu0 0.0
    %1269 = vmatprep.subr.mxu0 0.0
    %1270 = vmatpush1.msra.mxu0 0.0
    %1271 = vmatprep.subr.mxu0 0.0
    %1272 = vmatpush1.msra.mxu0 0.0
    %1273 = vmatprep.subr.mxu0 0.0
    %1274 = vmatpush1.msra.mxu0 0.0
    %1275 = vmatprep.subr.mxu0 0.0
    %1276 = vmatpush1.msra.mxu0 0.0
    %1277 = vmatprep.subr.mxu0 0.0
    %1278 = vmatpush1.msra.mxu0 0.0
    %1279 = vmatprep.subr.mxu0 0.0
    %1280 = vmatpush1.msra.mxu0 0.0
    %1281 = vmatprep.subr.mxu0 0.0
    %1282 = vmatpush1.msra.mxu0 0.0
    %1283 = vmatprep.subr.mxu0 0.0
    %1284 = vmatpush1.msra.mxu0 0.0
    %1285 = vmatprep.mubr.f32.mxu0 0.0
    %1286 = vmatmul.mubr.f32.gmra.mrb[0].mxu0 %v1197
    %v1287 = vpop.f32.mrb[0].mxu0
    %v1288 = vadd.f32 0.0, %v1287
    %v1289 = vpop.f32.mrb[0].mxu0
    %1290 = vmatprep.mubr.f32.mxu0 0.0
    %1291 = vmatmul.mubr.f32.gmra.mrb[0].mxu0 %v1202
    %v1292 = vpop.f32.mrb[0].mxu0
    %v1293 = vadd.f32 0.0, %v1292
    %v1294 = vpop.f32.mrb[0].mxu0
    %1295 = vdwg.mxu0
    %1296 = vmatprep.subr.mxu0 0.0
    %1297 = vmatpush1.msra.mxu0 %v1105
    %1298 = vmatprep.subr.mxu0 0.0
    %1299 = vmatpush1.msra.mxu0 %v1106
    %1300 = vmatprep.subr.mxu0 0.0
    %1301 = vmatpush1.msra.mxu0 %v1107
    %1302 = vmatprep.subr.mxu0 0.0
    %1303 = vmatpush1.msra.mxu0 %v1108
    %1304 = vmatprep.subr.mxu0 0.0
    %1305 = vmatpush1.msra.mxu0 %v1109
    %1306 = vmatprep.subr.mxu0 0.0
    %1307 = vmatpush1.msra.mxu0 %v1110
    %1308 = vmatprep.subr.mxu0 0.0
    %1309 = vmatpush1.msra.mxu0 %v1111
    %1310 = vmatprep.subr.mxu0 0.0
    %1311 = vmatpush1.msra.mxu0 %v1112
    %1312 = vmatprep.subr.mxu0 0.0
    %1313 = vmatpush1.msra.mxu0 %v1113
    %1314 = vmatprep.subr.mxu0 0.0
    %1315 = vmatpush1.msra.mxu0 %v1114
    %1316 = vmatprep.subr.mxu0 0.0
    %1317 = vmatpush1.msra.mxu0 %v1115
    %1318 = vmatprep.subr.mxu0 0.0
    %1319 = vmatpush1.msra.mxu0 %v1116
    %1320 = vmatprep.subr.mxu0 0.0
    %1321 = vmatpush1.msra.mxu0 %v1117
    %1322 = vmatprep.subr.mxu0 0.0
    %1323 = vmatpush1.msra.mxu0 %v1118
    %1324 = vmatprep.subr.mxu0 0.0
    %1325 = vmatpush1.msra.mxu0 %v1119
    %1326 = vmatprep.subr.mxu0 0.0
    %1327 = vmatpush1.msra.mxu0 %v1120
    %1328 = vmatprep.subr.mxu0 0.0
    %1329 = vmatpush1.msra.mxu0 0.0
    %1330 = vmatprep.subr.mxu0 0.0
    %1331 = vmatpush1.msra.mxu0 0.0
    %1332 = vmatprep.subr.mxu0 0.0
    %1333 = vmatpush1.msra.mxu0 0.0
    %1334 = vmatprep.subr.mxu0 0.0
    %1335 = vmatpush1.msra.mxu0 0.0
    %1336 = vmatprep.subr.mxu0 0.0
    %1337 = vmatpush1.msra.mxu0 0.0
    %1338 = vmatprep.subr.mxu0 0.0
    %1339 = vmatpush1.msra.mxu0 0.0
    %1340 = vmatprep.subr.mxu0 0.0
    %1341 = vmatpush1.msra.mxu0 0.0
    %1342 = vmatprep.subr.mxu0 0.0
    %1343 = vmatpush1.msra.mxu0 0.0
    %1344 = vmatprep.subr.mxu0 0.0
    %1345 = vmatpush1.msra.mxu0 0.0
    %1346 = vmatprep.subr.mxu0 0.0
    %1347 = vmatpush1.msra.mxu0 0.0
    %1348 = vmatprep.subr.mxu0 0.0
    %1349 = vmatpush1.msra.mxu0 0.0
    %1350 = vmatprep.subr.mxu0 0.0
    %1351 = vmatpush1.msra.mxu0 0.0
    %1352 = vmatprep.subr.mxu0 0.0
    %1353 = vmatpush1.msra.mxu0 0.0
    %1354 = vmatprep.subr.mxu0 0.0
    %1355 = vmatpush1.msra.mxu0 0.0
    %1356 = vmatprep.subr.mxu0 0.0
    %1357 = vmatpush1.msra.mxu0 0.0
    %1358 = vmatprep.subr.mxu0 0.0
    %1359 = vmatpush1.msra.mxu0 0.0
    %1360 = vmatprep.mubr.f32.mxu0 0.0
    %1361 = vmatmul.mubr.f32.gmra.mrb[0].mxu0 %v1102
    %v1362 = vpop.f32.mrb[0].mxu0
    %v1363 = vadd.f32 %v1288, %v1362
    %v1364 = vpop.f32.mrb[0].mxu0
    %1365 = vmatprep.mubr.f32.mxu0 0.0
    %1366 = vmatmul.mubr.f32.gmra.mrb[0].mxu0 %v1103
    %v1367 = vpop.f32.mrb[0].mxu0
    %v1368 = vadd.f32 %v1293, %v1367
    %v1369 = vpop.f32.mrb[0].mxu0
    %1370 = vdwg.mxu0
    %v1371 = vld [vmem:[#allocation11] sm:$0xff]
    %v1372 = vld [vmem:[#allocation11 + $0x8] sm:$0xff]
    %v1374 = vsel %vm1123, %v1371, 0
    %v1377 = vsel %vm1123, %v1372, 0
    %1379 = vmatprep.subr.mxu0 0.0
    %1380 = vmatpush1.msra.mxu0 %v1102
    %1381 = vmatprep.subr.mxu0 0.0
    %1382 = vmatpush1.msra.mxu0 %v1103
    %1383 = vmatprep.subr.mxu0 0.0
    %1384 = vmatpush1.msra.mxu0 0.0
    %1385 = vmatprep.subr.mxu0 0.0
    %1386 = vmatpush1.msra.mxu0 0.0
    %1387 = vmatprep.subr.mxu0 0.0
    %1388 = vmatpush1.msra.mxu0 0.0
    %1389 = vmatprep.subr.mxu0 0.0
    %1390 = vmatpush1.msra.mxu0 0.0
    %1391 = vmatprep.subr.mxu0 0.0
    %1392 = vmatpush1.msra.mxu0 0.0
    %1393 = vmatprep.subr.mxu0 0.0
    %1394 = vmatpush1.msra.mxu0 0.0
    %1395 = vmatprep.subr.mxu0 0.0
    %1396 = vmatpush1.msra.mxu0 0.0
    %1397 = vmatprep.subr.mxu0 0.0
    %1398 = vmatpush1.msra.mxu0 0.0
    %1399 = vmatprep.subr.mxu0 0.0
    %1400 = vmatpush1.msra.mxu0 0.0
    %1401 = vmatprep.subr.mxu0 0.0
    %1402 = vmatpush1.msra.mxu0 0.0
    %1403 = vmatprep.subr.mxu0 0.0
    %1404 = vmatpush1.msra.mxu0 0.0
    %1405 = vmatprep.subr.mxu0 0.0
    %1406 = vmatpush1.msra.mxu0 0.0
    %1407 = vmatprep.subr.mxu0 0.0
    %1408 = vmatpush1.msra.mxu0 0.0
    %1409 = vmatprep.subr.mxu0 0.0
    %1410 = vmatpush1.msra.mxu0 0.0
    %1411 = vmatprep.subr.mxu0 0.0
    %1412 = vmatpush1.msra.mxu0 0.0
    %1413 = vmatprep.subr.mxu0 0.0
    %1414 = vmatpush1.msra.mxu0 0.0
    %1415 = vmatprep.subr.mxu0 0.0
    %1416 = vmatpush1.msra.mxu0 0.0
    %1417 = vmatprep.subr.mxu0 0.0
    %1418 = vmatpush1.msra.mxu0 0.0
    %1419 = vmatprep.subr.mxu0 0.0
    %1420 = vmatpush1.msra.mxu0 0.0
    %1421 = vmatprep.subr.mxu0 0.0
    %1422 = vmatpush1.msra.mxu0 0.0
    %1423 = vmatprep.subr.mxu0 0.0
    %1424 = vmatpush1.msra.mxu0 0.0
    %1425 = vmatprep.subr.mxu0 0.0
    %1426 = vmatpush1.msra.mxu0 0.0
    %1427 = vmatprep.subr.mxu0 0.0
    %1428 = vmatpush1.msra.mxu0 0.0
    %1429 = vmatprep.subr.mxu0 0.0
    %1430 = vmatpush1.msra.mxu0 0.0
    %1431 = vmatprep.subr.mxu0 0.0
    %1432 = vmatpush1.msra.mxu0 0.0
    %1433 = vmatprep.subr.mxu0 0.0
    %1434 = vmatpush1.msra.mxu0 0.0
    %1435 = vmatprep.subr.mxu0 0.0
    %1436 = vmatpush1.msra.mxu0 0.0
    %1437 = vmatprep.subr.mxu0 0.0
    %1438 = vmatpush1.msra.mxu0 0.0
    %1439 = vmatprep.subr.mxu0 0.0
    %1440 = vmatpush1.msra.mxu0 0.0
    %1441 = vmatprep.subr.mxu0 0.0
    %1442 = vmatpush1.msra.mxu0 0.0
    %1443 = vmatprep.mubr.f32.mxu0 0.0
    %1444 = vmatmul.mubr.f32.gmra.mrb[0].mxu0 %v1374
    %v1445 = vpop.f32.mrb[0].mxu0
    %v1446 = vadd.f32 0.0, %v1445
    %v1447 = vpop.f32.mrb[0].mxu0
    %1448 = vmatprep.mubr.f32.mxu0 0.0
    %1449 = vmatmul.mubr.f32.gmra.mrb[0].mxu0 %v1377
    %v1450 = vpop.f32.mrb[0].mxu0
    %v1451 = vadd.f32 0.0, %v1450
    %v1452 = vpop.f32.mrb[0].mxu0
    %1453 = vdwg.mxu0
    %s1454 = scalar_lea.vmem %s9, 256
    %v1455 = vld [vmem:[%s1454] sm:$0xff]
    %v1456 = vld [vmem:[%s1454 + $0x8] sm:$0xff]
    %v1457 = vld [vmem:[%s1454 + $0x10] sm:$0xff]
    %v1458 = vld [vmem:[%s1454 + $0x18] sm:$0xff]
    %v1459 = vld [vmem:[%s1454 + $0x20] sm:$0xff]
    %v1460 = vld [vmem:[%s1454 + $0x28] sm:$0xff]
    %v1461 = vld [vmem:[%s1454 + $0x30] sm:$0xff]
    %v1462 = vld [vmem:[%s1454 + $0x38] sm:$0xff]
    %v1463 = vld [vmem:[%s1454 + $0x40] sm:$0xff]
    %v1464 = vld [vmem:[%s1454 + $0x48] sm:$0xff]
    %v1465 = vld [vmem:[%s1454 + $0x50] sm:$0xff]
    %v1466 = vld [vmem:[%s1454 + $0x58] sm:$0xff]
    %v1467 = vld [vmem:[%s1454 + $0x60] sm:$0xff]
    %v1468 = vld [vmem:[%s1454 + $0x68] sm:$0xff]
    %v1469 = vld [vmem:[%s1454 + $0x70] sm:$0xff]
    %v1470 = vld [vmem:[%s1454 + $0x78] sm:$0xff]
    %1471 = vmatprep.subr.mxu0 0.0
    %1472 = vmatpush1.msra.mxu0 %v1455
    %1473 = vmatprep.subr.mxu0 0.0
    %1474 = vmatpush1.msra.mxu0 %v1456
    %1475 = vmatprep.subr.mxu0 0.0
    %1476 = vmatpush1.msra.mxu0 %v1457
    %1477 = vmatprep.subr.mxu0 0.0
    %1478 = vmatpush1.msra.mxu0 %v1458
    %1479 = vmatprep.subr.mxu0 0.0
    %1480 = vmatpush1.msra.mxu0 %v1459
    %1481 = vmatprep.subr.mxu0 0.0
    %1482 = vmatpush1.msra.mxu0 %v1460
    %1483 = vmatprep.subr.mxu0 0.0
    %1484 = vmatpush1.msra.mxu0 %v1461
    %1485 = vmatprep.subr.mxu0 0.0
    %1486 = vmatpush1.msra.mxu0 %v1462
    %1487 = vmatprep.subr.mxu0 0.0
    %1488 = vmatpush1.msra.mxu0 %v1463
    %1489 = vmatprep.subr.mxu0 0.0
    %1490 = vmatpush1.msra.mxu0 %v1464
    %1491 = vmatprep.subr.mxu0 0.0
    %1492 = vmatpush1.msra.mxu0 %v1465
    %1493 = vmatprep.subr.mxu0 0.0
    %1494 = vmatpush1.msra.mxu0 %v1466
    %1495 = vmatprep.subr.mxu0 0.0
    %1496 = vmatpush1.msra.mxu0 %v1467
    %1497 = vmatprep.subr.mxu0 0.0
    %1498 = vmatpush1.msra.mxu0 %v1468
    %1499 = vmatprep.subr.mxu0 0.0
    %1500 = vmatpush1.msra.mxu0 %v1469
    %1501 = vmatprep.subr.mxu0 0.0
    %1502 = vmatpush1.msra.mxu0 %v1470
    %1503 = vmatprep.subr.mxu0 0.0
    %1504 = vmatpush1.msra.mxu0 0.0
    %1505 = vmatprep.subr.mxu0 0.0
    %1506 = vmatpush1.msra.mxu0 0.0
    %1507 = vmatprep.subr.mxu0 0.0
    %1508 = vmatpush1.msra.mxu0 0.0
    %1509 = vmatprep.subr.mxu0 0.0
    %1510 = vmatpush1.msra.mxu0 0.0
    %1511 = vmatprep.subr.mxu0 0.0
    %1512 = vmatpush1.msra.mxu0 0.0
    %1513 = vmatprep.subr.mxu0 0.0
    %1514 = vmatpush1.msra.mxu0 0.0
    %1515 = vmatprep.subr.mxu0 0.0
    %1516 = vmatpush1.msra.mxu0 0.0
    %1517 = vmatprep.subr.mxu0 0.0
    %1518 = vmatpush1.msra.mxu0 0.0
    %1519 = vmatprep.subr.mxu0 0.0
    %1520 = vmatpush1.msra.mxu0 0.0
    %1521 = vmatprep.subr.mxu0 0.0
    %1522 = vmatpush1.msra.mxu0 0.0
    %1523 = vmatprep.subr.mxu0 0.0
    %1524 = vmatpush1.msra.mxu0 0.0
    %1525 = vmatprep.subr.mxu0 0.0
    %1526 = vmatpush1.msra.mxu0 0.0
    %1527 = vmatprep.subr.mxu0 0.0
    %1528 = vmatpush1.msra.mxu0 0.0
    %1529 = vmatprep.subr.mxu0 0.0
    %1530 = vmatpush1.msra.mxu0 0.0
    %1531 = vmatprep.subr.mxu0 0.0
    %1532 = vmatpush1.msra.mxu0 0.0
    %1533 = vmatprep.subr.mxu0 0.0
    %1534 = vmatpush1.msra.mxu0 0.0
    %1535 = vmatprep.mubr.f32.mxu0 0.0
    %1536 = vmatmul.mubr.f32.gmra.mrb[0].mxu0 %v1446
    %v1537 = vpop.f32.mrb[0].mxu0
    %v1538 = vadd.f32 0.0, %v1537
    %v1539 = vpop.f32.mrb[0].mxu0
    %1540 = vmatprep.mubr.f32.mxu0 0.0
    %1541 = vmatmul.mubr.f32.gmra.mrb[0].mxu0 %v1451
    %v1542 = vpop.f32.mrb[0].mxu0
    %v1543 = vadd.f32 0.0, %v1542
    %v1544 = vpop.f32.mrb[0].mxu0
    %1545 = vdwg.mxu0
    %v1546 = vadd.f32 %v1363, %v1538
    %v1547 = vadd.f32 %v1368, %v1543
    %v1548 = vld [vmem:[%s12] sm:$0x1]
    %v1550 = vlaneseq
    %v1551 = vshrl.u32 %v1550, 7
    %v1552 = vsub.s32 0, %v1551
    %v1553 = vrot.slane %v1548, %v1552
    %v1555 = vadd.f32 %v1546, %v1553
    %v1556 = vadd.f32 %v1547, %v1553
    %v1557 = vmax.f32 %v1555, 0.0
    %v1558 = vmax.f32 %v1556, 0.0
    %v1559 = vld [vmem:[%s13] sm:$0xff]
    %v1561 = vsel %vm1123, %v1559, 0
    %1563 = vmatprep.subr.mxu0 0.0
    %1564 = vmatpush1.msra.mxu0 %v1557
    %1565 = vmatprep.subr.mxu0 0.0
    %1566 = vmatpush1.msra.mxu0 %v1558
    %1567 = vmatprep.subr.mxu0 0.0
    %1568 = vmatpush1.msra.mxu0 0.0
    %1569 = vmatprep.subr.mxu0 0.0
    %1570 = vmatpush1.msra.mxu0 0.0
    %1571 = vmatprep.subr.mxu0 0.0
    %1572 = vmatpush1.msra.mxu0 0.0
    %1573 = vmatprep.subr.mxu0 0.0
    %1574 = vmatpush1.msra.mxu0 0.0
    %1575 = vmatprep.subr.mxu0 0.0
    %1576 = vmatpush1.msra.mxu0 0.0
    %1577 = vmatprep.subr.mxu0 0.0
    %1578 = vmatpush1.msra.mxu0 0.0
    %1579 = vmatprep.subr.mxu0 0.0
    %1580 = vmatpush1.msra.mxu0 0.0
    %1581 = vmatprep.subr.mxu0 0.0
    %1582 = vmatpush1.msra.mxu0 0.0
    %1583 = vmatprep.subr.mxu0 0.0
    %1584 = vmatpush1.msra.mxu0 0.0
    %1585 = vmatprep.subr.mxu0 0.0
    %1586 = vmatpush1.msra.mxu0 0.0
    %1587 = vmatprep.subr.mxu0 0.0
    %1588 = vmatpush1.msra.mxu0 0.0
    %1589 = vmatprep.subr.mxu0 0.0
    %1590 = vmatpush1.msra.mxu0 0.0
    %1591 = vmatprep.subr.mxu0 0.0
    %1592 = vmatpush1.msra.mxu0 0.0
    %1593 = vmatprep.subr.mxu0 0.0
    %1594 = vmatpush1.msra.mxu0 0.0
    %1595 = vmatprep.subr.mxu0 0.0
    %1596 = vmatpush1.msra.mxu0 0.0
    %1597 = vmatprep.subr.mxu0 0.0
    %1598 = vmatpush1.msra.mxu0 0.0
    %1599 = vmatprep.subr.mxu0 0.0
    %1600 = vmatpush1.msra.mxu0 0.0
    %1601 = vmatprep.subr.mxu0 0.0
    %1602 = vmatpush1.msra.mxu0 0.0
    %1603 = vmatprep.subr.mxu0 0.0
    %1604 = vmatpush1.msra.mxu0 0.0
    %1605 = vmatprep.subr.mxu0 0.0
    %1606 = vmatpush1.msra.mxu0 0.0
    %1607 = vmatprep.subr.mxu0 0.0
    %1608 = vmatpush1.msra.mxu0 0.0
    %1609 = vmatprep.subr.mxu0 0.0
    %1610 = vmatpush1.msra.mxu0 0.0
    %1611 = vmatprep.subr.mxu0 0.0
    %1612 = vmatpush1.msra.mxu0 0.0
    %1613 = vmatprep.subr.mxu0 0.0
    %1614 = vmatpush1.msra.mxu0 0.0
    %1615 = vmatprep.subr.mxu0 0.0
    %1616 = vmatpush1.msra.mxu0 0.0
    %1617 = vmatprep.subr.mxu0 0.0
    %1618 = vmatpush1.msra.mxu0 0.0
    %1619 = vmatprep.subr.mxu0 0.0
    %1620 = vmatpush1.msra.mxu0 0.0
    %1621 = vmatprep.subr.mxu0 0.0
    %1622 = vmatpush1.msra.mxu0 0.0
    %1623 = vmatprep.subr.mxu0 0.0
    %1624 = vmatpush1.msra.mxu0 0.0
    %1625 = vmatprep.subr.mxu0 0.0
    %1626 = vmatpush1.msra.mxu0 0.0
    %1627 = vmatprep.mubr.f32.mxu0 0.0
    %1628 = vmatmul.mubr.f32.gmra.mrb[0].mxu0 %v1561
    %v1629 = vpop.f32.mrb[0].mxu0
    %v1630 = vadd.f32 0.0, %v1629
    %v1631 = vpop.f32.mrb[0].mxu0
    %1632 = vdwg.mxu0
    %v1633 = vld [vmem:[%s14] sm:$0xff]
    %v1635 = vsel %vm1123, %v1633, 0
    %1637 = vmatprep.subr.mxu0 0.0
    %1638 = vmatpush1.msra.mxu0 %v1557
    %1639 = vmatprep.subr.mxu0 0.0
    %1640 = vmatpush1.msra.mxu0 %v1558
    %1641 = vmatprep.subr.mxu0 0.0
    %1642 = vmatpush1.msra.mxu0 0.0
    %1643 = vmatprep.subr.mxu0 0.0
    %1644 = vmatpush1.msra.mxu0 0.0
    %1645 = vmatprep.subr.mxu0 0.0
    %1646 = vmatpush1.msra.mxu0 0.0
    %1647 = vmatprep.subr.mxu0 0.0
    %1648 = vmatpush1.msra.mxu0 0.0
    %1649 = vmatprep.subr.mxu0 0.0
    %1650 = vmatpush1.msra.mxu0 0.0
    %1651 = vmatprep.subr.mxu0 0.0
    %1652 = vmatpush1.msra.mxu0 0.0
    %1653 = vmatprep.subr.mxu0 0.0
    %1654 = vmatpush1.msra.mxu0 0.0
    %1655 = vmatprep.subr.mxu0 0.0
    %1656 = vmatpush1.msra.mxu0 0.0
    %1657 = vmatprep.subr.mxu0 0.0
    %1658 = vmatpush1.msra.mxu0 0.0
    %1659 = vmatprep.subr.mxu0 0.0
    %1660 = vmatpush1.msra.mxu0 0.0
    %1661 = vmatprep.subr.mxu0 0.0
    %1662 = vmatpush1.msra.mxu0 0.0
    %1663 = vmatprep.subr.mxu0 0.0
    %1664 = vmatpush1.msra.mxu0 0.0
    %1665 = vmatprep.subr.mxu0 0.0
    %1666 = vmatpush1.msra.mxu0 0.0
    %1667 = vmatprep.subr.mxu0 0.0
    %1668 = vmatpush1.msra.mxu0 0.0
    %1669 = vmatprep.subr.mxu0 0.0
    %1670 = vmatpush1.msra.mxu0 0.0
    %1671 = vmatprep.subr.mxu0 0.0
    %1672 = vmatpush1.msra.mxu0 0.0
    %1673 = vmatprep.subr.mxu0 0.0
    %1674 = vmatpush1.msra.mxu0 0.0
    %1675 = vmatprep.subr.mxu0 0.0
    %1676 = vmatpush1.msra.mxu0 0.0
    %1677 = vmatprep.subr.mxu0 0.0
    %1678 = vmatpush1.msra.mxu0 0.0
    %1679 = vmatprep.subr.mxu0 0.0
    %1680 = vmatpush1.msra.mxu0 0.0
    %1681 = vmatprep.subr.mxu0 0.0
    %1682 = vmatpush1.msra.mxu0 0.0
    %1683 = vmatprep.subr.mxu0 0.0
    %1684 = vmatpush1.msra.mxu0 0.0
    %1685 = vmatprep.subr.mxu0 0.0
    %1686 = vmatpush1.msra.mxu0 0.0
    %1687 = vmatprep.subr.mxu0 0.0
    %1688 = vmatpush1.msra.mxu0 0.0
    %1689 = vmatprep.subr.mxu0 0.0
    %1690 = vmatpush1.msra.mxu0 0.0
    %1691 = vmatprep.subr.mxu0 0.0
    %1692 = vmatpush1.msra.mxu0 0.0
    %1693 = vmatprep.subr.mxu0 0.0
    %1694 = vmatpush1.msra.mxu0 0.0
    %1695 = vmatprep.subr.mxu0 0.0
    %1696 = vmatpush1.msra.mxu0 0.0
    %1697 = vmatprep.subr.mxu0 0.0
    %1698 = vmatpush1.msra.mxu0 0.0
    %1699 = vmatprep.subr.mxu0 0.0
    %1700 = vmatpush1.msra.mxu0 0.0
    %1701 = vmatprep.mubr.f32.mxu0 0.0
    %1702 = vmatmul.mubr.f32.gmra.mrb[0].mxu0 %v1635
    %v1703 = vpop.f32.mrb[0].mxu0
    %v1704 = vadd.f32 0.0, %v1703
    %v1705 = vpop.f32.mrb[0].mxu0
    %1706 = vdwg.mxu0
    %v1707 = vmax.f32 %v1630, %v1704
    %v1708 = vld [vmem:[#allocation13] sm:$0xff]
    %v1709 = vld [vmem:[#allocation13 + $0x8] sm:$0xff]
    %v1710 = vld [vmem:[#allocation13 + $0x10] sm:$0xff]
    %v1711 = vld [vmem:[#allocation13 + $0x18] sm:$0xff]
    %v1712 = vld [vmem:[#allocation13 + $0x20] sm:$0xff]
    %v1713 = vld [vmem:[#allocation13 + $0x28] sm:$0xff]
    %v1714 = vld [vmem:[#allocation13 + $0x30] sm:$0xff]
    %v1715 = vld [vmem:[#allocation13 + $0x38] sm:$0xff]
    %v1716 = vld [vmem:[#allocation13 + $0x40] sm:$0xff]
    %v1717 = vld [vmem:[#allocation13 + $0x48] sm:$0xff]
    %v1718 = vld [vmem:[#allocation13 + $0x50] sm:$0xff]
    %v1719 = vld [vmem:[#allocation13 + $0x58] sm:$0xff]
    %v1720 = vld [vmem:[#allocation13 + $0x60] sm:$0xff]
    %v1721 = vld [vmem:[#allocation13 + $0x68] sm:$0xff]
    %v1722 = vld [vmem:[#allocation13 + $0x70] sm:$0xff]
    %v1723 = vld [vmem:[#allocation13 + $0x78] sm:$0xff]
    %1724 = vmatprep.subr.mxu0 0.0
    %1725 = vmatpush1.msra.mxu0 %v1708
    %1726 = vmatprep.subr.mxu0 0.0
    %1727 = vmatpush1.msra.mxu0 %v1709
    %1728 = vmatprep.subr.mxu0 0.0
    %1729 = vmatpush1.msra.mxu0 %v1710
    %1730 = vmatprep.subr.mxu0 0.0
    %1731 = vmatpush1.msra.mxu0 %v1711
    %1732 = vmatprep.subr.mxu0 0.0
    %1733 = vmatpush1.msra.mxu0 %v1712
    %1734 = vmatprep.subr.mxu0 0.0
    %1735 = vmatpush1.msra.mxu0 %v1713
    %1736 = vmatprep.subr.mxu0 0.0
    %1737 = vmatpush1.msra.mxu0 %v1714
    %1738 = vmatprep.subr.mxu0 0.0
    %1739 = vmatpush1.msra.mxu0 %v1715
    %1740 = vmatprep.subr.mxu0 0.0
    %1741 = vmatpush1.msra.mxu0 %v1716
    %1742 = vmatprep.subr.mxu0 0.0
    %1743 = vmatpush1.msra.mxu0 %v1717
    %1744 = vmatprep.subr.mxu0 0.0
    %1745 = vmatpush1.msra.mxu0 %v1718
    %1746 = vmatprep.subr.mxu0 0.0
    %1747 = vmatpush1.msra.mxu0 %v1719
    %1748 = vmatprep.subr.mxu0 0.0
    %1749 = vmatpush1.msra.mxu0 %v1720
    %1750 = vmatprep.subr.mxu0 0.0
    %1751 = vmatpush1.msra.mxu0 %v1721
    %1752 = vmatprep.subr.mxu0 0.0
    %1753 = vmatpush1.msra.mxu0 %v1722
    %1754 = vmatprep.subr.mxu0 0.0
    %1755 = vmatpush1.msra.mxu0 %v1723
    %1756 = vmatprep.subr.mxu0 0.0
    %1757 = vmatpush1.msra.mxu0 0.0
    %1758 = vmatprep.subr.mxu0 0.0
    %1759 = vmatpush1.msra.mxu0 0.0
    %1760 = vmatprep.subr.mxu0 0.0
    %1761 = vmatpush1.msra.mxu0 0.0
    %1762 = vmatprep.subr.mxu0 0.0
    %1763 = vmatpush1.msra.mxu0 0.0
    %1764 = vmatprep.subr.mxu0 0.0
    %1765 = vmatpush1.msra.mxu0 0.0
    %1766 = vmatprep.subr.mxu0 0.0
    %1767 = vmatpush1.msra.mxu0 0.0
    %1768 = vmatprep.subr.mxu0 0.0
    %1769 = vmatpush1.msra.mxu0 0.0
    %1770 = vmatprep.subr.mxu0 0.0
    %1771 = vmatpush1.msra.mxu0 0.0
    %1772 = vmatprep.subr.mxu0 0.0
    %1773 = vmatpush1.msra.mxu0 0.0
    %1774 = vmatprep.subr.mxu0 0.0
    %1775 = vmatpush1.msra.mxu0 0.0
    %1776 = vmatprep.subr.mxu0 0.0
    %1777 = vmatpush1.msra.mxu0 0.0
    %1778 = vmatprep.subr.mxu0 0.0
    %1779 = vmatpush1.msra.mxu0 0.0
    %1780 = vmatprep.subr.mxu0 0.0
    %1781 = vmatpush1.msra.mxu0 0.0
    %1782 = vmatprep.subr.mxu0 0.0
    %1783 = vmatpush1.msra.mxu0 0.0
    %1784 = vmatprep.subr.mxu0 0.0
    %1785 = vmatpush1.msra.mxu0 0.0
    %1786 = vmatprep.subr.mxu0 0.0
    %1787 = vmatpush1.msra.mxu0 0.0
    %1788 = vmatprep.mubr.f32.mxu0 0.0
    %1789 = vmatmul.mubr.f32.gmra.mrb[0].mxu0 %v1707
    %v1790 = vpop.f32.mrb[0].mxu0
    %v1791 = vadd.f32 0.0, %v1790
    %v1792 = vpop.f32.mrb[0].mxu0
    %1793 = vdwg.mxu0
    %v1794 = vld [vmem:[#allocation14] sm:$0xff]
    %v1795 = vld [vmem:[#allocation14 + $0x8] sm:$0xff]
    %v1796 = vld [vmem:[#allocation14 + $0x10] sm:$0xff]
    %v1797 = vld [vmem:[#allocation14 + $0x18] sm:$0xff]
    %v1798 = vld [vmem:[#allocation14 + $0x20] sm:$0xff]
    %v1799 = vld [vmem:[#allocation14 + $0x28] sm:$0xff]
    %v1800 = vld [vmem:[#allocation14 + $0x30] sm:$0xff]
    %v1801 = vld [vmem:[#allocation14 + $0x38] sm:$0xff]
    %v1802 = vld [vmem:[#allocation14 + $0x40] sm:$0xff]
    %v1803 = vld [vmem:[#allocation14 + $0x48] sm:$0xff]
    %v1804 = vld [vmem:[#allocation14 + $0x50] sm:$0xff]
    %v1805 = vld [vmem:[#allocation14 + $0x58] sm:$0xff]
    %v1806 = vld [vmem:[#allocation14 + $0x60] sm:$0xff]
    %v1807 = vld [vmem:[#allocation14 + $0x68] sm:$0xff]
    %v1808 = vld [vmem:[#allocation14 + $0x70] sm:$0xff]
    %v1809 = vld [vmem:[#allocation14 + $0x78] sm:$0xff]
    %1810 = vmatprep.subr.mxu0 0.0
    %1811 = vmatpush1.msra.mxu0 %v1794
    %1812 = vmatprep.subr.mxu0 0.0
    %1813 = vmatpush1.msra.mxu0 %v1795
    %1814 = vmatprep.subr.mxu0 0.0
    %1815 = vmatpush1.msra.mxu0 %v1796
    %1816 = vmatprep.subr.mxu0 0.0
    %1817 = vmatpush1.msra.mxu0 %v1797
    %1818 = vmatprep.subr.mxu0 0.0
    %1819 = vmatpush1.msra.mxu0 %v1798
    %1820 = vmatprep.subr.mxu0 0.0
    %1821 = vmatpush1.msra.mxu0 %v1799
    %1822 = vmatprep.subr.mxu0 0.0
    %1823 = vmatpush1.msra.mxu0 %v1800
    %1824 = vmatprep.subr.mxu0 0.0
    %1825 = vmatpush1.msra.mxu0 %v1801
    %1826 = vmatprep.subr.mxu0 0.0
    %1827 = vmatpush1.msra.mxu0 %v1802
    %1828 = vmatprep.subr.mxu0 0.0
    %1829 = vmatpush1.msra.mxu0 %v1803
    %1830 = vmatprep.subr.mxu0 0.0
    %1831 = vmatpush1.msra.mxu0 %v1804
    %1832 = vmatprep.subr.mxu0 0.0
    %1833 = vmatpush1.msra.mxu0 %v1805
    %1834 = vmatprep.subr.mxu0 0.0
    %1835 = vmatpush1.msra.mxu0 %v1806
    %1836 = vmatprep.subr.mxu0 0.0
    %1837 = vmatpush1.msra.mxu0 %v1807
    %1838 = vmatprep.subr.mxu0 0.0
    %1839 = vmatpush1.msra.mxu0 %v1808
    %1840 = vmatprep.subr.mxu0 0.0
    %1841 = vmatpush1.msra.mxu0 %v1809
    %1842 = vmatprep.subr.mxu0 0.0
    %1843 = vmatpush1.msra.mxu0 0.0
    %1844 = vmatprep.subr.mxu0 0.0
    %1845 = vmatpush1.msra.mxu0 0.0
    %1846 = vmatprep.subr.mxu0 0.0
    %1847 = vmatpush1.msra.mxu0 0.0
    %1848 = vmatprep.subr.mxu0 0.0
    %1849 = vmatpush1.msra.mxu0 0.0
    %1850 = vmatprep.subr.mxu0 0.0
    %1851 = vmatpush1.msra.mxu0 0.0
    %1852 = vmatprep.subr.mxu0 0.0
    %1853 = vmatpush1.msra.mxu0 0.0
    %1854 = vmatprep.subr.mxu0 0.0
    %1855 = vmatpush1.msra.mxu0 0.0
    %1856 = vmatprep.subr.mxu0 0.0
    %1857 = vmatpush1.msra.mxu0 0.0
    %1858 = vmatprep.subr.mxu0 0.0
    %1859 = vmatpush1.msra.mxu0 0.0
    %1860 = vmatprep.subr.mxu0 0.0
    %1861 = vmatpush1.msra.mxu0 0.0
    %1862 = vmatprep.subr.mxu0 0.0
    %1863 = vmatpush1.msra.mxu0 0.0
    %1864 = vmatprep.subr.mxu0 0.0
    %1865 = vmatpush1.msra.mxu0 0.0
    %1866 = vmatprep.subr.mxu0 0.0
    %1867 = vmatpush1.msra.mxu0 0.0
    %1868 = vmatprep.subr.mxu0 0.0
    %1869 = vmatpush1.msra.mxu0 0.0
    %1870 = vmatprep.subr.mxu0 0.0
    %1871 = vmatpush1.msra.mxu0 0.0
    %1872 = vmatprep.subr.mxu0 0.0
    %1873 = vmatpush1.msra.mxu0 0.0
    %1874 = vmatprep.mubr.f32.mxu0 0.0
    %1875 = vmatmul.mubr.f32.gmra.mrb[0].mxu0 %v1707
    %v1876 = vpop.f32.mrb[0].mxu0
    %v1877 = vadd.f32 0.0, %v1876
    %v1878 = vpop.f32.mrb[0].mxu0
    %1879 = vdwg.mxu0
    %v1880 = vmax.f32 %v1791, %v1877
    %v1881 = vld [vmem:[%s17] sm:$0x3]
    %vm1882 = vcmask 64512
    %v1884 = vsel %vm1882, %v1881, 0
    %1886 = vmatprep.subr.mxu0 0.0
    %1887 = vmatpush1.msra.mxu0 %v1880
    %1888 = vmatprep.subr.mxu0 0.0
    %1889 = vmatpush1.msra.mxu0 0.0
    %1890 = vmatprep.subr.mxu0 0.0
    %1891 = vmatpush1.msra.mxu0 0.0
    %1892 = vmatprep.subr.mxu0 0.0
    %1893 = vmatpush1.msra.mxu0 0.0
    %1894 = vmatprep.subr.mxu0 0.0
    %1895 = vmatpush1.msra.mxu0 0.0
    %1896 = vmatprep.subr.mxu0 0.0
    %1897 = vmatpush1.msra.mxu0 0.0
    %1898 = vmatprep.subr.mxu0 0.0
    %1899 = vmatpush1.msra.mxu0 0.0
    %1900 = vmatprep.subr.mxu0 0.0
    %1901 = vmatpush1.msra.mxu0 0.0
    %1902 = vmatprep.subr.mxu0 0.0
    %1903 = vmatpush1.msra.mxu0 0.0
    %1904 = vmatprep.subr.mxu0 0.0
    %1905 = vmatpush1.msra.mxu0 0.0
    %1906 = vmatprep.subr.mxu0 0.0
    %1907 = vmatpush1.msra.mxu0 0.0
    %1908 = vmatprep.subr.mxu0 0.0
    %1909 = vmatpush1.msra.mxu0 0.0
    %1910 = vmatprep.subr.mxu0 0.0
    %1911 = vmatpush1.msra.mxu0 0.0
    %1912 = vmatprep.subr.mxu0 0.0
    %1913 = vmatpush1.msra.mxu0 0.0
    %1914 = vmatprep.subr.mxu0 0.0
    %1915 = vmatpush1.msra.mxu0 0.0
    %1916 = vmatprep.subr.mxu0 0.0
    %1917 = vmatpush1.msra.mxu0 0.0
    %1918 = vmatprep.subr.mxu0 0.0
    %1919 = vmatpush1.msra.mxu0 0.0
    %1920 = vmatprep.subr.mxu0 0.0
    %1921 = vmatpush1.msra.mxu0 0.0
    %1922 = vmatprep.subr.mxu0 0.0
    %1923 = vmatpush1.msra.mxu0 0.0
    %1924 = vmatprep.subr.mxu0 0.0
    %1925 = vmatpush1.msra.mxu0 0.0
    %1926 = vmatprep.subr.mxu0 0.0
    %1927 = vmatpush1.msra.mxu0 0.0
    %1928 = vmatprep.subr.mxu0 0.0
    %1929 = vmatpush1.msra.mxu0 0.0
    %1930 = vmatprep.subr.mxu0 0.0
    %1931 = vmatpush1.msra.mxu0 0.0
    %1932 = vmatprep.subr.mxu0 0.0
    %1933 = vmatpush1.msra.mxu0 0.0
    %1934 = vmatprep.subr.mxu0 0.0
    %1935 = vmatpush1.msra.mxu0 0.0
    %1936 = vmatprep.subr.mxu0 0.0
    %1937 = vmatpush1.msra.mxu0 0.0
    %1938 = vmatprep.subr.mxu0 0.0
    %1939 = vmatpush1.msra.mxu0 0.0
    %1940 = vmatprep.subr.mxu0 0.0
    %1941 = vmatpush1.msra.mxu0 0.0
    %1942 = vmatprep.subr.mxu0 0.0
    %1943 = vmatpush1.msra.mxu0 0.0
    %1944 = vmatprep.subr.mxu0 0.0
    %1945 = vmatpush1.msra.mxu0 0.0
    %1946 = vmatprep.subr.mxu0 0.0
    %1947 = vmatpush1.msra.mxu0 0.0
    %1948 = vmatprep.subr.mxu0 0.0
    %1949 = vmatpush1.msra.mxu0 0.0
    %1950 = vmatprep.mubr.f32.mxu0 0.0
    %1951 = vmatmul.mubr.f32.gmra.mrb[0].mxu0 %v1884
    %v1952 = vpop.f32.mrb[0].mxu0
    %v1953 = vadd.f32 0.0, %v1952
    %v1954 = vpop.f32.mrb[0].mxu0
    %1955 = vdwg.mxu0
    %s1956 = scalar_lea.vmem %s17, 2
    %v1957 = vld [vmem:[%s1956] sm:$0x3]
    %v1959 = vsel %vm1882, %v1957, 0
    %1961 = vmatprep.subr.mxu0 0.0
    %1962 = vmatpush1.msra.mxu0 %v1880
    %1963 = vmatprep.subr.mxu0 0.0
    %1964 = vmatpush1.msra.mxu0 0.0
    %1965 = vmatprep.subr.mxu0 0.0
    %1966 = vmatpush1.msra.mxu0 0.0
    %1967 = vmatprep.subr.mxu0 0.0
    %1968 = vmatpush1.msra.mxu0 0.0
    %1969 = vmatprep.subr.mxu0 0.0
    %1970 = vmatpush1.msra.mxu0 0.0
    %1971 = vmatprep.subr.mxu0 0.0
    %1972 = vmatpush1.msra.mxu0 0.0
    %1973 = vmatprep.subr.mxu0 0.0
    %1974 = vmatpush1.msra.mxu0 0.0
    %1975 = vmatprep.subr.mxu0 0.0
    %1976 = vmatpush1.msra.mxu0 0.0
    %1977 = vmatprep.subr.mxu0 0.0
    %1978 = vmatpush1.msra.mxu0 0.0
    %1979 = vmatprep.subr.mxu0 0.0
    %1980 = vmatpush1.msra.mxu0 0.0
    %1981 = vmatprep.subr.mxu0 0.0
    %1982 = vmatpush1.msra.mxu0 0.0
    %1983 = vmatprep.subr.mxu0 0.0
    %1984 = vmatpush1.msra.mxu0 0.0
    %1985 = vmatprep.subr.mxu0 0.0
    %1986 = vmatpush1.msra.mxu0 0.0
    %1987 = vmatprep.subr.mxu0 0.0
    %1988 = vmatpush1.msra.mxu0 0.0
    %1989 = vmatprep.subr.mxu0 0.0
    %1990 = vmatpush1.msra.mxu0 0.0
    %1991 = vmatprep.subr.mxu0 0.0
    %1992 = vmatpush1.msra.mxu0 0.0
    %1993 = vmatprep.subr.mxu0 0.0
    %1994 = vmatpush1.msra.mxu0 0.0
    %1995 = vmatprep.subr.mxu0 0.0
    %1996 = vmatpush1.msra.mxu0 0.0
    %1997 = vmatprep.subr.mxu0 0.0
    %1998 = vmatpush1.msra.mxu0 0.0
    %1999 = vmatprep.subr.mxu0 0.0
    %2000 = vmatpush1.msra.mxu0 0.0
    %2001 = vmatprep.subr.mxu0 0.0
    %2002 = vmatpush1.msra.mxu0 0.0
    %2003 = vmatprep.subr.mxu0 0.0
    %2004 = vmatpush1.msra.mxu0 0.0
    %2005 = vmatprep.subr.mxu0 0.0
    %2006 = vmatpush1.msra.mxu0 0.0
    %2007 = vmatprep.subr.mxu0 0.0
    %2008 = vmatpush1.msra.mxu0 0.0
    %2009 = vmatprep.subr.mxu0 0.0
    %2010 = vmatpush1.msra.mxu0 0.0
    %2011 = vmatprep.subr.mxu0 0.0
    %2012 = vmatpush1.msra.mxu0 0.0
    %2013 = vmatprep.subr.mxu0 0.0
    %2014 = vmatpush1.msra.mxu0 0.0
    %2015 = vmatprep.subr.mxu0 0.0
    %2016 = vmatpush1.msra.mxu0 0.0
    %2017 = vmatprep.subr.mxu0 0.0
    %2018 = vmatpush1.msra.mxu0 0.0
    %2019 = vmatprep.subr.mxu0 0.0
    %2020 = vmatpush1.msra.mxu0 0.0
    %2021 = vmatprep.subr.mxu0 0.0
    %2022 = vmatpush1.msra.mxu0 0.0
    %2023 = vmatprep.subr.mxu0 0.0
    %2024 = vmatpush1.msra.mxu0 0.0
    %2025 = vmatprep.mubr.f32.mxu0 0.0
    %2026 = vmatmul.mubr.f32.gmra.mrb[0].mxu0 %v1959
    %v2027 = vpop.f32.mrb[0].mxu0
    %v2028 = vadd.f32 0.0, %v2027
    %v2029 = vpop.f32.mrb[0].mxu0
    %2030 = vdwg.mxu0
    %s2031 = scalar_lea.vmem %s17, 4
    %v2032 = vld [vmem:[%s2031] sm:$0x3]
    %v2034 = vsel %vm1882, %v2032, 0
    %2036 = vmatprep.subr.mxu0 0.0
    %2037 = vmatpush1.msra.mxu0 %v1880
    %2038 = vmatprep.subr.mxu0 0.0
    %2039 = vmatpush1.msra.mxu0 0.0
    %2040 = vmatprep.subr.mxu0 0.0
    %2041 = vmatpush1.msra.mxu0 0.0
    %2042 = vmatprep.subr.mxu0 0.0
    %2043 = vmatpush1.msra.mxu0 0.0
    %2044 = vmatprep.subr.mxu0 0.0
    %2045 = vmatpush1.msra.mxu0 0.0
    %2046 = vmatprep.subr.mxu0 0.0
    %2047 = vmatpush1.msra.mxu0 0.0
    %2048 = vmatprep.subr.mxu0 0.0
    %2049 = vmatpush1.msra.mxu0 0.0
    %2050 = vmatprep.subr.mxu0 0.0
    %2051 = vmatpush1.msra.mxu0 0.0
    %2052 = vmatprep.subr.mxu0 0.0
    %2053 = vmatpush1.msra.mxu0 0.0
    %2054 = vmatprep.subr.mxu0 0.0
    %2055 = vmatpush1.msra.mxu0 0.0
    %2056 = vmatprep.subr.mxu0 0.0
    %2057 = vmatpush1.msra.mxu0 0.0
    %2058 = vmatprep.subr.mxu0 0.0
    %2059 = vmatpush1.msra.mxu0 0.0
    %2060 = vmatprep.subr.mxu0 0.0
    %2061 = vmatpush1.msra.mxu0 0.0
    %2062 = vmatprep.subr.mxu0 0.0
    %2063 = vmatpush1.msra.mxu0 0.0
    %2064 = vmatprep.subr.mxu0 0.0
    %2065 = vmatpush1.msra.mxu0 0.0
    %2066 = vmatprep.subr.mxu0 0.0
    %2067 = vmatpush1.msra.mxu0 0.0
    %2068 = vmatprep.subr.mxu0 0.0
    %2069 = vmatpush1.msra.mxu0 0.0
    %2070 = vmatprep.subr.mxu0 0.0
    %2071 = vmatpush1.msra.mxu0 0.0
    %2072 = vmatprep.subr.mxu0 0.0
    %2073 = vmatpush1.msra.mxu0 0.0
    %2074 = vmatprep.subr.mxu0 0.0
    %2075 = vmatpush1.msra.mxu0 0.0
    %2076 = vmatprep.subr.mxu0 0.0
    %2077 = vmatpush1.msra.mxu0 0.0
    %2078 = vmatprep.subr.mxu0 0.0
    %2079 = vmatpush1.msra.mxu0 0.0
    %2080 = vmatprep.subr.mxu0 0.0
    %2081 = vmatpush1.msra.mxu0 0.0
    %2082 = vmatprep.subr.mxu0 0.0
    %2083 = vmatpush1.msra.mxu0 0.0
    %2084 = vmatprep.subr.mxu0 0.0
    %2085 = vmatpush1.msra.mxu0 0.0
    %2086 = vmatprep.subr.mxu0 0.0
    %2087 = vmatpush1.msra.mxu0 0.0
    %2088 = vmatprep.subr.mxu0 0.0
    %2089 = vmatpush1.msra.mxu0 0.0
    %2090 = vmatprep.subr.mxu0 0.0
    %2091 = vmatpush1.msra.mxu0 0.0
    %2092 = vmatprep.subr.mxu0 0.0
    %2093 = vmatpush1.msra.mxu0 0.0
    %2094 = vmatprep.subr.mxu0 0.0
    %2095 = vmatpush1.msra.mxu0 0.0
    %2096 = vmatprep.subr.mxu0 0.0
    %2097 = vmatpush1.msra.mxu0 0.0
    %2098 = vmatprep.subr.mxu0 0.0
    %2099 = vmatpush1.msra.mxu0 0.0
    %2100 = vmatprep.mubr.f32.mxu0 0.0
    %2101 = vmatmul.mubr.f32.gmra.mrb[0].mxu0 %v2034
    %v2102 = vpop.f32.mrb[0].mxu0
    %v2103 = vadd.f32 0.0, %v2102
    %v2104 = vpop.f32.mrb[0].mxu0
    %2105 = vdwg.mxu0
    %s2106 = scalar_lea.vmem %s17, 6
    %v2107 = vld [vmem:[%s2106] sm:$0x3]
    %v2109 = vsel %vm1882, %v2107, 0
    %2111 = vmatprep.subr.mxu0 0.0
    %2112 = vmatpush1.msra.mxu0 %v1880
    %2113 = vmatprep.subr.mxu0 0.0
    %2114 = vmatpush1.msra.mxu0 0.0
    %2115 = vmatprep.subr.mxu0 0.0
    %2116 = vmatpush1.msra.mxu0 0.0
    %2117 = vmatprep.subr.mxu0 0.0
    %2118 = vmatpush1.msra.mxu0 0.0
    %2119 = vmatprep.subr.mxu0 0.0
    %2120 = vmatpush1.msra.mxu0 0.0
    %2121 = vmatprep.subr.mxu0 0.0
    %2122 = vmatpush1.msra.mxu0 0.0
    %2123 = vmatprep.subr.mxu0 0.0
    %2124 = vmatpush1.msra.mxu0 0.0
    %2125 = vmatprep.subr.mxu0 0.0
    %2126 = vmatpush1.msra.mxu0 0.0
    %2127 = vmatprep.subr.mxu0 0.0
    %2128 = vmatpush1.msra.mxu0 0.0
    %2129 = vmatprep.subr.mxu0 0.0
    %2130 = vmatpush1.msra.mxu0 0.0
    %2131 = vmatprep.subr.mxu0 0.0
    %2132 = vmatpush1.msra.mxu0 0.0
    %2133 = vmatprep.subr.mxu0 0.0
    %2134 = vmatpush1.msra.mxu0 0.0
    %2135 = vmatprep.subr.mxu0 0.0
    %2136 = vmatpush1.msra.mxu0 0.0
    %2137 = vmatprep.subr.mxu0 0.0
    %2138 = vmatpush1.msra.mxu0 0.0
    %2139 = vmatprep.subr.mxu0 0.0
    %2140 = vmatpush1.msra.mxu0 0.0
    %2141 = vmatprep.subr.mxu0 0.0
    %2142 = vmatpush1.msra.mxu0 0.0
    %2143 = vmatprep.subr.mxu0 0.0
    %2144 = vmatpush1.msra.mxu0 0.0
    %2145 = vmatprep.subr.mxu0 0.0
    %2146 = vmatpush1.msra.mxu0 0.0
    %2147 = vmatprep.subr.mxu0 0.0
    %2148 = vmatpush1.msra.mxu0 0.0
    %2149 = vmatprep.subr.mxu0 0.0
    %2150 = vmatpush1.msra.mxu0 0.0
    %2151 = vmatprep.subr.mxu0 0.0
    %2152 = vmatpush1.msra.mxu0 0.0
    %2153 = vmatprep.subr.mxu0 0.0
    %2154 = vmatpush1.msra.mxu0 0.0
    %2155 = vmatprep.subr.mxu0 0.0
    %2156 = vmatpush1.msra.mxu0 0.0
    %2157 = vmatprep.subr.mxu0 0.0
    %2158 = vmatpush1.msra.mxu0 0.0
    %2159 = vmatprep.subr.mxu0 0.0
    %2160 = vmatpush1.msra.mxu0 0.0
    %2161 = vmatprep.subr.mxu0 0.0
    %2162 = vmatpush1.msra.mxu0 0.0
    %2163 = vmatprep.subr.mxu0 0.0
    %2164 = vmatpush1.msra.mxu0 0.0
    %2165 = vmatprep.subr.mxu0 0.0
    %2166 = vmatpush1.msra.mxu0 0.0
    %2167 = vmatprep.subr.mxu0 0.0
    %2168 = vmatpush1.msra.mxu0 0.0
    %2169 = vmatprep.subr.mxu0 0.0
    %2170 = vmatpush1.msra.mxu0 0.0
    %2171 = vmatprep.subr.mxu0 0.0
    %2172 = vmatpush1.msra.mxu0 0.0
    %2173 = vmatprep.subr.mxu0 0.0
    %2174 = vmatpush1.msra.mxu0 0.0
    %2175 = vmatprep.mubr.f32.mxu0 0.0
    %2176 = vmatmul.mubr.f32.gmra.mrb[0].mxu0 %v2109
    %v2177 = vpop.f32.mrb[0].mxu0
    %v2178 = vadd.f32 0.0, %v2177
    %v2179 = vpop.f32.mrb[0].mxu0
    %2180 = vdwg.mxu0
    %v2181 = vld [vmem:[#allocation16] sm:$0xff]
    %v2182 = vld [vmem:[#allocation16 + $0x8] sm:$0xff]
    %v2183 = vld [vmem:[#allocation16 + $0x10] sm:$0xff]
    %v2184 = vld [vmem:[#allocation16 + $0x18] sm:$0xff]
    %v2185 = vld [vmem:[#allocation16 + $0x20] sm:$0xff]
    %v2186 = vld [vmem:[#allocation16 + $0x28] sm:$0xff]
    %v2187 = vld [vmem:[#allocation16 + $0x30] sm:$0xff]
    %v2188 = vld [vmem:[#allocation16 + $0x38] sm:$0xff]
    %v2189 = vld [vmem:[#allocation16 + $0x40] sm:$0xff]
    %v2190 = vld [vmem:[#allocation16 + $0x48] sm:$0xff]
    %v2191 = vld [vmem:[#allocation16 + $0x50] sm:$0xff]
    %v2192 = vld [vmem:[#allocation16 + $0x58] sm:$0xff]
    %v2193 = vld [vmem:[#allocation16 + $0x60] sm:$0xff]
    %v2194 = vld [vmem:[#allocation16 + $0x68] sm:$0xff]
    %v2195 = vld [vmem:[#allocation16 + $0x70] sm:$0xff]
    %v2196 = vld [vmem:[#allocation16 + $0x78] sm:$0xff]
    %v2197 = vld [vmem:[#allocation16 + $0x80] sm:$0xff]
    %v2198 = vld [vmem:[#allocation16 + $0x88] sm:$0xff]
    %v2199 = vld [vmem:[#allocation16 + $0x90] sm:$0xff]
    %v2200 = vld [vmem:[#allocation16 + $0x98] sm:$0xff]
    %v2201 = vld [vmem:[#allocation16 + $0xa0] sm:$0xff]
    %v2202 = vld [vmem:[#allocation16 + $0xa8] sm:$0xff]
    %v2203 = vld [vmem:[#allocation16 + $0xb0] sm:$0xff]
    %v2204 = vld [vmem:[#allocation16 + $0xb8] sm:$0xff]
    %v2205 = vld [vmem:[#allocation16 + $0xc0] sm:$0xff]
    %v2206 = vld [vmem:[#allocation16 + $0xc8] sm:$0xff]
    %v2207 = vld [vmem:[#allocation16 + $0xd0] sm:$0xff]
    %v2208 = vld [vmem:[#allocation16 + $0xd8] sm:$0xff]
    %v2209 = vld [vmem:[#allocation16 + $0xe0] sm:$0xff]
    %v2210 = vld [vmem:[#allocation16 + $0xe8] sm:$0xff]
    %v2211 = vld [vmem:[#allocation16 + $0xf0] sm:$0xff]
    %v2212 = vld [vmem:[#allocation16 + $0xf8] sm:$0xff]
    %v2213 = vld [vmem:[#allocation16 + $0x100] sm:$0xff]
    %v2214 = vld [vmem:[#allocation16 + $0x108] sm:$0xff]
    %v2215 = vld [vmem:[#allocation16 + $0x110] sm:$0xff]
    %v2216 = vld [vmem:[#allocation16 + $0x118] sm:$0xff]
    %v2217 = vld [vmem:[#allocation16 + $0x120] sm:$0xff]
    %v2218 = vld [vmem:[#allocation16 + $0x128] sm:$0xff]
    %v2219 = vld [vmem:[#allocation16 + $0x130] sm:$0xff]
    %v2220 = vld [vmem:[#allocation16 + $0x138] sm:$0xff]
    %v2221 = vld [vmem:[#allocation16 + $0x140] sm:$0xff]
    %v2222 = vld [vmem:[#allocation16 + $0x148] sm:$0xff]
    %v2223 = vld [vmem:[#allocation16 + $0x150] sm:$0xff]
    %v2224 = vld [vmem:[#allocation16 + $0x158] sm:$0xff]
    %v2225 = vld [vmem:[#allocation16 + $0x160] sm:$0xff]
    %v2226 = vld [vmem:[#allocation16 + $0x168] sm:$0xff]
    %v2227 = vld [vmem:[#allocation16 + $0x170] sm:$0xff]
    %v2228 = vld [vmem:[#allocation16 + $0x178] sm:$0xff]
    %v2229 = vld [vmem:[#allocation16 + $0x180] sm:$0xff]
    %v2230 = vld [vmem:[#allocation16 + $0x188] sm:$0xff]
    %v2231 = vld [vmem:[#allocation16 + $0x190] sm:$0xff]
    %v2232 = vld [vmem:[#allocation16 + $0x198] sm:$0xff]
    %v2233 = vld [vmem:[#allocation16 + $0x1a0] sm:$0xff]
    %v2234 = vld [vmem:[#allocation16 + $0x1a8] sm:$0xff]
    %v2235 = vld [vmem:[#allocation16 + $0x1b0] sm:$0xff]
    %v2236 = vld [vmem:[#allocation16 + $0x1b8] sm:$0xff]
    %v2237 = vld [vmem:[#allocation16 + $0x1c0] sm:$0xff]
    %v2238 = vld [vmem:[#allocation16 + $0x1c8] sm:$0xff]
    %v2239 = vld [vmem:[#allocation16 + $0x1d0] sm:$0xff]
    %v2240 = vld [vmem:[#allocation16 + $0x1d8] sm:$0xff]
    %v2241 = vld [vmem:[#allocation16 + $0x1e0] sm:$0xff]
    %v2242 = vld [vmem:[#allocation16 + $0x1e8] sm:$0xff]
    %v2243 = vld [vmem:[#allocation16 + $0x1f0] sm:$0xff]
    %v2244 = vld [vmem:[#allocation16 + $0x1f8] sm:$0xff]
    %v2245 = vld [vmem:[#allocation16 + $0x200] sm:$0xff]
    %v2246 = vld [vmem:[#allocation16 + $0x208] sm:$0xff]
    %v2247 = vld [vmem:[#allocation16 + $0x210] sm:$0xff]
    %v2248 = vld [vmem:[#allocation16 + $0x218] sm:$0xff]
    %v2249 = vld [vmem:[#allocation16 + $0x220] sm:$0xff]
    %v2250 = vld [vmem:[#allocation16 + $0x228] sm:$0xff]
    %v2251 = vld [vmem:[#allocation16 + $0x230] sm:$0xff]
    %v2252 = vld [vmem:[#allocation16 + $0x238] sm:$0xff]
    %v2253 = vld [vmem:[#allocation16 + $0x240] sm:$0xff]
    %v2254 = vld [vmem:[#allocation16 + $0x248] sm:$0xff]
    %v2255 = vld [vmem:[#allocation16 + $0x250] sm:$0xff]
    %v2256 = vld [vmem:[#allocation16 + $0x258] sm:$0xff]
    %v2257 = vld [vmem:[#allocation16 + $0x260] sm:$0xff]
    %v2258 = vld [vmem:[#allocation16 + $0x268] sm:$0xff]
    %v2259 = vld [vmem:[#allocation16 + $0x270] sm:$0xff]
    %v2260 = vld [vmem:[#allocation16 + $0x278] sm:$0xff]
    %v2261 = vld [vmem:[#allocation16 + $0x280] sm:$0xff]
    %v2262 = vld [vmem:[#allocation16 + $0x288] sm:$0xff]
    %v2263 = vld [vmem:[#allocation16 + $0x290] sm:$0xff]
    %v2264 = vld [vmem:[#allocation16 + $0x298] sm:$0xff]
    %v2265 = vld [vmem:[#allocation16 + $0x2a0] sm:$0xff]
    %v2266 = vld [vmem:[#allocation16 + $0x2a8] sm:$0xff]
    %v2267 = vld [vmem:[#allocation16 + $0x2b0] sm:$0xff]
    %v2268 = vld [vmem:[#allocation16 + $0x2b8] sm:$0xff]
    %v2269 = vld [vmem:[#allocation16 + $0x2c0] sm:$0xff]
    %v2270 = vld [vmem:[#allocation16 + $0x2c8] sm:$0xff]
    %v2271 = vld [vmem:[#allocation16 + $0x2d0] sm:$0xff]
    %v2272 = vld [vmem:[#allocation16 + $0x2d8] sm:$0xff]
    %v2273 = vld [vmem:[#allocation16 + $0x2e0] sm:$0xff]
    %v2274 = vld [vmem:[#allocation16 + $0x2e8] sm:$0xff]
    %v2275 = vld [vmem:[#allocation16 + $0x2f0] sm:$0xff]
    %v2276 = vld [vmem:[#allocation16 + $0x2f8] sm:$0xff]
    %v2277 = vld [vmem:[#allocation16 + $0x300] sm:$0xff]
    %v2278 = vld [vmem:[#allocation16 + $0x308] sm:$0xff]
    %v2279 = vld [vmem:[#allocation16 + $0x310] sm:$0xff]
    %v2280 = vld [vmem:[#allocation16 + $0x318] sm:$0xff]
    %v2281 = vld [vmem:[#allocation16 + $0x320] sm:$0xff]
    %v2282 = vld [vmem:[#allocation16 + $0x328] sm:$0xff]
    %v2283 = vld [vmem:[#allocation16 + $0x330] sm:$0xff]
    %v2284 = vld [vmem:[#allocation16 + $0x338] sm:$0xff]
    %v2285 = vld [vmem:[#allocation16 + $0x340] sm:$0xff]
    %v2286 = vld [vmem:[#allocation16 + $0x348] sm:$0xff]
    %v2287 = vld [vmem:[#allocation16 + $0x350] sm:$0xff]
    %v2288 = vld [vmem:[#allocation16 + $0x358] sm:$0xff]
    %v2289 = vld [vmem:[#allocation16 + $0x360] sm:$0xff]
    %v2290 = vld [vmem:[#allocation16 + $0x368] sm:$0xff]
    %v2291 = vld [vmem:[#allocation16 + $0x370] sm:$0xff]
    %v2292 = vld [vmem:[#allocation16 + $0x378] sm:$0xff]
    %v2293 = vld [vmem:[#allocation16 + $0x380] sm:$0xff]
    %v2294 = vld [vmem:[#allocation16 + $0x388] sm:$0xff]
    %v2295 = vld [vmem:[#allocation16 + $0x390] sm:$0xff]
    %v2296 = vld [vmem:[#allocation16 + $0x398] sm:$0xff]
    %v2297 = vld [vmem:[#allocation16 + $0x3a0] sm:$0xff]
    %v2298 = vld [vmem:[#allocation16 + $0x3a8] sm:$0xff]
    %v2299 = vld [vmem:[#allocation16 + $0x3b0] sm:$0xff]
    %v2300 = vld [vmem:[#allocation16 + $0x3b8] sm:$0xff]
    %v2301 = vld [vmem:[#allocation16 + $0x3c0] sm:$0xff]
    %v2302 = vld [vmem:[#allocation16 + $0x3c8] sm:$0xff]
    %v2303 = vld [vmem:[#allocation16 + $0x3d0] sm:$0xff]
    %v2304 = vld [vmem:[#allocation16 + $0x3d8] sm:$0xff]
    %v2305 = vld [vmem:[#allocation16 + $0x3e0] sm:$0xff]
    %v2306 = vld [vmem:[#allocation16 + $0x3e8] sm:$0xff]
    %v2307 = vld [vmem:[#allocation16 + $0x3f0] sm:$0xff]
    %v2308 = vld [vmem:[#allocation16 + $0x3f8] sm:$0xff]
    %v2309 = vld [vmem:[%s19] sm:$0x3]
    %v2311 = vlaneseq
    %v2312 = vshrl.u32 %v2311, 7
    %v2313 = vsub.s32 0, %v2312
    %v2314 = vrot.slane %v2309, %v2313
    %v2315 = vlaneseq
    %v2316 = vshrl.u32 %v2315, 7
    %v2317 = vsub.s32 1, %v2316
    %v2318 = vrot.slane %v2309, %v2317
    %2321 = vmatprep.subr.mxu0 %v2182
    %2322 = vmatpush1.msra.mxu0 %v2181
    %2323 = vmatprep.subr.mxu0 %v2184
    %2324 = vmatpush1.msra.mxu0 %v2183
    %2325 = vmatprep.subr.mxu0 %v2186
    %2326 = vmatpush1.msra.mxu0 %v2185
    %2327 = vmatprep.subr.mxu0 %v2188
    %2328 = vmatpush1.msra.mxu0 %v2187
    %2329 = vmatprep.subr.mxu0 %v2190
    %2330 = vmatpush1.msra.mxu0 %v2189
    %2331 = vmatprep.subr.mxu0 %v2192
    %2332 = vmatpush1.msra.mxu0 %v2191
    %2333 = vmatprep.subr.mxu0 %v2194
    %2334 = vmatpush1.msra.mxu0 %v2193
    %2335 = vmatprep.subr.mxu0 %v2196
    %2336 = vmatpush1.msra.mxu0 %v2195
    %2337 = vmatprep.subr.mxu0 %v2198
    %2338 = vmatpush1.msra.mxu0 %v2197
    %2339 = vmatprep.subr.mxu0 %v2200
    %2340 = vmatpush1.msra.mxu0 %v2199
    %2341 = vmatprep.subr.mxu0 %v2202
    %2342 = vmatpush1.msra.mxu0 %v2201
    %2343 = vmatprep.subr.mxu0 %v2204
    %2344 = vmatpush1.msra.mxu0 %v2203
    %2345 = vmatprep.subr.mxu0 %v2206
    %2346 = vmatpush1.msra.mxu0 %v2205
    %2347 = vmatprep.subr.mxu0 %v2208
    %2348 = vmatpush1.msra.mxu0 %v2207
    %2349 = vmatprep.subr.mxu0 %v2210
    %2350 = vmatpush1.msra.mxu0 %v2209
    %2351 = vmatprep.subr.mxu0 %v2212
    %2352 = vmatpush1.msra.mxu0 %v2211
    %2353 = vmatprep.subr.mxu0 %v2214
    %2354 = vmatpush1.msra.mxu0 %v2213
    %2355 = vmatprep.subr.mxu0 %v2216
    %2356 = vmatpush1.msra.mxu0 %v2215
    %2357 = vmatprep.subr.mxu0 %v2218
    %2358 = vmatpush1.msra.mxu0 %v2217
    %2359 = vmatprep.subr.mxu0 %v2220
    %2360 = vmatpush1.msra.mxu0 %v2219
    %2361 = vmatprep.subr.mxu0 %v2222
    %2362 = vmatpush1.msra.mxu0 %v2221
    %2363 = vmatprep.subr.mxu0 %v2224
    %2364 = vmatpush1.msra.mxu0 %v2223
    %2365 = vmatprep.subr.mxu0 %v2226
    %2366 = vmatpush1.msra.mxu0 %v2225
    %2367 = vmatprep.subr.mxu0 %v2228
    %2368 = vmatpush1.msra.mxu0 %v2227
    %2369 = vmatprep.subr.mxu0 %v2230
    %2370 = vmatpush1.msra.mxu0 %v2229
    %2371 = vmatprep.subr.mxu0 %v2232
    %2372 = vmatpush1.msra.mxu0 %v2231
    %2373 = vmatprep.subr.mxu0 %v2234
    %2374 = vmatpush1.msra.mxu0 %v2233
    %2375 = vmatprep.subr.mxu0 %v2236
    %2376 = vmatpush1.msra.mxu0 %v2235
    %2377 = vmatprep.subr.mxu0 %v2238
    %2378 = vmatpush1.msra.mxu0 %v2237
    %2379 = vmatprep.subr.mxu0 %v2240
    %2380 = vmatpush1.msra.mxu0 %v2239
    %2381 = vmatprep.subr.mxu0 %v2242
    %2382 = vmatpush1.msra.mxu0 %v2241
    %2383 = vmatprep.subr.mxu0 %v2244
    %2384 = vmatpush1.msra.mxu0 %v2243
    %2385 = vmatprep.mubr.f32.mxu0 %v2028
    %2386 = vmatmul.mubr.f32.gmra.mrb[0].mxu0 %v1953
    %v2387 = vpop.f32.mrb[0].mxu0
    %v2388 = vadd.f32 %v2314, %v2387
    %v2389 = vpop.f32.mrb[0].mxu0
    %v2390 = vadd.f32 %v2318, %v2389
    %2391 = vdwg.mxu0
    %2392 = vmatprep.subr.mxu0 %v2246
    %2393 = vmatpush1.msra.mxu0 %v2245
    %2394 = vmatprep.subr.mxu0 %v2248
    %2395 = vmatpush1.msra.mxu0 %v2247
    %2396 = vmatprep.subr.mxu0 %v2250
    %2397 = vmatpush1.msra.mxu0 %v2249
    %2398 = vmatprep.subr.mxu0 %v2252
    %2399 = vmatpush1.msra.mxu0 %v2251
    %2400 = vmatprep.subr.mxu0 %v2254
    %2401 = vmatpush1.msra.mxu0 %v2253
    %2402 = vmatprep.subr.mxu0 %v2256
    %2403 = vmatpush1.msra.mxu0 %v2255
    %2404 = vmatprep.subr.mxu0 %v2258
    %2405 = vmatpush1.msra.mxu0 %v2257
    %2406 = vmatprep.subr.mxu0 %v2260
    %2407 = vmatpush1.msra.mxu0 %v2259
    %2408 = vmatprep.subr.mxu0 %v2262
    %2409 = vmatpush1.msra.mxu0 %v2261
    %2410 = vmatprep.subr.mxu0 %v2264
    %2411 = vmatpush1.msra.mxu0 %v2263
    %2412 = vmatprep.subr.mxu0 %v2266
    %2413 = vmatpush1.msra.mxu0 %v2265
    %2414 = vmatprep.subr.mxu0 %v2268
    %2415 = vmatpush1.msra.mxu0 %v2267
    %2416 = vmatprep.subr.mxu0 %v2270
    %2417 = vmatpush1.msra.mxu0 %v2269
    %2418 = vmatprep.subr.mxu0 %v2272
    %2419 = vmatpush1.msra.mxu0 %v2271
    %2420 = vmatprep.subr.mxu0 %v2274
    %2421 = vmatpush1.msra.mxu0 %v2273
    %2422 = vmatprep.subr.mxu0 %v2276
    %2423 = vmatpush1.msra.mxu0 %v2275
    %2424 = vmatprep.subr.mxu0 %v2278
    %2425 = vmatpush1.msra.mxu0 %v2277
    %2426 = vmatprep.subr.mxu0 %v2280
    %2427 = vmatpush1.msra.mxu0 %v2279
    %2428 = vmatprep.subr.mxu0 %v2282
    %2429 = vmatpush1.msra.mxu0 %v2281
    %2430 = vmatprep.subr.mxu0 %v2284
    %2431 = vmatpush1.msra.mxu0 %v2283
    %2432 = vmatprep.subr.mxu0 %v2286
    %2433 = vmatpush1.msra.mxu0 %v2285
    %2434 = vmatprep.subr.mxu0 %v2288
    %2435 = vmatpush1.msra.mxu0 %v2287
    %2436 = vmatprep.subr.mxu0 %v2290
    %2437 = vmatpush1.msra.mxu0 %v2289
    %2438 = vmatprep.subr.mxu0 %v2292
    %2439 = vmatpush1.msra.mxu0 %v2291
    %2440 = vmatprep.subr.mxu0 %v2294
    %2441 = vmatpush1.msra.mxu0 %v2293
    %2442 = vmatprep.subr.mxu0 %v2296
    %2443 = vmatpush1.msra.mxu0 %v2295
    %2444 = vmatprep.subr.mxu0 %v2298
    %2445 = vmatpush1.msra.mxu0 %v2297
    %2446 = vmatprep.subr.mxu0 %v2300
    %2447 = vmatpush1.msra.mxu0 %v2299
    %2448 = vmatprep.subr.mxu0 %v2302
    %2449 = vmatpush1.msra.mxu0 %v2301
    %2450 = vmatprep.subr.mxu0 %v2304
    %2451 = vmatpush1.msra.mxu0 %v2303
    %2452 = vmatprep.subr.mxu0 %v2306
    %2453 = vmatpush1.msra.mxu0 %v2305
    %2454 = vmatprep.subr.mxu0 %v2308
    %2455 = vmatpush1.msra.mxu0 %v2307
    %2456 = vmatprep.mubr.f32.mxu0 %v2178
    %2457 = vmatmul.mubr.f32.gmra.mrb[0].mxu0 %v2103
    %v2458 = vpop.f32.mrb[0].mxu0
    %v2459 = vadd.f32 %v2388, %v2458
    %v2460 = vpop.f32.mrb[0].mxu0
    %v2461 = vadd.f32 %v2390, %v2460
    %2462 = vdwg.mxu0
    %v2463 = vmax.f32 %v2459, 0.0
    %v2464 = vmax.f32 %v2461, 0.0
    %v2465 = vld [vmem:[#allocation17] sm:$0xff]
    %v2466 = vld [vmem:[#allocation17 + $0x8] sm:$0xff]
    %v2467 = vld [vmem:[#allocation17 + $0x10] sm:$0xff]
    %v2468 = vld [vmem:[#allocation17 + $0x18] sm:$0xff]
    %v2469 = vld [vmem:[#allocation17 + $0x20] sm:$0xff]
    %v2470 = vld [vmem:[#allocation17 + $0x28] sm:$0xff]
    %v2471 = vld [vmem:[#allocation17 + $0x30] sm:$0xff]
    %v2472 = vld [vmem:[#allocation17 + $0x38] sm:$0xff]
    %v2473 = vld [vmem:[#allocation17 + $0x40] sm:$0xff]
    %v2474 = vld [vmem:[#allocation17 + $0x48] sm:$0xff]
    %v2475 = vld [vmem:[#allocation17 + $0x50] sm:$0xff]
    %v2476 = vld [vmem:[#allocation17 + $0x58] sm:$0xff]
    %v2477 = vld [vmem:[#allocation17 + $0x60] sm:$0xff]
    %v2478 = vld [vmem:[#allocation17 + $0x68] sm:$0xff]
    %v2479 = vld [vmem:[#allocation17 + $0x70] sm:$0xff]
    %v2480 = vld [vmem:[#allocation17 + $0x78] sm:$0xff]
    %v2481 = vld [vmem:[#allocation17 + $0x80] sm:$0xff]
    %v2482 = vld [vmem:[#allocation17 + $0x88] sm:$0xff]
    %v2483 = vld [vmem:[#allocation17 + $0x90] sm:$0xff]
    %v2484 = vld [vmem:[#allocation17 + $0x98] sm:$0xff]
    %v2485 = vld [vmem:[#allocation17 + $0xa0] sm:$0xff]
    %v2486 = vld [vmem:[#allocation17 + $0xa8] sm:$0xff]
    %v2487 = vld [vmem:[#allocation17 + $0xb0] sm:$0xff]
    %v2488 = vld [vmem:[#allocation17 + $0xb8] sm:$0xff]
    %v2489 = vld [vmem:[#allocation17 + $0xc0] sm:$0xff]
    %v2490 = vld [vmem:[#allocation17 + $0xc8] sm:$0xff]
    %v2491 = vld [vmem:[#allocation17 + $0xd0] sm:$0xff]
    %v2492 = vld [vmem:[#allocation17 + $0xd8] sm:$0xff]
    %v2493 = vld [vmem:[#allocation17 + $0xe0] sm:$0xff]
    %v2494 = vld [vmem:[#allocation17 + $0xe8] sm:$0xff]
    %v2495 = vld [vmem:[#allocation17 + $0xf0] sm:$0xff]
    %v2496 = vld [vmem:[#allocation17 + $0xf8] sm:$0xff]
    %v2497 = vld [vmem:[%s21] sm:$0x1]
    %v2499 = vlaneseq
    %v2500 = vshrl.u32 %v2499, 7
    %v2501 = vsub.s32 0, %v2500
    %v2502 = vrot.slane %v2497, %v2501
    %2504 = vmatprep.subr.mxu0 0.0
    %2505 = vmatpush1.msra.mxu0 %v2465
    %2506 = vmatprep.subr.mxu0 0.0
    %2507 = vmatpush1.msra.mxu0 %v2466
    %2508 = vmatprep.subr.mxu0 0.0
    %2509 = vmatpush1.msra.mxu0 %v2467
    %2510 = vmatprep.subr.mxu0 0.0
    %2511 = vmatpush1.msra.mxu0 %v2468
    %2512 = vmatprep.subr.mxu0 0.0
    %2513 = vmatpush1.msra.mxu0 %v2469
    %2514 = vmatprep.subr.mxu0 0.0
    %2515 = vmatpush1.msra.mxu0 %v2470
    %2516 = vmatprep.subr.mxu0 0.0
    %2517 = vmatpush1.msra.mxu0 %v2471
    %2518 = vmatprep.subr.mxu0 0.0
    %2519 = vmatpush1.msra.mxu0 %v2472
    %2520 = vmatprep.subr.mxu0 0.0
    %2521 = vmatpush1.msra.mxu0 %v2473
    %2522 = vmatprep.subr.mxu0 0.0
    %2523 = vmatpush1.msra.mxu0 %v2474
    %2524 = vmatprep.subr.mxu0 0.0
    %2525 = vmatpush1.msra.mxu0 %v2475
    %2526 = vmatprep.subr.mxu0 0.0
    %2527 = vmatpush1.msra.mxu0 %v2476
    %2528 = vmatprep.subr.mxu0 0.0
    %2529 = vmatpush1.msra.mxu0 %v2477
    %2530 = vmatprep.subr.mxu0 0.0
    %2531 = vmatpush1.msra.mxu0 %v2478
    %2532 = vmatprep.subr.mxu0 0.0
    %2533 = vmatpush1.msra.mxu0 %v2479
    %2534 = vmatprep.subr.mxu0 0.0
    %2535 = vmatpush1.msra.mxu0 %v2480
    %2536 = vmatprep.subr.mxu0 0.0
    %2537 = vmatpush1.msra.mxu0 %v2481
    %2538 = vmatprep.subr.mxu0 0.0
    %2539 = vmatpush1.msra.mxu0 %v2482
    %2540 = vmatprep.subr.mxu0 0.0
    %2541 = vmatpush1.msra.mxu0 %v2483
    %2542 = vmatprep.subr.mxu0 0.0
    %2543 = vmatpush1.msra.mxu0 %v2484
    %2544 = vmatprep.subr.mxu0 0.0
    %2545 = vmatpush1.msra.mxu0 %v2485
    %2546 = vmatprep.subr.mxu0 0.0
    %2547 = vmatpush1.msra.mxu0 %v2486
    %2548 = vmatprep.subr.mxu0 0.0
    %2549 = vmatpush1.msra.mxu0 %v2487
    %2550 = vmatprep.subr.mxu0 0.0
    %2551 = vmatpush1.msra.mxu0 %v2488
    %2552 = vmatprep.subr.mxu0 0.0
    %2553 = vmatpush1.msra.mxu0 %v2489
    %2554 = vmatprep.subr.mxu0 0.0
    %2555 = vmatpush1.msra.mxu0 %v2490
    %2556 = vmatprep.subr.mxu0 0.0
    %2557 = vmatpush1.msra.mxu0 %v2491
    %2558 = vmatprep.subr.mxu0 0.0
    %2559 = vmatpush1.msra.mxu0 %v2492
    %2560 = vmatprep.subr.mxu0 0.0
    %2561 = vmatpush1.msra.mxu0 %v2493
    %2562 = vmatprep.subr.mxu0 0.0
    %2563 = vmatpush1.msra.mxu0 %v2494
    %2564 = vmatprep.subr.mxu0 0.0
    %2565 = vmatpush1.msra.mxu0 %v2495
    %2566 = vmatprep.subr.mxu0 0.0
    %2567 = vmatpush1.msra.mxu0 %v2496
    %2568 = vmatprep.mubr.f32.mxu0 %v2464
    %2569 = vmatmul.mubr.f32.gmra.mrb[0].mxu0 %v2463
    %v2570 = vpop.f32.mrb[0].mxu0
    %v2571 = vadd.f32 %v2502, %v2570
    %v2572 = vpop.f32.mrb[0].mxu0
    %2573 = vdwg.mxu0
    %v2574 = vmax.f32 %v2571, 0.0
    %v2575 = vld [vmem:[%s22] sm:$0xff]
    %v2576 = vld [vmem:[%s22 + $0x8] sm:$0xff]
    %v2577 = vld [vmem:[%s22 + $0x10] sm:$0xff]
    %v2578 = vld [vmem:[%s22 + $0x18] sm:$0xff]
    %v2579 = vld [vmem:[%s22 + $0x20] sm:$0xff]
    %v2580 = vld [vmem:[%s22 + $0x28] sm:$0xff]
    %v2581 = vld [vmem:[%s22 + $0x30] sm:$0xff]
    %v2582 = vld [vmem:[%s22 + $0x38] sm:$0xff]
    %v2583 = vld [vmem:[%s22 + $0x40] sm:$0xff]
    %v2584 = vld [vmem:[%s22 + $0x48] sm:$0xff]
    %v2585 = vld [vmem:[%s22 + $0x50] sm:$0xff]
    %v2586 = vld [vmem:[%s22 + $0x58] sm:$0xff]
    %v2587 = vld [vmem:[%s22 + $0x60] sm:$0xff]
    %v2588 = vld [vmem:[%s22 + $0x68] sm:$0xff]
    %v2589 = vld [vmem:[%s22 + $0x70] sm:$0xff]
    %v2590 = vld [vmem:[%s22 + $0x78] sm:$0xff]
    %v2591 = vld [vmem:[%s23] sm:$0x1]
    %v2593 = vlaneseq
    %v2594 = vshrl.u32 %v2593, 7
    %v2595 = vsub.s32 0, %v2594
    %v2596 = vrot.slane %v2591, %v2595
    %2598 = vmatprep.subr.mxu0 0.0
    %2599 = vmatpush1.msra.mxu0 %v2575
    %2600 = vmatprep.subr.mxu0 0.0
    %2601 = vmatpush1.msra.mxu0 %v2576
    %2602 = vmatprep.subr.mxu0 0.0
    %2603 = vmatpush1.msra.mxu0 %v2577
    %2604 = vmatprep.subr.mxu0 0.0
    %2605 = vmatpush1.msra.mxu0 %v2578
    %2606 = vmatprep.subr.mxu0 0.0
    %2607 = vmatpush1.msra.mxu0 %v2579
    %2608 = vmatprep.subr.mxu0 0.0
    %2609 = vmatpush1.msra.mxu0 %v2580
    %2610 = vmatprep.subr.mxu0 0.0
    %2611 = vmatpush1.msra.mxu0 %v2581
    %2612 = vmatprep.subr.mxu0 0.0
    %2613 = vmatpush1.msra.mxu0 %v2582
    %2614 = vmatprep.subr.mxu0 0.0
    %2615 = vmatpush1.msra.mxu0 %v2583
    %2616 = vmatprep.subr.mxu0 0.0
    %2617 = vmatpush1.msra.mxu0 %v2584
    %2618 = vmatprep.subr.mxu0 0.0
    %2619 = vmatpush1.msra.mxu0 %v2585
    %2620 = vmatprep.subr.mxu0 0.0
    %2621 = vmatpush1.msra.mxu0 %v2586
    %2622 = vmatprep.subr.mxu0 0.0
    %2623 = vmatpush1.msra.mxu0 %v2587
    %2624 = vmatprep.subr.mxu0 0.0
    %2625 = vmatpush1.msra.mxu0 %v2588
    %2626 = vmatprep.subr.mxu0 0.0
    %2627 = vmatpush1.msra.mxu0 %v2589
    %2628 = vmatprep.subr.mxu0 0.0
    %2629 = vmatpush1.msra.mxu0 %v2590
    %2630 = vmatprep.subr.mxu0 0.0
    %2631 = vmatpush1.msra.mxu0 0.0
    %2632 = vmatprep.subr.mxu0 0.0
    %2633 = vmatpush1.msra.mxu0 0.0
    %2634 = vmatprep.subr.mxu0 0.0
    %2635 = vmatpush1.msra.mxu0 0.0
    %2636 = vmatprep.subr.mxu0 0.0
    %2637 = vmatpush1.msra.mxu0 0.0
    %2638 = vmatprep.subr.mxu0 0.0
    %2639 = vmatpush1.msra.mxu0 0.0
    %2640 = vmatprep.subr.mxu0 0.0
    %2641 = vmatpush1.msra.mxu0 0.0
    %2642 = vmatprep.subr.mxu0 0.0
    %2643 = vmatpush1.msra.mxu0 0.0
    %2644 = vmatprep.subr.mxu0 0.0
    %2645 = vmatpush1.msra.mxu0 0.0
    %2646 = vmatprep.subr.mxu0 0.0
    %2647 = vmatpush1.msra.mxu0 0.0
    %2648 = vmatprep.subr.mxu0 0.0
    %2649 = vmatpush1.msra.mxu0 0.0
    %2650 = vmatprep.subr.mxu0 0.0
    %2651 = vmatpush1.msra.mxu0 0.0
    %2652 = vmatprep.subr.mxu0 0.0
    %2653 = vmatpush1.msra.mxu0 0.0
    %2654 = vmatprep.subr.mxu0 0.0
    %2655 = vmatpush1.msra.mxu0 0.0
    %2656 = vmatprep.subr.mxu0 0.0
    %2657 = vmatpush1.msra.mxu0 0.0
    %2658 = vmatprep.subr.mxu0 0.0
    %2659 = vmatpush1.msra.mxu0 0.0
    %2660 = vmatprep.subr.mxu0 0.0
    %2661 = vmatpush1.msra.mxu0 0.0
    %2662 = vmatprep.mubr.f32.mxu0 0.0
    %2663 = vmatmul.mubr.f32.gmra.mrb[0].mxu0 %v2574
    %v2664 = vpop.f32.mrb[0].mxu0
    %v2665 = vadd.f32 %v2596, %v2664
    %v2666 = vpop.f32.mrb[0].mxu0
    %2667 = vdwg.mxu0
    %vm2668 = vcmask 9216
    %2669 = vst.msk [vmem:[#allocation19] sm:$0x3] %vm2668, %v2665
    // Predicated region
    $region138: #{custom_cnn_forward.1} parent=1 // pred_check
      _
    $region139: #{custom_cnn_forward.1} parent=1 // pred_check_branch
      %2671 = sbr.rel (0) target = $region141
    $region140: #{custom_cnn_forward.1} parent=1 // pred_region
      %s2673 = ssub.s32 32, 32
      %2674 = vsyncadd [#allocation4], %s2673
      %s2676 = sshll.u32 [#allocation19], 4
      %s2677 = int_to_ptr.vmem [resolvable:$true] %s2676
      %2679 = dma.vmem_to_hbm [thread:$0]  %s2677, 32, %s24, [#allocation4]
    $region141: #{custom_cnn_forward.1} parent=1 // pred_fallthru
      _
    // Predicated region
    $region142: #{custom_cnn_forward.1} parent=1 // pred_check
      _
    $region143: #{custom_cnn_forward.1} parent=1 // pred_check_branch
      %2681 = sbr.rel (0) target = $region145
    $region144: #{custom_cnn_forward.1} parent=1 // pred_region
      %2682 = dma.done [#allocation4], 32
    $region145: #{custom_cnn_forward.1} parent=1 // pred_fallthru
      _
    %2683 = vsyncpa [#allocation3], 1
    %2684 = vsyncpa [#allocation6], 1
    %2685 = vsyncpa [#allocation9], 1
    %2686 = vsyncpa [#allocation12], 1
    %2687 = vsyncpa [#allocation15], 1
    %2688 = vsyncpa [#allocation18], 1
    %2689 = vsyncpa [#allocation4], 1

</llo_original>
